<compile_context>
chip_gen: v7x
topology: tpu7x:2x2x1
jax: 0.10.0
libtpu: 0.0.40
codegen_flags: <defaults>
</compile_context>

<pallas_src>
import jax
import jax.numpy as jnp
import numpy as np
from jax.experimental import pallas as pl
from jax.experimental.pallas import tpu as pltpu

LANE = 128


def _round_up(x, m):
    return (x + m - 1) // m * m


def _pick_row_tile(ho):
    for th in (8, 16, 4, 2):
        if th <= ho and ho % th == 0:
            return th
    return ho


def _make_kernel(Cp, Pp, stride, TH, Ho, Wo, fuse_sc, proj_sc):
    S = TH + 2                        # conv1 rows per tile (incl. conv2 halo rows)
    IR = (S - 1) * stride + 3         # padded-input rows read per tile
    Nout = 2 * Pp if fuse_sc else Pp
    f32, bf16 = jnp.float32, jnp.bfloat16

    def kernel(xpad_ref, w1_ref, b1_ref, w2_ref, b2_ref, *rest):
        if proj_sc and not fuse_sc:
            ws_ref, bs_ref, out_ref, o1pad = rest
        else:
            out_ref, o1pad = rest

        r = pl.program_id(1)
        r0 = r * TH                                        # first output row of tile
        row_start = pl.multiple_of(r0 * stride, TH * stride)

        # ---- conv1 (+ fused 1x1 shortcut): 3 dots, K = 3*Cp, f32 accumulation ----
        if stride == 1:
            xs = xpad_ref[0, pl.ds(row_start, IR), :, :]   # (IR, W+2, Cp) bf16

            def tap1(dy, dx):
                return xs[dy:dy + S, dx:dx + Wo, :]
        else:
            # TODO(synk): even/odd phase split would make these contiguous loads.
            def tap1(dy, dx):
                return xpad_ref[0, pl.ds(row_start + dy, S, stride),
                                pl.ds(dx, Wo, stride), :]

        def row_dot(taps, w_row_ref, dy, kc):
            col = jnp.concatenate(
                [taps(dy, dx).reshape(-1, kc) for dx in range(3)], axis=-1)
            return jnp.dot(col, w_row_ref[dy], preferred_element_type=f32)

        acc1 = row_dot(tap1, w1_ref, 0, Cp)
        acc1 = acc1 + row_dot(tap1, w1_ref, 1, Cp)
        acc1 = acc1 + row_dot(tap1, w1_ref, 2, Cp)
        acc1 = acc1 + b1_ref[...]                          # folded BN1 (+ BNs if fused)

        out1 = jnp.maximum(acc1[:, :Pp], 0.0)              # (S*Wo, Pp), ReLU

        # ---- stage out1 into the bf16 halo'd scratch for conv2 -------------------
        zc = jnp.zeros((S, 1, Pp), bf16)
        o1pad[:, 0:1, :] = zc
        o1pad[:, Wo + 1:Wo + 2, :] = zc
        o1pad[:, 1:Wo + 1, :] = out1.reshape(S, Wo, Pp).astype(bf16)

        @pl.when(r0 == 0)                                  # top image boundary
        def _():
            o1pad[0:1, :, :] = jnp.zeros((1, Wo + 2, Pp), bf16)

        @pl.when(r0 + TH == Ho)                            # bottom image boundary
        def _():
            o1pad[S - 1:S, :, :] = jnp.zeros((1, Wo + 2, Pp), bf16)

        # ---- conv2: 3 dots, K = 3*Pp, f32 accumulation ---------------------------
        def tap2(dy, dx):
            return o1pad[dy:dy + TH, dx:dx + Wo, :]

        acc2 = row_dot(tap2, w2_ref, 0, Pp)
        acc2 = acc2 + row_dot(tap2, w2_ref, 1, Pp)
        acc2 = acc2 + row_dot(tap2, w2_ref, 2, Pp)
        out2 = acc2 + b2_ref[...]                          # (TH*Wo, Pp), folded BN2

        # ---- shortcut -------------------------------------------------------------
        if fuse_sc:
            sc = acc1[Wo:(TH + 1) * Wo, Pp:]               # fused centre-tap 1x1 conv
        elif proj_sc:
            if stride == 1:
                xsc = xs[2:2 + TH, 1:1 + Wo, :]
            else:
                xsc = xpad_ref[0, pl.ds(row_start + stride + 1, TH, stride),
                               pl.ds(1, Wo, stride), :]
            sc = jnp.dot(xsc.reshape(TH * Wo, Cp), ws_ref[...],
                         preferred_element_type=f32) + bs_ref[...]
        else:
            sc = xs[2:2 + TH, 1:1 + Wo, :].reshape(TH * Wo, Cp).astype(f32)

        out = jnp.maximum(out2 + sc, 0.0)                  # residual add + ReLU
        out_ref[...] = out.reshape(1, TH, Wo, Pp)

    return kernel, S


def basic_block_forward(x_nchw, params, stride):
    """Pallas implementation of BasicBlock.forward. x_nchw: (N, Cin, H, W)."""
    N, Cin, H, W = x_nchw.shape
    P = params["w1"].shape[0]                              # planes (torch OIHW)
    has_sc = (stride != 1) or (Cin != P)
    Cp, Pp = _round_up(Cin, LANE), _round_up(P, LANE)
    fuse_sc = has_sc and Pp == LANE                        # free on 256-wide MXUs

    Ho = (H - 1) // stride + 1
    Wo = (W - 1) // stride + 1
    TH = _pick_row_tile(Ho)
    R = Ho // TH
    Nout = 2 * Pp if fuse_sc else Pp

    eps = 1e-5

    def bn_fold(g, b, m, v):
        s = (g / jnp.sqrt(v + eps)).astype(jnp.float32)
        return s, (b - m * s).astype(jnp.float32)

    def prep3x3(w_oihw, scale, ci, cip, cop):
        # OIHW -> (dy, dx*cip + c, co), BN scale folded into output channels.
        w = jnp.transpose(w_oihw, (2, 3, 1, 0)).astype(jnp.float32) * scale
        co = w.shape[-1]
        w = jnp.pad(w, ((0, 0), (0, 0), (0, cip - ci), (0, cop - co)))
        return w.reshape(3, 3 * cip, cop)

    def pad_bias(b, cop):
        return jnp.pad(b, (0, cop - b.shape[0])).reshape(1, cop).astype(jnp.float32)

    s1, b1 = bn_fold(params["bn1_g"], params["bn1_b"],
                     params["bn1_m"], params["bn1_v"])
    s2, b2 = bn_fold(params["bn2_g"], params["bn2_b"],
                     params["bn2_m"], params["bn2_v"])

    w1 = prep3x3(params["w1"], s1, Cin, Cp, Pp)            # f32 (3, 3*Cp, Pp)
    w2 = prep3x3(params["w2"], s2, P, Pp, Pp)              # f32 (3, 3*Pp, Pp)
    b1p, b2p = pad_bias(b1, Pp), pad_bias(b2, Pp)

    extra_args, extra_specs = [], []
    if has_sc:
        ss, bs = bn_fold(params["bns_g"], params["bns_b"],
                         params["bns_m"], params["bns_v"])
        ws = jnp.transpose(params["ws"], (2, 3, 1, 0)).astype(jnp.float32)[0, 0] * ss
        ws = jnp.pad(ws, ((0, Cp - Cin), (0, Pp - P)))     # (Cp, Pp)
        bsp = pad_bias(bs, Pp)
        if fuse_sc:
            # shortcut rides in the centre tap (dy=1, dx=1) of extra output cols.
            sc_cols = jnp.zeros((3, 3 * Cp, Pp), jnp.float32)
            sc_cols = sc_cols.at[1, Cp:2 * Cp, :].set(ws)
            w1 = jnp.concatenate([w1, sc_cols], axis=-1)   # (3, 3*Cp, 2*Pp)
            b1p = jnp.concatenate([b1p, bsp], axis=-1)     # (1, 2*Pp)
        else:
            extra_args = [ws.astype(jnp.bfloat16), bsp]
            extra_specs = [pl.BlockSpec((Cp, Pp), lambda n, r: (0, 0)),
                           pl.BlockSpec((1, Pp), lambda n, r: (0, 0))]

    w1 = w1.astype(jnp.bfloat16)
    w2 = w2.astype(jnp.bfloat16)

    # NCHW -> NHWC, halo padding (extra rows so every row tile's reads, incl. the
    # recomputed conv1 halo rows, stay in range), channel pad to the lane width,
    # and bf16 staging (MXU inputs are bf16 anyway; halves HBM->VMEM traffic).
    top = 1 + stride
    bot = 1 + (Ho * stride + 1 - H)
    x = jnp.transpose(x_nchw, (0, 2, 3, 1))
    xpad = jnp.pad(x, ((0, 0), (top, bot), (1, 1), (0, Cp - Cin))).astype(jnp.bfloat16)
    Hp = H + top + bot

    kernel, S = _make_kernel(Cp, Pp, stride, TH, Ho, Wo, fuse_sc, has_sc)

    in_specs = [
        pl.BlockSpec((1, Hp, W + 2, Cp), lambda n, r: (n, 0, 0, 0)),
        pl.BlockSpec((3, 3 * Cp, Nout), lambda n, r: (0, 0, 0)),
        pl.BlockSpec((1, Nout), lambda n, r: (0, 0)),
        pl.BlockSpec((3, 3 * Pp, Pp), lambda n, r: (0, 0, 0)),
        pl.BlockSpec((1, Pp), lambda n, r: (0, 0)),
    ] + extra_specs

    out = pl.pallas_call(
        kernel,
        out_shape=jax.ShapeDtypeStruct((N, Ho, Wo, Pp), jnp.float32),
        grid_spec=pltpu.PrefetchScalarGridSpec(
            num_scalar_prefetch=0,
            grid=(N, R),                                   # batch x output-row tiles
            in_specs=in_specs,
            out_specs=pl.BlockSpec((1, TH, Wo, Pp), lambda n, r: (n, r, 0, 0)),
            scratch_shapes=[pltpu.VMEM((S, Wo + 2, Pp), jnp.bfloat16)],
        ),
        compiler_params=pltpu.CompilerParams(
            dimension_semantics=("parallel", "parallel"),
            vmem_limit_bytes=32 * 1024 * 1024,
        ),
    )(xpad, w1, b1p, w2, b2p, *extra_args)

    out = out[..., :P]                                     # drop lane padding
    return jnp.transpose(out, (0, 3, 1, 2))                # back to NCHW


# ----------------------------- pure-JAX reference -----------------------------
def ref_forward(x_nchw, params, stride):
    eps = 1e-5
    x = jnp.transpose(x_nchw, (0, 2, 3, 1)).astype(jnp.float32)
    dn = ("NHWC", "HWIO", "NHWC")
    prec = jax.lax.Precision.HIGHEST

    def conv(x, w_oihw, s, pad):
        w = jnp.transpose(w_oihw, (2, 3, 1, 0))
        return jax.lax.conv_general_dilated(
            x, w, (s, s), [(pad, pad), (pad, pad)],
            dimension_numbers=dn, precision=prec)

    def bn(x, g, b, m, v):
        return (x - m) / jnp.sqrt(v + eps) * g + b

    out = jax.nn.relu(bn(conv(x, params["w1"], stride, 1),
                         params["bn1_g"], params["bn1_b"],
                         params["bn1_m"], params["bn1_v"]))
    out = bn(conv(out, params["w2"], 1, 1),
             params["bn2_g"], params["bn2_b"],
             params["bn2_m"], params["bn2_v"])
    Cin, P = x.shape[-1], params["w1"].shape[0]
    if stride != 1 or Cin != P:
        sc = bn(conv(x, params["ws"], stride, 0),
                params["bns_g"], params["bns_b"],
                params["bns_m"], params["bns_v"])
    else:
        sc = x
    out = jax.nn.relu(out + sc)
    return jnp.transpose(out, (0, 3, 1, 2))


if __name__ == "__main__":
    key = jax.random.PRNGKey(0)

    def nrm(k, shape, scale=0.1):
        return scale * jax.random.normal(k, shape, dtype=jnp.float32)

    def make_params(k, cin, planes, has_sc):
        ks = jax.random.split(k, 16)
        p = dict(
            w1=nrm(ks[0], (planes, cin, 3, 3)),
            bn1_g=1.0 + nrm(ks[1], (planes,)),
            bn1_b=nrm(ks[2], (planes,)),
            bn1_m=nrm(ks[3], (planes,)),
            bn1_v=0.5 + jnp.abs(nrm(ks[4], (planes,), 1.0)),
            w2=nrm(ks[5], (planes, planes, 3, 3)),
            bn2_g=1.0 + nrm(ks[6], (planes,)),
            bn2_b=nrm(ks[7], (planes,)),
            bn2_m=nrm(ks[8], (planes,)),
            bn2_v=0.5 + jnp.abs(nrm(ks[9], (planes,), 1.0)),
        )
        if has_sc:
            p.update(
                ws=nrm(ks[10], (planes, cin, 1, 1)),
                bns_g=1.0 + nrm(ks[11], (planes,)),
                bns_b=nrm(ks[12], (planes,)),
                bns_m=nrm(ks[13], (planes,)),
                bns_v=0.5 + jnp.abs(nrm(ks[14], (planes,), 1.0)),
            )
        return p

    # case 1: projection shortcut (Cin != planes, fused into conv1 RHS);
    # case 2: identity shortcut.
    cases = [((2, 4, 16, 16), 8, 1), ((2, 8, 16, 16), 8, 1)]
    k = key
    for (N, Cin, H, W), planes, stride in cases:
        k, kp, kx = jax.random.split(k, 3)
        has_sc = (stride != 1) or (Cin != planes)
        params = make_params(kp, Cin, planes, has_sc)
        x = jax.random.normal(kx, (N, Cin, H, W), dtype=jnp.float32)

        out = jax.block_until_ready(basic_block_forward(x, params, stride))
        ref = jax.block_until_ready(ref_forward(x, params, stride))

        Ho = (H - 1) // stride + 1
        Wo = (W - 1) // stride + 1
        assert out.shape == (N, planes, Ho, Wo), out.shape
        # bf16 MXU inputs / bf16-staged activations (f32 accumulation) vs f32 ref
        np.testing.assert_allclose(np.asarray(out), np.asarray(ref),
                                   atol=2e-2, rtol=2e-2)

    print("KERNEL_OK")
</pallas_src>

<mosaic_0001>
module attributes {stable_mosaic.version = 11 : i64} {
  func.func @kernel(%arg0: i32, %arg1: i32, %arg2: memref<1x20x18x128xbf16, #tpu.memory_space<vmem>>, %arg3: memref<3x384x256xbf16, #tpu.memory_space<vmem>>, %arg4: memref<1x256xf32, #tpu.memory_space<vmem>>, %arg5: memref<3x384x128xbf16, #tpu.memory_space<vmem>>, %arg6: memref<1x128xf32, #tpu.memory_space<vmem>>, %arg7: memref<1x8x16x128xf32, #tpu.memory_space<vmem>>, %arg8: memref<10x18x128xbf16, #tpu.memory_space<vmem>>) attributes {dimension_semantics = [#tpu.dimension_semantics<parallel>, #tpu.dimension_semantics<parallel>], iteration_bounds = array<i64: 2, 2>, scalar_prefetch = 0 : i64, scratch_operands = 1 : i64, tpu.core_type = #tpu.core_type<tc>, window_params = [{transform_indices = @transform_0, window_bounds = array<i64: 1, 20, 18, 128>}, {pipeline_mode = #tpu.pipeline_mode<synchronous>, transform_indices = @transform_1, window_bounds = array<i64: 3, 384, 256>}, {pipeline_mode = #tpu.pipeline_mode<synchronous>, transform_indices = @transform_2, window_bounds = array<i64: 1, 256>}, {pipeline_mode = #tpu.pipeline_mode<synchronous>, transform_indices = @transform_3, window_bounds = array<i64: 3, 384, 128>}, {pipeline_mode = #tpu.pipeline_mode<synchronous>, transform_indices = @transform_4, window_bounds = array<i64: 1, 128>}, {transform_indices = @transform_5, window_bounds = array<i64: 1, 8, 16, 128>}]} {
    %c8_i32 = arith.constant 8 : i32
    %0 = arith.muli %arg1, %c8_i32 : i32
    %c1_i32 = arith.constant 1 : i32
    %1 = arith.muli %0, %c1_i32 : i32
    %2 = tpu.assume_multiple %1, 8 : i32
    %c0 = arith.constant 0 : index
    %3 = arith.index_cast %2 : i32 to index
    %c0_0 = arith.constant 0 : index
    %c0_1 = arith.constant 0 : index
    %4 = vector.load %arg2[%c0, %3, %c0_0, %c0_1] : memref<1x20x18x128xbf16, #tpu.memory_space<vmem>>, vector<1x12x18x128xbf16>
    %5 = vector.shape_cast %4 : vector<1x12x18x128xbf16> to vector<12x18x128xbf16>
    %6 = vector.extract_strided_slice %5 {offsets = [0, 0, 0], sizes = [10, 16, 128], strides = [1, 1, 1]} : vector<12x18x128xbf16> to vector<10x16x128xbf16>
    %7 = vector.shape_cast %6 : vector<10x16x128xbf16> to vector<160x128xbf16>
    %8 = vector.extract_strided_slice %5 {offsets = [0, 1, 0], sizes = [10, 16, 128], strides = [1, 1, 1]} : vector<12x18x128xbf16> to vector<10x16x128xbf16>
    %9 = vector.shape_cast %8 : vector<10x16x128xbf16> to vector<160x128xbf16>
    %10 = vector.extract_strided_slice %5 {offsets = [0, 2, 0], sizes = [10, 16, 128], strides = [1, 1, 1]} : vector<12x18x128xbf16> to vector<10x16x128xbf16>
    %11 = vector.shape_cast %10 : vector<10x16x128xbf16> to vector<160x128xbf16>
    %12 = tpu.concatenate %7, %9, %11 in 1 : vector<160x128xbf16>, vector<160x128xbf16>, vector<160x128xbf16> -> vector<160x384xbf16>
    %c0_2 = arith.constant 0 : index
    %c0_3 = arith.constant 0 : index
    %c0_4 = arith.constant 0 : index
    %13 = vector.load %arg3[%c0_2, %c0_3, %c0_4] : memref<3x384x256xbf16, #tpu.memory_space<vmem>>, vector<1x384x256xbf16>
    %14 = vector.shape_cast %13 : vector<1x384x256xbf16> to vector<384x256xbf16>
    %cst = arith.constant dense<0.000000e+00> : vector<160x256xf32>
    %15 = tpu.matmul %12, %14, %cst {dimension_numbers = #tpu.dot_dimension_numbers<[1], [0], [0], [1], [0, 0, 1, 1], [], []>} : vector<160x384xbf16>, vector<384x256xbf16>, vector<160x256xf32> -> vector<160x256xf32>
    %16 = vector.extract_strided_slice %5 {offsets = [1, 0, 0], sizes = [10, 16, 128], strides = [1, 1, 1]} : vector<12x18x128xbf16> to vector<10x16x128xbf16>
    %17 = vector.shape_cast %16 : vector<10x16x128xbf16> to vector<160x128xbf16>
    %18 = vector.extract_strided_slice %5 {offsets = [1, 1, 0], sizes = [10, 16, 128], strides = [1, 1, 1]} : vector<12x18x128xbf16> to vector<10x16x128xbf16>
    %19 = vector.shape_cast %18 : vector<10x16x128xbf16> to vector<160x128xbf16>
    %20 = vector.extract_strided_slice %5 {offsets = [1, 2, 0], sizes = [10, 16, 128], strides = [1, 1, 1]} : vector<12x18x128xbf16> to vector<10x16x128xbf16>
    %21 = vector.shape_cast %20 : vector<10x16x128xbf16> to vector<160x128xbf16>
    %22 = tpu.concatenate %17, %19, %21 in 1 : vector<160x128xbf16>, vector<160x128xbf16>, vector<160x128xbf16> -> vector<160x384xbf16>
    %c1 = arith.constant 1 : index
    %c0_5 = arith.constant 0 : index
    %c0_6 = arith.constant 0 : index
    %23 = vector.load %arg3[%c1, %c0_5, %c0_6] : memref<3x384x256xbf16, #tpu.memory_space<vmem>>, vector<1x384x256xbf16>
    %24 = vector.shape_cast %23 : vector<1x384x256xbf16> to vector<384x256xbf16>
    %cst_7 = arith.constant dense<0.000000e+00> : vector<160x256xf32>
    %25 = tpu.matmul %22, %24, %cst_7 {dimension_numbers = #tpu.dot_dimension_numbers<[1], [0], [0], [1], [0, 0, 1, 1], [], []>} : vector<160x384xbf16>, vector<384x256xbf16>, vector<160x256xf32> -> vector<160x256xf32>
    %26 = arith.addf %15, %25 : vector<160x256xf32>
    %27 = vector.extract_strided_slice %5 {offsets = [2, 0, 0], sizes = [10, 16, 128], strides = [1, 1, 1]} : vector<12x18x128xbf16> to vector<10x16x128xbf16>
    %28 = vector.shape_cast %27 : vector<10x16x128xbf16> to vector<160x128xbf16>
    %29 = vector.extract_strided_slice %5 {offsets = [2, 1, 0], sizes = [10, 16, 128], strides = [1, 1, 1]} : vector<12x18x128xbf16> to vector<10x16x128xbf16>
    %30 = vector.shape_cast %29 : vector<10x16x128xbf16> to vector<160x128xbf16>
    %31 = vector.extract_strided_slice %5 {offsets = [2, 2, 0], sizes = [10, 16, 128], strides = [1, 1, 1]} : vector<12x18x128xbf16> to vector<10x16x128xbf16>
    %32 = vector.shape_cast %31 : vector<10x16x128xbf16> to vector<160x128xbf16>
    %33 = tpu.concatenate %28, %30, %32 in 1 : vector<160x128xbf16>, vector<160x128xbf16>, vector<160x128xbf16> -> vector<160x384xbf16>
    %c2 = arith.constant 2 : index
    %c0_8 = arith.constant 0 : index
    %c0_9 = arith.constant 0 : index
    %34 = vector.load %arg3[%c2, %c0_8, %c0_9] : memref<3x384x256xbf16, #tpu.memory_space<vmem>>, vector<1x384x256xbf16>
    %35 = vector.shape_cast %34 : vector<1x384x256xbf16> to vector<384x256xbf16>
    %cst_10 = arith.constant dense<0.000000e+00> : vector<160x256xf32>
    %36 = tpu.matmul %33, %35, %cst_10 {dimension_numbers = #tpu.dot_dimension_numbers<[1], [0], [0], [1], [0, 0, 1, 1], [], []>} : vector<160x384xbf16>, vector<384x256xbf16>, vector<160x256xf32> -> vector<160x256xf32>
    %37 = arith.addf %26, %36 : vector<160x256xf32>
    %c0_11 = arith.constant 0 : index
    %c0_12 = arith.constant 0 : index
    %38 = vector.load %arg4[%c0_11, %c0_12] : memref<1x256xf32, #tpu.memory_space<vmem>>, vector<1x256xf32>
    %39 = vector.broadcast %38 : vector<1x256xf32> to vector<160x256xf32>
    %40 = arith.addf %37, %39 : vector<160x256xf32>
    %41 = vector.extract_strided_slice %40 {offsets = [0, 0], sizes = [160, 128], strides = [1, 1]} : vector<160x256xf32> to vector<160x128xf32>
    %cst_13 = arith.constant 0.000000e+00 : f32
    %42 = vector.broadcast %cst_13 : f32 to vector<160x128xf32>
    %43 = arith.maximumf %41, %42 : vector<160x128xf32>
    %cst_14 = arith.constant 0.000000e+00 : bf16
    %44 = vector.broadcast %cst_14 : bf16 to vector<10x1x128xbf16>
    %c0_15 = arith.constant 0 : index
    %c0_16 = arith.constant 0 : index
    %c0_17 = arith.constant 0 : index
    %45 = vector.load %arg8[%c0_15, %c0_16, %c0_17] : memref<10x18x128xbf16, #tpu.memory_space<vmem>>, vector<10x1x128xbf16>
    tpu.vector_store %arg8[%c0_15, %c0_16, %c0_17], %44 {strides = array<i32>} : memref<10x18x128xbf16, #tpu.memory_space<vmem>>, vector<10x1x128xbf16>,
    %c0_18 = arith.constant 0 : index
    %c17 = arith.constant 17 : index
    %c0_19 = arith.constant 0 : index
    %46 = vector.load %arg8[%c0_18, %c17, %c0_19] : memref<10x18x128xbf16, #tpu.memory_space<vmem>>, vector<10x1x128xbf16>
    tpu.vector_store %arg8[%c0_18, %c17, %c0_19], %44 {strides = array<i32>} : memref<10x18x128xbf16, #tpu.memory_space<vmem>>, vector<10x1x128xbf16>,
    %47 = vector.shape_cast %43 : vector<160x128xf32> to vector<10x16x128xf32>
    %48 = arith.truncf %47 : vector<10x16x128xf32> to vector<10x16x128xbf16>
    %c0_20 = arith.constant 0 : index
    %c1_21 = arith.constant 1 : index
    %c0_22 = arith.constant 0 : index
    %49 = vector.load %arg8[%c0_20, %c1_21, %c0_22] : memref<10x18x128xbf16, #tpu.memory_space<vmem>>, vector<10x16x128xbf16>
    tpu.vector_store %arg8[%c0_20, %c1_21, %c0_22], %48 {strides = array<i32>} : memref<10x18x128xbf16, #tpu.memory_space<vmem>>, vector<10x16x128xbf16>,
    %c0_i32 = arith.constant 0 : i32
    %50 = arith.cmpi eq, %0, %c0_i32 : i32
    %51 = arith.extui %50 : i1 to i32
    %c0_i32_23 = arith.constant 0 : i32
    %52 = arith.cmpi ne, %51, %c0_i32_23 : i32
    scf.if %52 {
      %cst_72 = arith.constant 0.000000e+00 : bf16
      %98 = vector.broadcast %cst_72 : bf16 to vector<1x18x128xbf16>
      %c0_73 = arith.constant 0 : index
      %c0_74 = arith.constant 0 : index
      %c0_75 = arith.constant 0 : index
      %99 = vector.load %arg8[%c0_73, %c0_74, %c0_75] : memref<10x18x128xbf16, #tpu.memory_space<vmem>>, vector<1x18x128xbf16>
      tpu.vector_store %arg8[%c0_73, %c0_74, %c0_75], %98 {strides = array<i32>} : memref<10x18x128xbf16, #tpu.memory_space<vmem>>, vector<1x18x128xbf16>,
    } else {
    }
    %c8_i32_24 = arith.constant 8 : i32
    %53 = arith.addi %0, %c8_i32_24 : i32
    %c16_i32 = arith.constant 16 : i32
    %54 = arith.cmpi eq, %53, %c16_i32 : i32
    %55 = arith.extui %54 : i1 to i32
    %c0_i32_25 = arith.constant 0 : i32
    %56 = arith.cmpi ne, %55, %c0_i32_25 : i32
    scf.if %56 {
      %cst_72 = arith.constant 0.000000e+00 : bf16
      %98 = vector.broadcast %cst_72 : bf16 to vector<1x18x128xbf16>
      %c9 = arith.constant 9 : index
      %c0_73 = arith.constant 0 : index
      %c0_74 = arith.constant 0 : index
      %99 = vector.load %arg8[%c9, %c0_73, %c0_74] : memref<10x18x128xbf16, #tpu.memory_space<vmem>>, vector<1x18x128xbf16>
      tpu.vector_store %arg8[%c9, %c0_73, %c0_74], %98 {strides = array<i32>} : memref<10x18x128xbf16, #tpu.memory_space<vmem>>, vector<1x18x128xbf16>,
    } else {
    }
    %c0_26 = arith.constant 0 : index
    %c0_27 = arith.constant 0 : index
    %c0_28 = arith.constant 0 : index
    %57 = vector.load %arg8[%c0_26, %c0_27, %c0_28] : memref<10x18x128xbf16, #tpu.memory_space<vmem>>, vector<8x16x128xbf16>
    %58 = vector.shape_cast %57 : vector<8x16x128xbf16> to vector<128x128xbf16>
    %c0_29 = arith.constant 0 : index
    %c1_30 = arith.constant 1 : index
    %c0_31 = arith.constant 0 : index
    %59 = vector.load %arg8[%c0_29, %c1_30, %c0_31] : memref<10x18x128xbf16, #tpu.memory_space<vmem>>, vector<8x16x128xbf16>
    %60 = vector.shape_cast %59 : vector<8x16x128xbf16> to vector<128x128xbf16>
    %c0_32 = arith.constant 0 : index
    %c2_33 = arith.constant 2 : index
    %c0_34 = arith.constant 0 : index
    %61 = vector.load %arg8[%c0_32, %c2_33, %c0_34] : memref<10x18x128xbf16, #tpu.memory_space<vmem>>, vector<8x16x128xbf16>
    %62 = vector.shape_cast %61 : vector<8x16x128xbf16> to vector<128x128xbf16>
    %63 = tpu.concatenate %58, %60, %62 in 1 : vector<128x128xbf16>, vector<128x128xbf16>, vector<128x128xbf16> -> vector<128x384xbf16>
    %c0_35 = arith.constant 0 : index
    %c0_36 = arith.constant 0 : index
    %c0_37 = arith.constant 0 : index
    %64 = vector.load %arg5[%c0_35, %c0_36, %c0_37] : memref<3x384x128xbf16, #tpu.memory_space<vmem>>, vector<1x384x128xbf16>
    %65 = vector.shape_cast %64 : vector<1x384x128xbf16> to vector<384x128xbf16>
    %cst_38 = arith.constant dense<0.000000e+00> : vector<128x128xf32>
    %66 = tpu.matmul %63, %65, %cst_38 {dimension_numbers = #tpu.dot_dimension_numbers<[1], [0], [0], [1], [0, 0, 1, 1], [], []>} : vector<128x384xbf16>, vector<384x128xbf16>, vector<128x128xf32> -> vector<128x128xf32>
    %c1_39 = arith.constant 1 : index
    %c0_40 = arith.constant 0 : index
    %c0_41 = arith.constant 0 : index
    %67 = vector.load %arg8[%c1_39, %c0_40, %c0_41] : memref<10x18x128xbf16, #tpu.memory_space<vmem>>, vector<8x16x128xbf16>
    %68 = vector.shape_cast %67 : vector<8x16x128xbf16> to vector<128x128xbf16>
    %c1_42 = arith.constant 1 : index
    %c1_43 = arith.constant 1 : index
    %c0_44 = arith.constant 0 : index
    %69 = vector.load %arg8[%c1_42, %c1_43, %c0_44] : memref<10x18x128xbf16, #tpu.memory_space<vmem>>, vector<8x16x128xbf16>
    %70 = vector.shape_cast %69 : vector<8x16x128xbf16> to vector<128x128xbf16>
    %c1_45 = arith.constant 1 : index
    %c2_46 = arith.constant 2 : index
    %c0_47 = arith.constant 0 : index
    %71 = vector.load %arg8[%c1_45, %c2_46, %c0_47] : memref<10x18x128xbf16, #tpu.memory_space<vmem>>, vector<8x16x128xbf16>
    %72 = vector.shape_cast %71 : vector<8x16x128xbf16> to vector<128x128xbf16>
    %73 = tpu.concatenate %68, %70, %72 in 1 : vector<128x128xbf16>, vector<128x128xbf16>, vector<128x128xbf16> -> vector<128x384xbf16>
    %c1_48 = arith.constant 1 : index
    %c0_49 = arith.constant 0 : index
    %c0_50 = arith.constant 0 : index
    %74 = vector.load %arg5[%c1_48, %c0_49, %c0_50] : memref<3x384x128xbf16, #tpu.memory_space<vmem>>, vector<1x384x128xbf16>
    %75 = vector.shape_cast %74 : vector<1x384x128xbf16> to vector<384x128xbf16>
    %cst_51 = arith.constant dense<0.000000e+00> : vector<128x128xf32>
    %76 = tpu.matmul %73, %75, %cst_51 {dimension_numbers = #tpu.dot_dimension_numbers<[1], [0], [0], [1], [0, 0, 1, 1], [], []>} : vector<128x384xbf16>, vector<384x128xbf16>, vector<128x128xf32> -> vector<128x128xf32>
    %77 = arith.addf %66, %76 : vector<128x128xf32>
    %c2_52 = arith.constant 2 : index
    %c0_53 = arith.constant 0 : index
    %c0_54 = arith.constant 0 : index
    %78 = vector.load %arg8[%c2_52, %c0_53, %c0_54] : memref<10x18x128xbf16, #tpu.memory_space<vmem>>, vector<8x16x128xbf16>
    %79 = vector.shape_cast %78 : vector<8x16x128xbf16> to vector<128x128xbf16>
    %c2_55 = arith.constant 2 : index
    %c1_56 = arith.constant 1 : index
    %c0_57 = arith.constant 0 : index
    %80 = vector.load %arg8[%c2_55, %c1_56, %c0_57] : memref<10x18x128xbf16, #tpu.memory_space<vmem>>, vector<8x16x128xbf16>
    %81 = vector.shape_cast %80 : vector<8x16x128xbf16> to vector<128x128xbf16>
    %c2_58 = arith.constant 2 : index
    %c2_59 = arith.constant 2 : index
    %c0_60 = arith.constant 0 : index
    %82 = vector.load %arg8[%c2_58, %c2_59, %c0_60] : memref<10x18x128xbf16, #tpu.memory_space<vmem>>, vector<8x16x128xbf16>
    %83 = vector.shape_cast %82 : vector<8x16x128xbf16> to vector<128x128xbf16>
    %84 = tpu.concatenate %79, %81, %83 in 1 : vector<128x128xbf16>, vector<128x128xbf16>, vector<128x128xbf16> -> vector<128x384xbf16>
    %c2_61 = arith.constant 2 : index
    %c0_62 = arith.constant 0 : index
    %c0_63 = arith.constant 0 : index
    %85 = vector.load %arg5[%c2_61, %c0_62, %c0_63] : memref<3x384x128xbf16, #tpu.memory_space<vmem>>, vector<1x384x128xbf16>
    %86 = vector.shape_cast %85 : vector<1x384x128xbf16> to vector<384x128xbf16>
    %cst_64 = arith.constant dense<0.000000e+00> : vector<128x128xf32>
    %87 = tpu.matmul %84, %86, %cst_64 {dimension_numbers = #tpu.dot_dimension_numbers<[1], [0], [0], [1], [0, 0, 1, 1], [], []>} : vector<128x384xbf16>, vector<384x128xbf16>, vector<128x128xf32> -> vector<128x128xf32>
    %88 = arith.addf %77, %87 : vector<128x128xf32>
    %c0_65 = arith.constant 0 : index
    %c0_66 = arith.constant 0 : index
    %89 = vector.load %arg6[%c0_65, %c0_66] : memref<1x128xf32, #tpu.memory_space<vmem>>, vector<1x128xf32>
    %90 = vector.broadcast %89 : vector<1x128xf32> to vector<128x128xf32>
    %91 = arith.addf %88, %90 : vector<128x128xf32>
    %92 = vector.extract_strided_slice %40 {offsets = [16, 128], sizes = [128, 128], strides = [1, 1]} : vector<160x256xf32> to vector<128x128xf32>
    %93 = arith.addf %91, %92 : vector<128x128xf32>
    %cst_67 = arith.constant 0.000000e+00 : f32
    %94 = vector.broadcast %cst_67 : f32 to vector<128x128xf32>
    %95 = arith.maximumf %93, %94 : vector<128x128xf32>
    %96 = vector.shape_cast %95 : vector<128x128xf32> to vector<1x8x16x128xf32>
    %c0_68 = arith.constant 0 : index
    %c0_69 = arith.constant 0 : index
    %c0_70 = arith.constant 0 : index
    %c0_71 = arith.constant 0 : index
    %97 = vector.load %arg7[%c0_68, %c0_69, %c0_70, %c0_71] : memref<1x8x16x128xf32, #tpu.memory_space<vmem>>, vector<1x8x16x128xf32>
    tpu.vector_store %arg7[%c0_68, %c0_69, %c0_70, %c0_71], %96 {strides = array<i32>} : memref<1x8x16x128xf32, #tpu.memory_space<vmem>>, vector<1x8x16x128xf32>,
    return
  }
  func.func @transform_0(%arg0: i32, %arg1: i32) -> (i32, i32, i32, i32) {
    %c0_i32 = arith.constant 0 : i32
    %c0_i32_0 = arith.constant 0 : i32
    %c0_i32_1 = arith.constant 0 : i32
    %c0_i32_2 = arith.constant 0 : i32
    return %arg0, %c0_i32, %c0_i32_0, %c0_i32_1 : i32, i32, i32, i32
  }
  func.func @transform_1(%arg0: i32, %arg1: i32) -> (i32, i32, i32) {
    %c0_i32 = arith.constant 0 : i32
    %c0_i32_0 = arith.constant 0 : i32
    %c0_i32_1 = arith.constant 0 : i32
    %c0_i32_2 = arith.constant 0 : i32
    return %c0_i32, %c0_i32_0, %c0_i32_1 : i32, i32, i32
  }
  func.func @transform_2(%arg0: i32, %arg1: i32) -> (i32, i32) {
    %c0_i32 = arith.constant 0 : i32
    %c0_i32_0 = arith.constant 0 : i32
    %c0_i32_1 = arith.constant 0 : i32
    return %c0_i32, %c0_i32_0 : i32, i32
  }
  func.func @transform_3(%arg0: i32, %arg1: i32) -> (i32, i32, i32) {
    %c0_i32 = arith.constant 0 : i32
    %c0_i32_0 = arith.constant 0 : i32
    %c0_i32_1 = arith.constant 0 : i32
    %c0_i32_2 = arith.constant 0 : i32
    return %c0_i32, %c0_i32_0, %c0_i32_1 : i32, i32, i32
  }
  func.func @transform_4(%arg0: i32, %arg1: i32) -> (i32, i32) {
    %c0_i32 = arith.constant 0 : i32
    %c0_i32_0 = arith.constant 0 : i32
    %c0_i32_1 = arith.constant 0 : i32
    return %c0_i32, %c0_i32_0 : i32, i32
  }
  func.func @transform_5(%arg0: i32, %arg1: i32) -> (i32, i32, i32, i32) {
    %c0_i32 = arith.constant 0 : i32
    %c0_i32_0 = arith.constant 0 : i32
    %c0_i32_1 = arith.constant 0 : i32
    return %arg0, %arg1, %c0_i32, %c0_i32_0 : i32, i32, i32, i32
  }
}

</mosaic_0001>

<llo_original>
// kernel: tpu_custom_call.1
$region0: #{tpu_custom_call.1}
  #allocation0 [shape = 'u32[]', space=smem, size = 0x4, offset = 0x4, fixed_abs, tag = 'smem constant byte address 0x4 - core index']
  #allocation1 [shape = 'u32[144,128]{1,0:T(1,128)}', space=vmem, size = 0x12000, scoped, tag = 'internal scratch']
  #allocation2 [shape = 'bf16[10,18,128]{2,1,0:T(8,128)(2,1)}', space=vmem, size = 0xf000, scoped, tag = 'scratch operand']
  %s0 = inlined_call_operand.vmem [shape: bf16[2,20,18,128], index: 0, kind: input, shape index: {}]
  %s1 = inlined_call_operand.hbm [shape: bf16[3,384,256], index: 1, kind: input, shape index: {}]
  %s2 = inlined_call_operand.vmem [shape: f32[1,256], index: 2, kind: input, shape index: {}]
  %s3 = inlined_call_operand.vmem [shape: bf16[3,384,128], index: 3, kind: input, shape index: {}]
  %s4 = inlined_call_operand.vmem [shape: f32[1,128], index: 4, kind: input, shape index: {}]
  %s5 = inlined_call_operand.hbm [shape: f32[2,16,16,128], index: 5, kind: output, shape index: {}]
  %s6 = sld [smem:[#allocation0]]
  $region65: #{tpu_custom_call.1} parent=0
    _
  %s8 = ssub.s32 1, %s6
  %s9 = scalar_select 0, %s8, %s6
  $region1: #{tpu_custom_call.1} parent=0
    #allocation3 [shape = 'u8[589824]{0}', space=vmem, size = 0x90000, scoped, tag = 'input window, operand 1, single buffered']
    #allocation4 [shape = 's32[2]{0}', space=sflag, size = 0x8, scoped, tag = 'scoped memory for tpu_custom_call.1']
    #allocation5 [shape = 's32[2]{0}', space=sflag, size = 0x8, scoped, tag = 'scoped memory for tpu_custom_call.1']
    #allocation6 [shape = 'u8[131072]{0}', space=vmem, size = 0x20000, scoped, tag = 'output window, operand 0']
    %10 = vsyncpa [#allocation4], 0
    %11 = vsyncpa [#allocation5], 0
    %s12 = scalar_lea.sflag [#allocation5], 1
    %13 = vsyncpa %s12, 0
    loop: start=0, step=1, limit=6
    $region2: #{tpu_custom_call.1} parent=1 // loop_pre_header
      _
    $region3: #{tpu_custom_call.1} parent=1 // loop_header
      %s15 = sphi 0, %s19
      %p16 = scmp.ge.s32.totalorder %s15, 6
      %s22 = sphi 0, %s34
      %s23 = sphi 0, %s30
      %s24 = sphi 0, %s22
      %s25 = sphi 0, %s23
      %s26 = sphi 0, %s24
      %s27 = sphi 0, %s25
      %s37 = sphi 0, %s39
      %s40 = sphi 0, %s37
      %s41 = sphi 0, %s40
      %s57 = sphi 0, %s41
      %s61 = sphi 0, %s61
      %s63 = sphi 0, %s61
      %s64 = sphi 0, %s63
      %s78 = sphi 0, %s64
      %s82 = sphi 0, %s82
      %s84 = sphi 0, %s82
      %s85 = sphi 0, %s84
      %s99 = sphi 0, %s85
      %s103 = sphi 0, %s103
      %s105 = sphi 0, %s103
      %s106 = sphi 0, %s105
      %s120 = sphi 0, %s106
      %s124 = sphi 0, %s124
      %s126 = sphi 0, %s124
      %s127 = sphi 0, %s126
      %s141 = sphi 0, %s127
      %s149 = sphi 0, %s151
      %s152 = sphi 0, %s149
      %s153 = sphi 0, %s152
      %s169 = sphi 0, %s153
    $region4: #{tpu_custom_call.1} parent=1 // loop_header_branch
      %18 = sbr.rel (%p16) target = $region8
    $region5: #{tpu_custom_call.1} parent=1 // loop_body
      %s20 = ssub.s32 %s15, 1
      %s21 = ssub.s32 %s15, 2
      %s28 = sadd.s32 1, %s23
      %p29 = scmp.ge.s32.totalorder %s28, 2
      %s30 = scalar_select %p29, 0, %s28
      %s31 = sadd.s32 1, %s22
      %s32 = scalar_select %p29, %s31, %s22
      %p33 = scmp.ge.s32.totalorder %s32, 2
      %s34 = scalar_select %p33, 0, %s32
      %s35 = ssub.s32 %s22, %s34
      %p36 = scmp.eq.s32.totalorder %s35, 0
      %s38 = sadd.s32 %s37, 1
      %s39 = scalar_select %p36, %s37, %s38
      %p42 = pneg %p36
      %p43 = scmp.eq.s32.totalorder %s15, 3
      %p44 = por %p42, %p43
      %p45 = scmp.ne.s32.totalorder %s37, %s40
      %p46 = scmp.eq.s32.totalorder %s15, 0
      %p47 = por %p45, %p46
      %p48 = scmp.ne.s32.totalorder %s37, %s40
      %p49 = scmp.eq.s32.totalorder %s20, 3
      %p50 = por %p48, %p49
      %p51 = scmp.ne.s32.totalorder %s40, %s41
      %p52 = scmp.eq.s32.totalorder %s20, 0
      %p53 = por %p51, %p52
      %p54 = scmp.ne.s32.totalorder %s40, %s41
      %p55 = scmp.eq.s32.totalorder %s21, 3
      %p56 = por %p54, %p55
      %p58 = scmp.ne.s32.totalorder %s41, %s57
      %p59 = scmp.eq.s32.totalorder %s21, 0
      %p60 = por %p58, %p59
      %s62 = sadd.s32 %s61, 1
      %p65 = scmp.eq.s32.totalorder %s15, 3
      %p66 = scmp.ne.s32.totalorder %s61, %s63
      %p67 = scmp.eq.s32.totalorder %s15, 0
      %p68 = por %p66, %p67
      %p69 = scmp.ne.s32.totalorder %s61, %s63
      %p70 = scmp.eq.s32.totalorder %s20, 3
      %p71 = por %p69, %p70
      %p72 = scmp.ne.s32.totalorder %s63, %s64
      %p73 = scmp.eq.s32.totalorder %s20, 0
      %p74 = por %p72, %p73
      %p75 = scmp.ne.s32.totalorder %s63, %s64
      %p76 = scmp.eq.s32.totalorder %s21, 3
      %p77 = por %p75, %p76
      %p79 = scmp.ne.s32.totalorder %s64, %s78
      %p80 = scmp.eq.s32.totalorder %s21, 0
      %p81 = por %p79, %p80
      %s83 = sadd.s32 %s82, 1
      %p86 = scmp.eq.s32.totalorder %s15, 3
      %p87 = scmp.ne.s32.totalorder %s82, %s84
      %p88 = scmp.eq.s32.totalorder %s15, 0
      %p89 = por %p87, %p88
      %p90 = scmp.ne.s32.totalorder %s82, %s84
      %p91 = scmp.eq.s32.totalorder %s20, 3
      %p92 = por %p90, %p91
      %p93 = scmp.ne.s32.totalorder %s84, %s85
      %p94 = scmp.eq.s32.totalorder %s20, 0
      %p95 = por %p93, %p94
      %p96 = scmp.ne.s32.totalorder %s84, %s85
      %p97 = scmp.eq.s32.totalorder %s21, 3
      %p98 = por %p96, %p97
      %p100 = scmp.ne.s32.totalorder %s85, %s99
      %p101 = scmp.eq.s32.totalorder %s21, 0
      %p102 = por %p100, %p101
      %s104 = sadd.s32 %s103, 1
      %p107 = scmp.eq.s32.totalorder %s15, 3
      %p108 = scmp.ne.s32.totalorder %s103, %s105
      %p109 = scmp.eq.s32.totalorder %s15, 0
      %p110 = por %p108, %p109
      %p111 = scmp.ne.s32.totalorder %s103, %s105
      %p112 = scmp.eq.s32.totalorder %s20, 3
      %p113 = por %p111, %p112
      %p114 = scmp.ne.s32.totalorder %s105, %s106
      %p115 = scmp.eq.s32.totalorder %s20, 0
      %p116 = por %p114, %p115
      %p117 = scmp.ne.s32.totalorder %s105, %s106
      %p118 = scmp.eq.s32.totalorder %s21, 3
      %p119 = por %p117, %p118
      %p121 = scmp.ne.s32.totalorder %s106, %s120
      %p122 = scmp.eq.s32.totalorder %s21, 0
      %p123 = por %p121, %p122
      %s125 = sadd.s32 %s124, 1
      %p128 = scmp.eq.s32.totalorder %s15, 3
      %p129 = scmp.ne.s32.totalorder %s124, %s126
      %p130 = scmp.eq.s32.totalorder %s15, 0
      %p131 = por %p129, %p130
      %p132 = scmp.ne.s32.totalorder %s124, %s126
      %p133 = scmp.eq.s32.totalorder %s20, 3
      %p134 = por %p132, %p133
      %p135 = scmp.ne.s32.totalorder %s126, %s127
      %p136 = scmp.eq.s32.totalorder %s20, 0
      %p137 = por %p135, %p136
      %p138 = scmp.ne.s32.totalorder %s126, %s127
      %p139 = scmp.eq.s32.totalorder %s21, 3
      %p140 = por %p138, %p139
      %p142 = scmp.ne.s32.totalorder %s127, %s141
      %p143 = scmp.eq.s32.totalorder %s21, 0
      %p144 = por %p142, %p143
      %s145 = ssub.s32 %s22, %s34
      %s146 = ssub.s32 %s23, %s30
      %s147 = sor.u32 %s145, %s146
      %p148 = scmp.eq.s32.totalorder %s147, 0
      %s150 = sadd.s32 %s149, 1
      %s151 = scalar_select %p148, %s149, %s150
      %p154 = pneg %p148
      %p155 = scmp.eq.s32.totalorder %s15, 3
      %p156 = por %p154, %p155
      %p157 = scmp.ne.s32.totalorder %s149, %s152
      %p158 = scmp.eq.s32.totalorder %s15, 0
      %p159 = por %p157, %p158
      %p160 = scmp.ne.s32.totalorder %s149, %s152
      %p161 = scmp.eq.s32.totalorder %s20, 3
      %p162 = por %p160, %p161
      %p163 = scmp.ne.s32.totalorder %s152, %s153
      %p164 = scmp.eq.s32.totalorder %s20, 0
      %p165 = por %p163, %p164
      %p166 = scmp.ne.s32.totalorder %s152, %s153
      %p167 = scmp.eq.s32.totalorder %s21, 3
      %p168 = por %p166, %p167
      %p170 = scmp.ne.s32.totalorder %s153, %s169
      %p171 = scmp.eq.s32.totalorder %s21, 0
      %p172 = por %p170, %p171
      %p173 = scmp.le.s32.totalorder 1, %s15
      %p174 = scmp.lt.s32.totalorder %s15, 5
      %p175 = pnand %p173, %p174
      %p176 = pneg %p175
      // Predicated region
      $region9: #{tpu_custom_call.1} parent=5 // pred_check
        _
      $region10: #{tpu_custom_call.1} parent=5 // pred_check_branch
        %178 = sbr.rel (%p175) target = $region12
      $region11: #{tpu_custom_call.1} parent=5 // pred_region
        %s179 = ssub.s32 %s15, 1
        // Predicated region
        $region13: #{tpu_custom_call.1} parent=11 // pred_check
          %p180 = pneg %p74
        $region14: #{tpu_custom_call.1} parent=11 // pred_check_branch
          %182 = sbr.rel (%p180) target = $region16
        $region15: #{tpu_custom_call.1} parent=11 // pred_region
          %s184 = ssub.s32 18432, 18432
          %185 = vsyncadd [#allocation4], %s184
          %s186 = sshll.u32 [#allocation3], 4
          %s187 = int_to_ptr.vmem [resolvable:$true] %s186
          %192 = dma.hbm_to_vmem [thread:$0]  %s1, 18432, %s187, [#allocation4], 128, 128, 8
        $region16: #{tpu_custom_call.1} parent=11 // pred_fallthru
          _
        // Predicated region
        $region17: #{tpu_custom_call.1} parent=11 // pred_check
          %p193 = pneg %p95
        $region18: #{tpu_custom_call.1} parent=11 // pred_check_branch
          %195 = sbr.rel (%p193) target = $region20
        $region19: #{tpu_custom_call.1} parent=11 // pred_region
          _
        $region20: #{tpu_custom_call.1} parent=11 // pred_fallthru
          _
        // Predicated region
        $region21: #{tpu_custom_call.1} parent=11 // pred_check
          %p196 = pneg %p116
        $region22: #{tpu_custom_call.1} parent=11 // pred_check_branch
          %198 = sbr.rel (%p196) target = $region24
        $region23: #{tpu_custom_call.1} parent=11 // pred_region
          _
        $region24: #{tpu_custom_call.1} parent=11 // pred_fallthru
          _
        // Predicated region
        $region25: #{tpu_custom_call.1} parent=11 // pred_check
          %p199 = pneg %p137
        $region26: #{tpu_custom_call.1} parent=11 // pred_check_branch
          %201 = sbr.rel (%p199) target = $region28
        $region27: #{tpu_custom_call.1} parent=11 // pred_region
          _
        $region28: #{tpu_custom_call.1} parent=11 // pred_fallthru
          _
      $region12: #{tpu_custom_call.1} parent=5 // pred_fallthru
        _
      %p202 = scmp.lt.s32.totalorder %s15, 4
      // Predicated region
      $region29: #{tpu_custom_call.1} parent=5 // pred_check
        %p203 = pneg %p202
      $region30: #{tpu_custom_call.1} parent=5 // pred_check_branch
        %205 = sbr.rel (%p203) target = $region32
      $region31: #{tpu_custom_call.1} parent=5 // pred_region
        // Predicated region
        $region33: #{tpu_custom_call.1} parent=31 // pred_check
          %p206 = pneg %p47
        $region34: #{tpu_custom_call.1} parent=31 // pred_check_branch
          %208 = sbr.rel (%p206) target = $region36
        $region35: #{tpu_custom_call.1} parent=31 // pred_region
          %p209 = scmp.lt.s32.totalorder %s22, 1
          %s210 = scalar_select %p209, %s22, 1
          %s211 = smul.addr %s210, 60
          %s212 = smul.addr %s211, 4
          %s213 = scalar_lea.vmem %s0, %s212
        $region36: #{tpu_custom_call.1} parent=31 // pred_fallthru
          _
      $region32: #{tpu_custom_call.1} parent=5 // pred_fallthru
        _
      %p214 = scmp.le.s32.totalorder 1, %s15
      %p215 = scmp.lt.s32.totalorder %s15, 5
      %p216 = pnand %p214, %p215
      %p217 = pneg %p216
      // Predicated region
      $region37: #{tpu_custom_call.1} parent=5 // pred_check
        _
      $region38: #{tpu_custom_call.1} parent=5 // pred_check_branch
        %219 = sbr.rel (%p216) target = $region40
      $region39: #{tpu_custom_call.1} parent=5 // pred_region
        %s220 = ssub.s32 %s15, 1
        // Predicated region
        $region41: #{tpu_custom_call.1} parent=39 // pred_check
          %p221 = pneg %p74
        $region42: #{tpu_custom_call.1} parent=39 // pred_check_branch
          %223 = sbr.rel (%p221) target = $region44
        $region43: #{tpu_custom_call.1} parent=39 // pred_region
          %224 = dma.done [#allocation4], 18432
        $region44: #{tpu_custom_call.1} parent=39 // pred_fallthru
          _
        %p225 = scmp.lt.s32.totalorder %s24, 1
        %s226 = scalar_select %p225, %s24, 1
        %s227 = smul.addr %s226, 60
        %s228 = smul.addr %s227, 4
        %s229 = scalar_lea.vmem %s0, %s228
        %p230 = pneg %p53
        %p231 = pneg %p50
        %p232 = pneg %p74
        %p233 = pneg %p71
        %p234 = pneg %p95
        %p235 = pneg %p92
        %p236 = pneg %p116
        %p237 = pneg %p113
        %p238 = pneg %p137
        %p239 = pneg %p134
        %p240 = pneg %p165
        %p241 = pneg %p162
        %s242 = sand.u32 %s152, 1
        %s243 = scalar_lea.sflag [#allocation5], %s242
        %s244 = sand.u32 %s152, 1
        %s245 = smul.addr %s244, 128
        %s246 = scalar_lea.vmem [#allocation6], %s245
        %p247 = scmp.lt.s32.totalorder %s24, 1
        %s248 = scalar_select %p247, %s24, 1
        %s249 = smul.addr %s248, 60
        %s250 = smul.addr %s249, 4
        %s251 = scalar_lea.vmem %s0, %s250
        %s252 = smul.u32 8, %s25
        %s254 = smul.u32 %s25, 8
        %s255 = smul.u32 %s254, 3
        %s256 = smul.addr %s255, 4
        %s257 = scalar_lea.vmem %s251, %s256
        %v258 = vld [vmem:[%s257] sm:$0xf]
        %v259 = vld [vmem:[%s257 + $0x4] sm:$0xf]
        %v260 = vld [vmem:[%s257 + $0x8] sm:$0x1]
        %v261 = vld [vmem:[%s257 + $0xc] sm:$0xf]
        %v262 = vld [vmem:[%s257 + $0x10] sm:$0xf]
        %v263 = vld [vmem:[%s257 + $0x14] sm:$0x1]
        %v264 = vld [vmem:[%s257 + $0x18] sm:$0xf]
        %v265 = vld [vmem:[%s257 + $0x1c] sm:$0xf]
        %v266 = vld [vmem:[%s257 + $0x20] sm:$0x1]
        %v267 = vld [vmem:[%s257 + $0x24] sm:$0xf]
        %v268 = vld [vmem:[%s257 + $0x28] sm:$0xf]
        %v269 = vld [vmem:[%s257 + $0x2c] sm:$0x1]
        %v270 = vld [vmem:[%s257 + $0x30] sm:$0xf]
        %v271 = vld [vmem:[%s257 + $0x34] sm:$0xf]
        %v272 = vld [vmem:[%s257 + $0x38] sm:$0x1]
        %v273 = vld [vmem:[%s257 + $0x3c] sm:$0xf]
        %v274 = vld [vmem:[%s257 + $0x40] sm:$0xf]
        %v275 = vld [vmem:[%s257 + $0x44] sm:$0x1]
        %v276 = vld [vmem:[%s257 + $0x48] sm:$0xf]
        %v277 = vld [vmem:[%s257 + $0x4c] sm:$0xf]
        %v278 = vld [vmem:[%s257 + $0x50] sm:$0x1]
        %v279 = vld [vmem:[%s257 + $0x54] sm:$0xf]
        %v280 = vld [vmem:[%s257 + $0x58] sm:$0xf]
        %v281 = vld [vmem:[%s257 + $0x5c] sm:$0x1]
        %v282 = vld [vmem:[%s257 + $0x60] sm:$0xf]
        %v283 = vld [vmem:[%s257 + $0x64] sm:$0xf]
        %v284 = vld [vmem:[%s257 + $0x68] sm:$0x1]
        %v285 = vld [vmem:[%s257 + $0x6c] sm:$0xf]
        %v286 = vld [vmem:[%s257 + $0x70] sm:$0xf]
        %v287 = vld [vmem:[%s257 + $0x74] sm:$0x1]
        %v288 = vld [vmem:[%s257 + $0x78] sm:$0xf]
        %v289 = vld [vmem:[%s257 + $0x7c] sm:$0xf]
        %v290 = vld [vmem:[%s257 + $0x80] sm:$0x1]
        %v291 = vld [vmem:[%s257 + $0x84] sm:$0xf]
        %v292 = vld [vmem:[%s257 + $0x88] sm:$0xf]
        %v293 = vld [vmem:[%s257 + $0x8c] sm:$0x1]
        %vm294 = vsmask.f32 3328
        %vm295 = vsmask.f32 7440
        %vm296 = vmor %vm294, %vm295
        %v298 = vshrl.u32 %v258, 16
        %v300 = vrot.slane %v298, 4
        %v301 = vshll.u32 %v258, 16
        %v303 = vrot.slane %v301, 5
        %v304 = vor.u32 %v300, %v303
        %v305 = vrot.slane %v304, 4
        %v307 = vshll.u32 %v259, 16
        %v309 = vrot.slane %v307, 5
        %v310 = vsel %vm296, %v305, %v309
        %v311 = vshrl.u32 %v259, 16
        %v313 = vrot.slane %v311, 4
        %v314 = vor.u32 %v313, %v309
        %v315 = vrot.slane %v314, 4
        %v317 = vshll.u32 %v260, 16
        %v319 = vrot.slane %v317, 5
        %v320 = vsel %vm296, %v315, %v319
        %v322 = vshrl.u32 %v261, 16
        %v324 = vrot.slane %v322, 4
        %v325 = vshll.u32 %v261, 16
        %v327 = vrot.slane %v325, 5
        %v328 = vor.u32 %v324, %v327
        %v329 = vrot.slane %v328, 4
        %v331 = vshll.u32 %v262, 16
        %v333 = vrot.slane %v331, 5
        %v334 = vsel %vm296, %v329, %v333
        %v335 = vshrl.u32 %v262, 16
        %v337 = vrot.slane %v335, 4
        %v338 = vor.u32 %v337, %v333
        %v339 = vrot.slane %v338, 4
        %v341 = vshll.u32 %v263, 16
        %v343 = vrot.slane %v341, 5
        %v344 = vsel %vm296, %v339, %v343
        %v346 = vshrl.u32 %v264, 16
        %v348 = vrot.slane %v346, 4
        %v349 = vshll.u32 %v264, 16
        %v351 = vrot.slane %v349, 5
        %v352 = vor.u32 %v348, %v351
        %v353 = vrot.slane %v352, 4
        %v355 = vshll.u32 %v265, 16
        %v357 = vrot.slane %v355, 5
        %v358 = vsel %vm296, %v353, %v357
        %v359 = vshrl.u32 %v265, 16
        %v361 = vrot.slane %v359, 4
        %v362 = vor.u32 %v361, %v357
        %v363 = vrot.slane %v362, 4
        %v365 = vshll.u32 %v266, 16
        %v367 = vrot.slane %v365, 5
        %v368 = vsel %vm296, %v363, %v367
        %v370 = vshrl.u32 %v267, 16
        %v372 = vrot.slane %v370, 4
        %v373 = vshll.u32 %v267, 16
        %v375 = vrot.slane %v373, 5
        %v376 = vor.u32 %v372, %v375
        %v377 = vrot.slane %v376, 4
        %v379 = vshll.u32 %v268, 16
        %v381 = vrot.slane %v379, 5
        %v382 = vsel %vm296, %v377, %v381
        %v383 = vshrl.u32 %v268, 16
        %v385 = vrot.slane %v383, 4
        %v386 = vor.u32 %v385, %v381
        %v387 = vrot.slane %v386, 4
        %v389 = vshll.u32 %v269, 16
        %v391 = vrot.slane %v389, 5
        %v392 = vsel %vm296, %v387, %v391
        %v394 = vshrl.u32 %v270, 16
        %v396 = vrot.slane %v394, 4
        %v397 = vshll.u32 %v270, 16
        %v399 = vrot.slane %v397, 5
        %v400 = vor.u32 %v396, %v399
        %v401 = vrot.slane %v400, 4
        %v403 = vshll.u32 %v271, 16
        %v405 = vrot.slane %v403, 5
        %v406 = vsel %vm296, %v401, %v405
        %v407 = vshrl.u32 %v271, 16
        %v409 = vrot.slane %v407, 4
        %v410 = vor.u32 %v409, %v405
        %v411 = vrot.slane %v410, 4
        %v413 = vshll.u32 %v272, 16
        %v415 = vrot.slane %v413, 5
        %v416 = vsel %vm296, %v411, %v415
        %v418 = vshrl.u32 %v273, 16
        %v420 = vrot.slane %v418, 4
        %v421 = vshll.u32 %v273, 16
        %v423 = vrot.slane %v421, 5
        %v424 = vor.u32 %v420, %v423
        %v425 = vrot.slane %v424, 4
        %v427 = vshll.u32 %v274, 16
        %v429 = vrot.slane %v427, 5
        %v430 = vsel %vm296, %v425, %v429
        %v431 = vshrl.u32 %v274, 16
        %v433 = vrot.slane %v431, 4
        %v434 = vor.u32 %v433, %v429
        %v435 = vrot.slane %v434, 4
        %v437 = vshll.u32 %v275, 16
        %v439 = vrot.slane %v437, 5
        %v440 = vsel %vm296, %v435, %v439
        %v442 = vshrl.u32 %v276, 16
        %v444 = vrot.slane %v442, 4
        %v445 = vshll.u32 %v276, 16
        %v447 = vrot.slane %v445, 5
        %v448 = vor.u32 %v444, %v447
        %v449 = vrot.slane %v448, 4
        %v451 = vshll.u32 %v277, 16
        %v453 = vrot.slane %v451, 5
        %v454 = vsel %vm296, %v449, %v453
        %v455 = vshrl.u32 %v277, 16
        %v457 = vrot.slane %v455, 4
        %v458 = vor.u32 %v457, %v453
        %v459 = vrot.slane %v458, 4
        %v461 = vshll.u32 %v278, 16
        %v463 = vrot.slane %v461, 5
        %v464 = vsel %vm296, %v459, %v463
        %v466 = vshrl.u32 %v279, 16
        %v468 = vrot.slane %v466, 4
        %v469 = vshll.u32 %v279, 16
        %v471 = vrot.slane %v469, 5
        %v472 = vor.u32 %v468, %v471
        %v473 = vrot.slane %v472, 4
        %v475 = vshll.u32 %v280, 16
        %v477 = vrot.slane %v475, 5
        %v478 = vsel %vm296, %v473, %v477
        %v479 = vshrl.u32 %v280, 16
        %v481 = vrot.slane %v479, 4
        %v482 = vor.u32 %v481, %v477
        %v483 = vrot.slane %v482, 4
        %v485 = vshll.u32 %v281, 16
        %v487 = vrot.slane %v485, 5
        %v488 = vsel %vm296, %v483, %v487
        %v490 = vshrl.u32 %v282, 16
        %v492 = vrot.slane %v490, 4
        %v493 = vshll.u32 %v282, 16
        %v495 = vrot.slane %v493, 5
        %v496 = vor.u32 %v492, %v495
        %v497 = vrot.slane %v496, 4
        %v499 = vshll.u32 %v283, 16
        %v501 = vrot.slane %v499, 5
        %v502 = vsel %vm296, %v497, %v501
        %v503 = vshrl.u32 %v283, 16
        %v505 = vrot.slane %v503, 4
        %v506 = vor.u32 %v505, %v501
        %v507 = vrot.slane %v506, 4
        %v509 = vshll.u32 %v284, 16
        %v511 = vrot.slane %v509, 5
        %v512 = vsel %vm296, %v507, %v511
        %v514 = vshrl.u32 %v285, 16
        %v516 = vrot.slane %v514, 4
        %v517 = vshll.u32 %v285, 16
        %v519 = vrot.slane %v517, 5
        %v520 = vor.u32 %v516, %v519
        %v521 = vrot.slane %v520, 4
        %v523 = vshll.u32 %v286, 16
        %v525 = vrot.slane %v523, 5
        %v526 = vsel %vm296, %v521, %v525
        %v527 = vshrl.u32 %v286, 16
        %v529 = vrot.slane %v527, 4
        %v530 = vor.u32 %v529, %v525
        %v531 = vrot.slane %v530, 4
        %v533 = vshll.u32 %v287, 16
        %v535 = vrot.slane %v533, 5
        %v536 = vsel %vm296, %v531, %v535
        %vm567 = vcmask 1042432
        %vm568 = vcmask 1046532
        %vm569 = vmor %vm567, %vm568
        %v570 = vrot.slane %v258, 5
        %v571 = vrot.slane %v570, 4
        %v572 = vrot.slane %v259, 5
        %v573 = vsel %vm569, %v571, %v572
        %v574 = vrot.slane %v572, 4
        %v575 = vrot.slane %v260, 5
        %v576 = vsel %vm569, %v574, %v575
        %v577 = vrot.slane %v261, 5
        %v578 = vrot.slane %v577, 4
        %v579 = vrot.slane %v262, 5
        %v580 = vsel %vm569, %v578, %v579
        %v581 = vrot.slane %v579, 4
        %v582 = vrot.slane %v263, 5
        %v583 = vsel %vm569, %v581, %v582
        %v584 = vrot.slane %v264, 5
        %v585 = vrot.slane %v584, 4
        %v586 = vrot.slane %v265, 5
        %v587 = vsel %vm569, %v585, %v586
        %v588 = vrot.slane %v586, 4
        %v589 = vrot.slane %v266, 5
        %v590 = vsel %vm569, %v588, %v589
        %v591 = vrot.slane %v267, 5
        %v592 = vrot.slane %v591, 4
        %v593 = vrot.slane %v268, 5
        %v594 = vsel %vm569, %v592, %v593
        %v595 = vrot.slane %v593, 4
        %v596 = vrot.slane %v269, 5
        %v597 = vsel %vm569, %v595, %v596
        %v598 = vrot.slane %v270, 5
        %v599 = vrot.slane %v598, 4
        %v600 = vrot.slane %v271, 5
        %v601 = vsel %vm569, %v599, %v600
        %v602 = vrot.slane %v600, 4
        %v603 = vrot.slane %v272, 5
        %v604 = vsel %vm569, %v602, %v603
        %v605 = vrot.slane %v273, 5
        %v606 = vrot.slane %v605, 4
        %v607 = vrot.slane %v274, 5
        %v608 = vsel %vm569, %v606, %v607
        %v609 = vrot.slane %v607, 4
        %v610 = vrot.slane %v275, 5
        %v611 = vsel %vm569, %v609, %v610
        %v612 = vrot.slane %v276, 5
        %v613 = vrot.slane %v612, 4
        %v614 = vrot.slane %v277, 5
        %v615 = vsel %vm569, %v613, %v614
        %v616 = vrot.slane %v614, 4
        %v617 = vrot.slane %v278, 5
        %v618 = vsel %vm569, %v616, %v617
        %v619 = vrot.slane %v279, 5
        %v620 = vrot.slane %v619, 4
        %v621 = vrot.slane %v280, 5
        %v622 = vsel %vm569, %v620, %v621
        %v623 = vrot.slane %v621, 4
        %v624 = vrot.slane %v281, 5
        %v625 = vsel %vm569, %v623, %v624
        %v626 = vrot.slane %v282, 5
        %v627 = vrot.slane %v626, 4
        %v628 = vrot.slane %v283, 5
        %v629 = vsel %vm569, %v627, %v628
        %v630 = vrot.slane %v628, 4
        %v631 = vrot.slane %v284, 5
        %v632 = vsel %vm569, %v630, %v631
        %v633 = vrot.slane %v285, 5
        %v634 = vrot.slane %v633, 4
        %v635 = vrot.slane %v286, 5
        %v636 = vsel %vm569, %v634, %v635
        %v637 = vrot.slane %v635, 4
        %v638 = vrot.slane %v287, 5
        %v639 = vsel %vm569, %v637, %v638
        %v640 = vunpack.c.l.b16 %v258
        %v641 = vunpack.c.l.b16 %v259
        %v642 = vunpack.c.l.b16 %v261
        %v643 = vunpack.c.l.b16 %v262
        %v644 = vunpack.c.l.b16 %v264
        %v645 = vunpack.c.l.b16 %v265
        %v646 = vunpack.c.l.b16 %v267
        %v647 = vunpack.c.l.b16 %v268
        %v648 = vunpack.c.l.b16 %v270
        %v649 = vunpack.c.l.b16 %v271
        %v650 = vunpack.c.l.b16 %v273
        %v651 = vunpack.c.l.b16 %v274
        %v652 = vunpack.c.l.b16 %v276
        %v653 = vunpack.c.l.b16 %v277
        %v654 = vunpack.c.l.b16 %v279
        %v655 = vunpack.c.l.b16 %v280
        %v656 = vunpack.c.l.b16 %v282
        %v657 = vunpack.c.l.b16 %v283
        %v658 = vunpack.c.l.b16 %v285
        %v659 = vunpack.c.l.b16 %v286
        %v660 = vpack.c.b16 %v641, %v640
        %v661 = vpack.c.b16 %v643, %v642
        %v662 = vpack.c.b16 %v645, %v644
        %v663 = vpack.c.b16 %v647, %v646
        %v664 = vpack.c.b16 %v649, %v648
        %v665 = vpack.c.b16 %v651, %v650
        %v666 = vpack.c.b16 %v653, %v652
        %v667 = vpack.c.b16 %v655, %v654
        %v668 = vpack.c.b16 %v657, %v656
        %v669 = vpack.c.b16 %v659, %v658
        %v680 = vunpack.c.l.b16 %v310
        %v681 = vunpack.c.l.b16 %v320
        %v682 = vunpack.c.l.b16 %v334
        %v683 = vunpack.c.l.b16 %v344
        %v684 = vunpack.c.l.b16 %v358
        %v685 = vunpack.c.l.b16 %v368
        %v686 = vunpack.c.l.b16 %v382
        %v687 = vunpack.c.l.b16 %v392
        %v688 = vunpack.c.l.b16 %v406
        %v689 = vunpack.c.l.b16 %v416
        %v690 = vunpack.c.l.b16 %v430
        %v691 = vunpack.c.l.b16 %v440
        %v692 = vunpack.c.l.b16 %v454
        %v693 = vunpack.c.l.b16 %v464
        %v694 = vunpack.c.l.b16 %v478
        %v695 = vunpack.c.l.b16 %v488
        %v696 = vunpack.c.l.b16 %v502
        %v697 = vunpack.c.l.b16 %v512
        %v698 = vunpack.c.l.b16 %v526
        %v699 = vunpack.c.l.b16 %v536
        %v700 = vpack.c.b16 %v681, %v680
        %v701 = vpack.c.b16 %v683, %v682
        %v702 = vpack.c.b16 %v685, %v684
        %v703 = vpack.c.b16 %v687, %v686
        %v704 = vpack.c.b16 %v689, %v688
        %v705 = vpack.c.b16 %v691, %v690
        %v706 = vpack.c.b16 %v693, %v692
        %v707 = vpack.c.b16 %v695, %v694
        %v708 = vpack.c.b16 %v697, %v696
        %v709 = vpack.c.b16 %v699, %v698
        %v720 = vunpack.c.l.b16 %v573
        %v721 = vunpack.c.l.b16 %v576
        %v722 = vunpack.c.l.b16 %v580
        %v723 = vunpack.c.l.b16 %v583
        %v724 = vunpack.c.l.b16 %v587
        %v725 = vunpack.c.l.b16 %v590
        %v726 = vunpack.c.l.b16 %v594
        %v727 = vunpack.c.l.b16 %v597
        %v728 = vunpack.c.l.b16 %v601
        %v729 = vunpack.c.l.b16 %v604
        %v730 = vunpack.c.l.b16 %v608
        %v731 = vunpack.c.l.b16 %v611
        %v732 = vunpack.c.l.b16 %v615
        %v733 = vunpack.c.l.b16 %v618
        %v734 = vunpack.c.l.b16 %v622
        %v735 = vunpack.c.l.b16 %v625
        %v736 = vunpack.c.l.b16 %v629
        %v737 = vunpack.c.l.b16 %v632
        %v738 = vunpack.c.l.b16 %v636
        %v739 = vunpack.c.l.b16 %v639
        %v740 = vpack.c.b16 %v721, %v720
        %v741 = vpack.c.b16 %v723, %v722
        %v742 = vpack.c.b16 %v725, %v724
        %v743 = vpack.c.b16 %v727, %v726
        %v744 = vpack.c.b16 %v729, %v728
        %v745 = vpack.c.b16 %v731, %v730
        %v746 = vpack.c.b16 %v733, %v732
        %v747 = vpack.c.b16 %v735, %v734
        %v748 = vpack.c.b16 %v737, %v736
        %v749 = vpack.c.b16 %v739, %v738
        %v760 = vld [vmem:[#allocation3] sm:$0xff]
        %v761 = vld [vmem:[#allocation3 + $0x8] sm:$0xff]
        %v762 = vld [vmem:[#allocation3 + $0x10] sm:$0xff]
        %v763 = vld [vmem:[#allocation3 + $0x18] sm:$0xff]
        %v764 = vld [vmem:[#allocation3 + $0x20] sm:$0xff]
        %v765 = vld [vmem:[#allocation3 + $0x28] sm:$0xff]
        %v766 = vld [vmem:[#allocation3 + $0x30] sm:$0xff]
        %v767 = vld [vmem:[#allocation3 + $0x38] sm:$0xff]
        %v768 = vld [vmem:[#allocation3 + $0x40] sm:$0xff]
        %v769 = vld [vmem:[#allocation3 + $0x48] sm:$0xff]
        %v770 = vld [vmem:[#allocation3 + $0x50] sm:$0xff]
        %v771 = vld [vmem:[#allocation3 + $0x58] sm:$0xff]
        %v772 = vld [vmem:[#allocation3 + $0x60] sm:$0xff]
        %v773 = vld [vmem:[#allocation3 + $0x68] sm:$0xff]
        %v774 = vld [vmem:[#allocation3 + $0x70] sm:$0xff]
        %v775 = vld [vmem:[#allocation3 + $0x78] sm:$0xff]
        %v776 = vld [vmem:[#allocation3 + $0x80] sm:$0xff]
        %v777 = vld [vmem:[#allocation3 + $0x88] sm:$0xff]
        %v778 = vld [vmem:[#allocation3 + $0x90] sm:$0xff]
        %v779 = vld [vmem:[#allocation3 + $0x98] sm:$0xff]
        %v780 = vld [vmem:[#allocation3 + $0xa0] sm:$0xff]
        %v781 = vld [vmem:[#allocation3 + $0xa8] sm:$0xff]
        %v782 = vld [vmem:[#allocation3 + $0xb0] sm:$0xff]
        %v783 = vld [vmem:[#allocation3 + $0xb8] sm:$0xff]
        %v784 = vld [vmem:[#allocation3 + $0xc0] sm:$0xff]
        %v785 = vld [vmem:[#allocation3 + $0xc8] sm:$0xff]
        %v786 = vld [vmem:[#allocation3 + $0xd0] sm:$0xff]
        %v787 = vld [vmem:[#allocation3 + $0xd8] sm:$0xff]
        %v788 = vld [vmem:[#allocation3 + $0xe0] sm:$0xff]
        %v789 = vld [vmem:[#allocation3 + $0xe8] sm:$0xff]
        %v790 = vld [vmem:[#allocation3 + $0xf0] sm:$0xff]
        %v791 = vld [vmem:[#allocation3 + $0xf8] sm:$0xff]
        %v792 = vld [vmem:[#allocation3 + $0x100] sm:$0xff]
        %v793 = vld [vmem:[#allocation3 + $0x108] sm:$0xff]
        %v794 = vld [vmem:[#allocation3 + $0x110] sm:$0xff]
        %v795 = vld [vmem:[#allocation3 + $0x118] sm:$0xff]
        %v796 = vld [vmem:[#allocation3 + $0x120] sm:$0xff]
        %v797 = vld [vmem:[#allocation3 + $0x128] sm:$0xff]
        %v798 = vld [vmem:[#allocation3 + $0x130] sm:$0xff]
        %v799 = vld [vmem:[#allocation3 + $0x138] sm:$0xff]
        %v800 = vld [vmem:[#allocation3 + $0x140] sm:$0xff]
        %v801 = vld [vmem:[#allocation3 + $0x148] sm:$0xff]
        %v802 = vld [vmem:[#allocation3 + $0x150] sm:$0xff]
        %v803 = vld [vmem:[#allocation3 + $0x158] sm:$0xff]
        %v804 = vld [vmem:[#allocation3 + $0x160] sm:$0xff]
        %v805 = vld [vmem:[#allocation3 + $0x168] sm:$0xff]
        %v806 = vld [vmem:[#allocation3 + $0x170] sm:$0xff]
        %v807 = vld [vmem:[#allocation3 + $0x178] sm:$0xff]
        %v809 = vshrl.u32 %v288, 16
        %v811 = vrot.slane %v809, 4
        %v812 = vshll.u32 %v288, 16
        %v814 = vrot.slane %v812, 5
        %v815 = vor.u32 %v811, %v814
        %v816 = vrot.slane %v815, 4
        %v818 = vshll.u32 %v289, 16
        %v820 = vrot.slane %v818, 5
        %v821 = vsel %vm296, %v816, %v820
        %v822 = vshrl.u32 %v289, 16
        %v824 = vrot.slane %v822, 4
        %v825 = vor.u32 %v824, %v820
        %v826 = vrot.slane %v825, 4
        %v828 = vshll.u32 %v290, 16
        %v830 = vrot.slane %v828, 5
        %v831 = vsel %vm296, %v826, %v830
        %v835 = vrot.slane %v288, 5
        %v836 = vrot.slane %v835, 4
        %v837 = vrot.slane %v289, 5
        %v838 = vsel %vm569, %v836, %v837
        %v839 = vrot.slane %v837, 4
        %v840 = vrot.slane %v290, 5
        %v841 = vsel %vm569, %v839, %v840
        %v842 = vunpack.c.l.b16 %v288
        %v843 = vunpack.c.l.b16 %v289
        %v844 = vpack.c.b16 %v843, %v842
        %v846 = vunpack.c.l.b16 %v821
        %v847 = vunpack.c.l.b16 %v831
        %v848 = vpack.c.b16 %v847, %v846
        %v850 = vunpack.c.l.b16 %v838
        %v851 = vunpack.c.l.b16 %v841
        %v852 = vpack.c.b16 %v851, %v850
        %s854 = scalar_lea.vmem [#allocation3], 384
        %v855 = vld [vmem:[%s854] sm:$0xff]
        %v856 = vld [vmem:[%s854 + $0x8] sm:$0xff]
        %v857 = vld [vmem:[%s854 + $0x10] sm:$0xff]
        %v858 = vld [vmem:[%s854 + $0x18] sm:$0xff]
        %v859 = vld [vmem:[%s854 + $0x20] sm:$0xff]
        %v860 = vld [vmem:[%s854 + $0x28] sm:$0xff]
        %v861 = vld [vmem:[%s854 + $0x30] sm:$0xff]
        %v862 = vld [vmem:[%s854 + $0x38] sm:$0xff]
        %v863 = vld [vmem:[%s854 + $0x40] sm:$0xff]
        %v864 = vld [vmem:[%s854 + $0x48] sm:$0xff]
        %v865 = vld [vmem:[%s854 + $0x50] sm:$0xff]
        %v866 = vld [vmem:[%s854 + $0x58] sm:$0xff]
        %v867 = vld [vmem:[%s854 + $0x60] sm:$0xff]
        %v868 = vld [vmem:[%s854 + $0x68] sm:$0xff]
        %v869 = vld [vmem:[%s854 + $0x70] sm:$0xff]
        %v870 = vld [vmem:[%s854 + $0x78] sm:$0xff]
        %v871 = vld [vmem:[%s854 + $0x80] sm:$0xff]
        %v872 = vld [vmem:[%s854 + $0x88] sm:$0xff]
        %v873 = vld [vmem:[%s854 + $0x90] sm:$0xff]
        %v874 = vld [vmem:[%s854 + $0x98] sm:$0xff]
        %v875 = vld [vmem:[%s854 + $0xa0] sm:$0xff]
        %v876 = vld [vmem:[%s854 + $0xa8] sm:$0xff]
        %v877 = vld [vmem:[%s854 + $0xb0] sm:$0xff]
        %v878 = vld [vmem:[%s854 + $0xb8] sm:$0xff]
        %v879 = vld [vmem:[%s854 + $0xc0] sm:$0xff]
        %v880 = vld [vmem:[%s854 + $0xc8] sm:$0xff]
        %v881 = vld [vmem:[%s854 + $0xd0] sm:$0xff]
        %v882 = vld [vmem:[%s854 + $0xd8] sm:$0xff]
        %v883 = vld [vmem:[%s854 + $0xe0] sm:$0xff]
        %v884 = vld [vmem:[%s854 + $0xe8] sm:$0xff]
        %v885 = vld [vmem:[%s854 + $0xf0] sm:$0xff]
        %v886 = vld [vmem:[%s854 + $0xf8] sm:$0xff]
        %v887 = vld [vmem:[%s854 + $0x100] sm:$0xff]
        %v888 = vld [vmem:[%s854 + $0x108] sm:$0xff]
        %v889 = vld [vmem:[%s854 + $0x110] sm:$0xff]
        %v890 = vld [vmem:[%s854 + $0x118] sm:$0xff]
        %v891 = vld [vmem:[%s854 + $0x120] sm:$0xff]
        %v892 = vld [vmem:[%s854 + $0x128] sm:$0xff]
        %v893 = vld [vmem:[%s854 + $0x130] sm:$0xff]
        %v894 = vld [vmem:[%s854 + $0x138] sm:$0xff]
        %v895 = vld [vmem:[%s854 + $0x140] sm:$0xff]
        %v896 = vld [vmem:[%s854 + $0x148] sm:$0xff]
        %v897 = vld [vmem:[%s854 + $0x150] sm:$0xff]
        %v898 = vld [vmem:[%s854 + $0x158] sm:$0xff]
        %v899 = vld [vmem:[%s854 + $0x160] sm:$0xff]
        %v900 = vld [vmem:[%s854 + $0x168] sm:$0xff]
        %v901 = vld [vmem:[%s854 + $0x170] sm:$0xff]
        %v902 = vld [vmem:[%s854 + $0x178] sm:$0xff]
        %v951 = vunpack.c.l.b16 %v855
        %v952 = vunpack.c.h.b16 %v855
        %v953 = vunpack.c.l.b16 %v856
        %v954 = vunpack.c.h.b16 %v856
        %v955 = vunpack.c.l.b16 %v857
        %v956 = vunpack.c.h.b16 %v857
        %v957 = vunpack.c.l.b16 %v858
        %v958 = vunpack.c.h.b16 %v858
        %v959 = vunpack.c.l.b16 %v859
        %v960 = vunpack.c.h.b16 %v859
        %v961 = vunpack.c.l.b16 %v860
        %v962 = vunpack.c.h.b16 %v860
        %v963 = vunpack.c.l.b16 %v861
        %v964 = vunpack.c.h.b16 %v861
        %v965 = vunpack.c.l.b16 %v862
        %v966 = vunpack.c.h.b16 %v862
        %v967 = vunpack.c.l.b16 %v863
        %v968 = vunpack.c.h.b16 %v863
        %v969 = vunpack.c.l.b16 %v864
        %v970 = vunpack.c.h.b16 %v864
        %v971 = vunpack.c.l.b16 %v865
        %v972 = vunpack.c.h.b16 %v865
        %v973 = vunpack.c.l.b16 %v866
        %v974 = vunpack.c.h.b16 %v866
        %v975 = vunpack.c.l.b16 %v867
        %v976 = vunpack.c.h.b16 %v867
        %v977 = vunpack.c.l.b16 %v868
        %v978 = vunpack.c.h.b16 %v868
        %v979 = vunpack.c.l.b16 %v869
        %v980 = vunpack.c.h.b16 %v869
        %v981 = vunpack.c.l.b16 %v870
        %v982 = vunpack.c.h.b16 %v870
        %v983 = vunpack.c.l.b16 %v871
        %v984 = vunpack.c.h.b16 %v871
        %v985 = vunpack.c.l.b16 %v872
        %v986 = vunpack.c.h.b16 %v872
        %v987 = vunpack.c.l.b16 %v873
        %v988 = vunpack.c.h.b16 %v873
        %v989 = vunpack.c.l.b16 %v874
        %v990 = vunpack.c.h.b16 %v874
        %v991 = vunpack.c.l.b16 %v875
        %v992 = vunpack.c.h.b16 %v875
        %v993 = vunpack.c.l.b16 %v876
        %v994 = vunpack.c.h.b16 %v876
        %v995 = vunpack.c.l.b16 %v877
        %v996 = vunpack.c.h.b16 %v877
        %v997 = vunpack.c.l.b16 %v878
        %v998 = vunpack.c.h.b16 %v878
        %v999 = vunpack.c.l.b16 %v879
        %v1000 = vunpack.c.h.b16 %v879
        %v1001 = vunpack.c.l.b16 %v880
        %v1002 = vunpack.c.h.b16 %v880
        %v1003 = vunpack.c.l.b16 %v881
        %v1004 = vunpack.c.h.b16 %v881
        %v1005 = vunpack.c.l.b16 %v882
        %v1006 = vunpack.c.h.b16 %v882
        %v1007 = vunpack.c.l.b16 %v883
        %v1008 = vunpack.c.h.b16 %v883
        %v1009 = vunpack.c.l.b16 %v884
        %v1010 = vunpack.c.h.b16 %v884
        %v1011 = vunpack.c.l.b16 %v885
        %v1012 = vunpack.c.h.b16 %v885
        %v1013 = vunpack.c.l.b16 %v886
        %v1014 = vunpack.c.h.b16 %v886
        %v1015 = vunpack.c.l.b16 %v887
        %v1016 = vunpack.c.h.b16 %v887
        %v1017 = vunpack.c.l.b16 %v888
        %v1018 = vunpack.c.h.b16 %v888
        %v1019 = vunpack.c.l.b16 %v889
        %v1020 = vunpack.c.h.b16 %v889
        %v1021 = vunpack.c.l.b16 %v890
        %v1022 = vunpack.c.h.b16 %v890
        %v1023 = vunpack.c.l.b16 %v891
        %v1024 = vunpack.c.h.b16 %v891
        %v1025 = vunpack.c.l.b16 %v892
        %v1026 = vunpack.c.h.b16 %v892
        %v1027 = vunpack.c.l.b16 %v893
        %v1028 = vunpack.c.h.b16 %v893
        %v1029 = vunpack.c.l.b16 %v894
        %v1030 = vunpack.c.h.b16 %v894
        %v1031 = vunpack.c.l.b16 %v895
        %v1032 = vunpack.c.h.b16 %v895
        %v1033 = vunpack.c.l.b16 %v896
        %v1034 = vunpack.c.h.b16 %v896
        %v1035 = vunpack.c.l.b16 %v897
        %v1036 = vunpack.c.h.b16 %v897
        %v1037 = vunpack.c.l.b16 %v898
        %v1038 = vunpack.c.h.b16 %v898
        %v1039 = vunpack.c.l.b16 %v899
        %v1040 = vunpack.c.h.b16 %v899
        %v1041 = vunpack.c.l.b16 %v900
        %v1042 = vunpack.c.h.b16 %v900
        %v1043 = vunpack.c.l.b16 %v901
        %v1044 = vunpack.c.h.b16 %v901
        %v1045 = vunpack.c.l.b16 %v902
        %v1046 = vunpack.c.h.b16 %v902
        %v1047 = vpack.c.b16 %v953, %v951
        %v1048 = vpack.c.b16 %v954, %v952
        %v1049 = vpack.c.b16 %v957, %v955
        %v1050 = vpack.c.b16 %v958, %v956
        %v1051 = vpack.c.b16 %v961, %v959
        %v1052 = vpack.c.b16 %v962, %v960
        %v1053 = vpack.c.b16 %v965, %v963
        %v1054 = vpack.c.b16 %v966, %v964
        %v1055 = vpack.c.b16 %v969, %v967
        %v1056 = vpack.c.b16 %v970, %v968
        %v1057 = vpack.c.b16 %v973, %v971
        %v1058 = vpack.c.b16 %v974, %v972
        %v1059 = vpack.c.b16 %v977, %v975
        %v1060 = vpack.c.b16 %v978, %v976
        %v1061 = vpack.c.b16 %v981, %v979
        %v1062 = vpack.c.b16 %v982, %v980
        %v1063 = vpack.c.b16 %v985, %v983
        %v1064 = vpack.c.b16 %v986, %v984
        %v1065 = vpack.c.b16 %v989, %v987
        %v1066 = vpack.c.b16 %v990, %v988
        %v1067 = vpack.c.b16 %v993, %v991
        %v1068 = vpack.c.b16 %v994, %v992
        %v1069 = vpack.c.b16 %v997, %v995
        %v1070 = vpack.c.b16 %v998, %v996
        %v1071 = vpack.c.b16 %v1001, %v999
        %v1072 = vpack.c.b16 %v1002, %v1000
        %v1073 = vpack.c.b16 %v1005, %v1003
        %v1074 = vpack.c.b16 %v1006, %v1004
        %v1075 = vpack.c.b16 %v1009, %v1007
        %v1076 = vpack.c.b16 %v1010, %v1008
        %v1077 = vpack.c.b16 %v1013, %v1011
        %v1078 = vpack.c.b16 %v1014, %v1012
        %v1079 = vpack.c.b16 %v1017, %v1015
        %v1080 = vpack.c.b16 %v1018, %v1016
        %v1081 = vpack.c.b16 %v1021, %v1019
        %v1082 = vpack.c.b16 %v1022, %v1020
        %v1083 = vpack.c.b16 %v1025, %v1023
        %v1084 = vpack.c.b16 %v1026, %v1024
        %v1085 = vpack.c.b16 %v1029, %v1027
        %v1086 = vpack.c.b16 %v1030, %v1028
        %v1087 = vpack.c.b16 %v1033, %v1031
        %v1088 = vpack.c.b16 %v1034, %v1032
        %v1089 = vpack.c.b16 %v1037, %v1035
        %v1090 = vpack.c.b16 %v1038, %v1036
        %v1091 = vpack.c.b16 %v1041, %v1039
        %v1092 = vpack.c.b16 %v1042, %v1040
        %v1093 = vpack.c.b16 %v1045, %v1043
        %v1094 = vpack.c.b16 %v1046, %v1044
        %1143 = vmatprep.subr.bf16.mxu0 %v1048
        %1144 = vmatpush1.bf16.msra.mxu0 %v1047
        %1145 = vmatprep.subr.bf16.mxu0 %v1050
        %1146 = vmatpush1.bf16.msra.mxu0 %v1049
        %1147 = vmatprep.subr.bf16.mxu0 %v1052
        %1148 = vmatpush1.bf16.msra.mxu0 %v1051
        %1149 = vmatprep.subr.bf16.mxu0 %v1054
        %1150 = vmatpush1.bf16.msra.mxu0 %v1053
        %1151 = vmatprep.subr.bf16.mxu0 %v1056
        %1152 = vmatpush1.bf16.msra.mxu0 %v1055
        %1153 = vmatprep.subr.bf16.mxu0 %v1058
        %1154 = vmatpush1.bf16.msra.mxu0 %v1057
        %1155 = vmatprep.subr.bf16.mxu0 %v1060
        %1156 = vmatpush1.bf16.msra.mxu0 %v1059
        %1157 = vmatprep.subr.bf16.mxu0 %v1062
        %1158 = vmatpush1.bf16.msra.mxu0 %v1061
        %1159 = vmatprep.subr.bf16.mxu0 %v1064
        %1160 = vmatpush1.bf16.msra.mxu0 %v1063
        %1161 = vmatprep.subr.bf16.mxu0 %v1066
        %1162 = vmatpush1.bf16.msra.mxu0 %v1065
        %1163 = vmatprep.subr.bf16.mxu0 %v1068
        %1164 = vmatpush1.bf16.msra.mxu0 %v1067
        %1165 = vmatprep.subr.bf16.mxu0 %v1070
        %1166 = vmatpush1.bf16.msra.mxu0 %v1069
        %1167 = vmatprep.subr.bf16.mxu0 %v1072
        %1168 = vmatpush1.bf16.msra.mxu0 %v1071
        %1169 = vmatprep.subr.bf16.mxu0 %v1074
        %1170 = vmatpush1.bf16.msra.mxu0 %v1073
        %1171 = vmatprep.subr.bf16.mxu0 %v1076
        %1172 = vmatpush1.bf16.msra.mxu0 %v1075
        %1173 = vmatprep.subr.bf16.mxu0 %v1078
        %1174 = vmatpush1.bf16.msra.mxu0 %v1077
        %1175 = vmatprep.mubr.bf16.mxu0 %v701
        %1176 = vmatmul.mubr.bf16.gmra.mrb[0].mxu0 %v661
        %v1177 = vpop.f32.mrb[0].mxu0
        %v1178 = vadd.f32 0.0, %v1177
        %v1179 = vpop.f32.mrb[0].mxu0
        %v1180 = vpop.f32.mrb[0].mxu0
        %v1181 = vadd.f32 0.0, %v1180
        %v1182 = vpop.f32.mrb[0].mxu0
        %1183 = vmatprep.mubr.bf16.mxu0 %v702
        %1184 = vmatmul.mubr.bf16.gmra.mrb[0].mxu0 %v662
        %v1185 = vpop.f32.mrb[0].mxu0
        %v1186 = vadd.f32 0.0, %v1185
        %v1187 = vpop.f32.mrb[0].mxu0
        %v1188 = vadd.f32 0.0, %v1187
        %v1189 = vpop.f32.mrb[0].mxu0
        %v1190 = vadd.f32 0.0, %v1189
        %v1191 = vpop.f32.mrb[0].mxu0
        %v1192 = vadd.f32 0.0, %v1191
        %1193 = vmatprep.mubr.bf16.mxu0 %v703
        %1194 = vmatmul.mubr.bf16.gmra.mrb[0].mxu0 %v663
        %v1195 = vpop.f32.mrb[0].mxu0
        %v1196 = vadd.f32 0.0, %v1195
        %v1197 = vpop.f32.mrb[0].mxu0
        %v1198 = vadd.f32 0.0, %v1197
        %v1199 = vpop.f32.mrb[0].mxu0
        %v1200 = vadd.f32 0.0, %v1199
        %v1201 = vpop.f32.mrb[0].mxu0
        %v1202 = vadd.f32 0.0, %v1201
        %1203 = vmatprep.mubr.bf16.mxu0 %v704
        %1204 = vmatmul.mubr.bf16.gmra.mrb[0].mxu0 %v664
        %v1205 = vpop.f32.mrb[0].mxu0
        %v1206 = vadd.f32 0.0, %v1205
        %v1207 = vpop.f32.mrb[0].mxu0
        %v1208 = vadd.f32 0.0, %v1207
        %v1209 = vpop.f32.mrb[0].mxu0
        %v1210 = vadd.f32 0.0, %v1209
        %v1211 = vpop.f32.mrb[0].mxu0
        %v1212 = vadd.f32 0.0, %v1211
        %1213 = vmatprep.mubr.bf16.mxu0 %v705
        %1214 = vmatmul.mubr.bf16.gmra.mrb[0].mxu0 %v665
        %v1215 = vpop.f32.mrb[0].mxu0
        %v1216 = vadd.f32 0.0, %v1215
        %v1217 = vpop.f32.mrb[0].mxu0
        %v1218 = vadd.f32 0.0, %v1217
        %v1219 = vpop.f32.mrb[0].mxu0
        %v1220 = vadd.f32 0.0, %v1219
        %v1221 = vpop.f32.mrb[0].mxu0
        %v1222 = vadd.f32 0.0, %v1221
        %1223 = vmatprep.mubr.bf16.mxu0 %v706
        %1224 = vmatmul.mubr.bf16.gmra.mrb[0].mxu0 %v666
        %v1225 = vpop.f32.mrb[0].mxu0
        %v1226 = vadd.f32 0.0, %v1225
        %v1227 = vpop.f32.mrb[0].mxu0
        %v1228 = vadd.f32 0.0, %v1227
        %v1229 = vpop.f32.mrb[0].mxu0
        %v1230 = vadd.f32 0.0, %v1229
        %v1231 = vpop.f32.mrb[0].mxu0
        %v1232 = vadd.f32 0.0, %v1231
        %1233 = vmatprep.mubr.bf16.mxu0 %v707
        %1234 = vmatmul.mubr.bf16.gmra.mrb[0].mxu0 %v667
        %v1235 = vpop.f32.mrb[0].mxu0
        %v1236 = vadd.f32 0.0, %v1235
        %v1237 = vpop.f32.mrb[0].mxu0
        %v1238 = vadd.f32 0.0, %v1237
        %v1239 = vpop.f32.mrb[0].mxu0
        %v1240 = vadd.f32 0.0, %v1239
        %v1241 = vpop.f32.mrb[0].mxu0
        %v1242 = vadd.f32 0.0, %v1241
        %1243 = vmatprep.mubr.bf16.mxu0 %v708
        %1244 = vmatmul.mubr.bf16.gmra.mrb[0].mxu0 %v668
        %v1245 = vpop.f32.mrb[0].mxu0
        %v1246 = vadd.f32 0.0, %v1245
        %v1247 = vpop.f32.mrb[0].mxu0
        %v1248 = vadd.f32 0.0, %v1247
        %v1249 = vpop.f32.mrb[0].mxu0
        %v1250 = vadd.f32 0.0, %v1249
        %v1251 = vpop.f32.mrb[0].mxu0
        %v1252 = vadd.f32 0.0, %v1251
        %1253 = vmatprep.mubr.bf16.mxu0 %v709
        %1254 = vmatmul.mubr.bf16.gmra.mrb[0].mxu0 %v669
        %v1255 = vpop.f32.mrb[0].mxu0
        %v1256 = vadd.f32 0.0, %v1255
        %v1257 = vpop.f32.mrb[0].mxu0
        %v1258 = vadd.f32 0.0, %v1257
        %v1259 = vpop.f32.mrb[0].mxu0
        %v1260 = vadd.f32 0.0, %v1259
        %v1261 = vpop.f32.mrb[0].mxu0
        %v1262 = vadd.f32 0.0, %v1261
        %1263 = vmatprep.mubr.bf16.mxu0 %v848
        %1264 = vmatmul.mubr.bf16.gmra.mrb[0].mxu0 %v844
        %v1265 = vpop.f32.mrb[0].mxu0
        %v1266 = vadd.f32 0.0, %v1265
        %v1267 = vpop.f32.mrb[0].mxu0
        %v1268 = vpop.f32.mrb[0].mxu0
        %v1269 = vadd.f32 0.0, %v1268
        %v1270 = vpop.f32.mrb[0].mxu0
        %1271 = vdwg.mxu0
        %1272 = vmatprep.subr.bf16.mxu0 %v1080
        %1273 = vmatpush1.bf16.msra.mxu0 %v1079
        %1274 = vmatprep.subr.bf16.mxu0 %v1082
        %1275 = vmatpush1.bf16.msra.mxu0 %v1081
        %1276 = vmatprep.subr.bf16.mxu0 %v1084
        %1277 = vmatpush1.bf16.msra.mxu0 %v1083
        %1278 = vmatprep.subr.bf16.mxu0 %v1086
        %1279 = vmatpush1.bf16.msra.mxu0 %v1085
        %1280 = vmatprep.subr.bf16.mxu0 %v1088
        %1281 = vmatpush1.bf16.msra.mxu0 %v1087
        %1282 = vmatprep.subr.bf16.mxu0 %v1090
        %1283 = vmatpush1.bf16.msra.mxu0 %v1089
        %1284 = vmatprep.subr.bf16.mxu0 %v1092
        %1285 = vmatpush1.bf16.msra.mxu0 %v1091
        %1286 = vmatprep.subr.bf16.mxu0 %v1094
        %1287 = vmatpush1.bf16.msra.mxu0 %v1093
        %1288 = vmatprep.subr.bf16.mxu0 0
        %1289 = vmatpush1.bf16.msra.mxu0 0
        %1290 = vmatprep.subr.bf16.mxu0 0
        %1291 = vmatpush1.bf16.msra.mxu0 0
        %1292 = vmatprep.subr.bf16.mxu0 0
        %1293 = vmatpush1.bf16.msra.mxu0 0
        %1294 = vmatprep.subr.bf16.mxu0 0
        %1295 = vmatpush1.bf16.msra.mxu0 0
        %1296 = vmatprep.subr.bf16.mxu0 0
        %1297 = vmatpush1.bf16.msra.mxu0 0
        %1298 = vmatprep.subr.bf16.mxu0 0
        %1299 = vmatpush1.bf16.msra.mxu0 0
        %1300 = vmatprep.subr.bf16.mxu0 0
        %1301 = vmatpush1.bf16.msra.mxu0 0
        %1302 = vmatprep.subr.bf16.mxu0 0
        %1303 = vmatpush1.bf16.msra.mxu0 0
        %1304 = vmatprep.mubr.bf16.mxu0 0
        %1305 = vmatmul.mubr.bf16.gmra.mrb[0].mxu0 %v741
        %v1306 = vpop.f32.mrb[0].mxu0
        %v1307 = vadd.f32 %v1178, %v1306
        %v1308 = vpop.f32.mrb[0].mxu0
        %v1309 = vpop.f32.mrb[0].mxu0
        %v1310 = vadd.f32 %v1181, %v1309
        %v1311 = vpop.f32.mrb[0].mxu0
        %1312 = vmatprep.mubr.bf16.mxu0 0
        %1313 = vmatmul.mubr.bf16.gmra.mrb[0].mxu0 %v742
        %v1314 = vpop.f32.mrb[0].mxu0
        %v1315 = vadd.f32 %v1186, %v1314
        %v1316 = vpop.f32.mrb[0].mxu0
        %v1317 = vadd.f32 %v1188, %v1316
        %v1318 = vpop.f32.mrb[0].mxu0
        %v1319 = vadd.f32 %v1190, %v1318
        %v1320 = vpop.f32.mrb[0].mxu0
        %v1321 = vadd.f32 %v1192, %v1320
        %1322 = vmatprep.mubr.bf16.mxu0 0
        %1323 = vmatmul.mubr.bf16.gmra.mrb[0].mxu0 %v743
        %v1324 = vpop.f32.mrb[0].mxu0
        %v1325 = vadd.f32 %v1196, %v1324
        %v1326 = vpop.f32.mrb[0].mxu0
        %v1327 = vadd.f32 %v1198, %v1326
        %v1328 = vpop.f32.mrb[0].mxu0
        %v1329 = vadd.f32 %v1200, %v1328
        %v1330 = vpop.f32.mrb[0].mxu0
        %v1331 = vadd.f32 %v1202, %v1330
        %1332 = vmatprep.mubr.bf16.mxu0 0
        %1333 = vmatmul.mubr.bf16.gmra.mrb[0].mxu0 %v744
        %v1334 = vpop.f32.mrb[0].mxu0
        %v1335 = vadd.f32 %v1206, %v1334
        %v1336 = vpop.f32.mrb[0].mxu0
        %v1337 = vadd.f32 %v1208, %v1336
        %v1338 = vpop.f32.mrb[0].mxu0
        %v1339 = vadd.f32 %v1210, %v1338
        %v1340 = vpop.f32.mrb[0].mxu0
        %v1341 = vadd.f32 %v1212, %v1340
        %1342 = vmatprep.mubr.bf16.mxu0 0
        %1343 = vmatmul.mubr.bf16.gmra.mrb[0].mxu0 %v745
        %v1344 = vpop.f32.mrb[0].mxu0
        %v1345 = vadd.f32 %v1216, %v1344
        %v1346 = vpop.f32.mrb[0].mxu0
        %v1347 = vadd.f32 %v1218, %v1346
        %v1348 = vpop.f32.mrb[0].mxu0
        %v1349 = vadd.f32 %v1220, %v1348
        %v1350 = vpop.f32.mrb[0].mxu0
        %v1351 = vadd.f32 %v1222, %v1350
        %1352 = vmatprep.mubr.bf16.mxu0 0
        %1353 = vmatmul.mubr.bf16.gmra.mrb[0].mxu0 %v746
        %v1354 = vpop.f32.mrb[0].mxu0
        %v1355 = vadd.f32 %v1226, %v1354
        %v1356 = vpop.f32.mrb[0].mxu0
        %v1357 = vadd.f32 %v1228, %v1356
        %v1358 = vpop.f32.mrb[0].mxu0
        %v1359 = vadd.f32 %v1230, %v1358
        %v1360 = vpop.f32.mrb[0].mxu0
        %v1361 = vadd.f32 %v1232, %v1360
        %1362 = vmatprep.mubr.bf16.mxu0 0
        %1363 = vmatmul.mubr.bf16.gmra.mrb[0].mxu0 %v747
        %v1364 = vpop.f32.mrb[0].mxu0
        %v1365 = vadd.f32 %v1236, %v1364
        %v1366 = vpop.f32.mrb[0].mxu0
        %v1367 = vadd.f32 %v1238, %v1366
        %v1368 = vpop.f32.mrb[0].mxu0
        %v1369 = vadd.f32 %v1240, %v1368
        %v1370 = vpop.f32.mrb[0].mxu0
        %v1371 = vadd.f32 %v1242, %v1370
        %1372 = vmatprep.mubr.bf16.mxu0 0
        %1373 = vmatmul.mubr.bf16.gmra.mrb[0].mxu0 %v748
        %v1374 = vpop.f32.mrb[0].mxu0
        %v1375 = vadd.f32 %v1246, %v1374
        %v1376 = vpop.f32.mrb[0].mxu0
        %v1377 = vadd.f32 %v1248, %v1376
        %v1378 = vpop.f32.mrb[0].mxu0
        %v1379 = vadd.f32 %v1250, %v1378
        %v1380 = vpop.f32.mrb[0].mxu0
        %v1381 = vadd.f32 %v1252, %v1380
        %1382 = vmatprep.mubr.bf16.mxu0 0
        %1383 = vmatmul.mubr.bf16.gmra.mrb[0].mxu0 %v749
        %v1384 = vpop.f32.mrb[0].mxu0
        %v1385 = vadd.f32 %v1256, %v1384
        %v1386 = vpop.f32.mrb[0].mxu0
        %v1387 = vadd.f32 %v1258, %v1386
        %v1388 = vpop.f32.mrb[0].mxu0
        %v1389 = vadd.f32 %v1260, %v1388
        %v1390 = vpop.f32.mrb[0].mxu0
        %v1391 = vadd.f32 %v1262, %v1390
        %1392 = vmatprep.mubr.bf16.mxu0 0
        %1393 = vmatmul.mubr.bf16.gmra.mrb[0].mxu0 %v852
        %v1394 = vpop.f32.mrb[0].mxu0
        %v1395 = vadd.f32 %v1266, %v1394
        %v1396 = vpop.f32.mrb[0].mxu0
        %v1397 = vpop.f32.mrb[0].mxu0
        %v1398 = vadd.f32 %v1269, %v1397
        %v1399 = vpop.f32.mrb[0].mxu0
        %1400 = vdwg.mxu0
        %v1449 = vunpack.c.l.b16 %v760
        %v1450 = vunpack.c.h.b16 %v760
        %v1451 = vunpack.c.l.b16 %v761
        %v1452 = vunpack.c.h.b16 %v761
        %v1453 = vunpack.c.l.b16 %v762
        %v1454 = vunpack.c.h.b16 %v762
        %v1455 = vunpack.c.l.b16 %v763
        %v1456 = vunpack.c.h.b16 %v763
        %v1457 = vunpack.c.l.b16 %v764
        %v1458 = vunpack.c.h.b16 %v764
        %v1459 = vunpack.c.l.b16 %v765
        %v1460 = vunpack.c.h.b16 %v765
        %v1461 = vunpack.c.l.b16 %v766
        %v1462 = vunpack.c.h.b16 %v766
        %v1463 = vunpack.c.l.b16 %v767
        %v1464 = vunpack.c.h.b16 %v767
        %v1465 = vunpack.c.l.b16 %v768
        %v1466 = vunpack.c.h.b16 %v768
        %v1467 = vunpack.c.l.b16 %v769
        %v1468 = vunpack.c.h.b16 %v769
        %v1469 = vunpack.c.l.b16 %v770
        %v1470 = vunpack.c.h.b16 %v770
        %v1471 = vunpack.c.l.b16 %v771
        %v1472 = vunpack.c.h.b16 %v771
        %v1473 = vunpack.c.l.b16 %v772
        %v1474 = vunpack.c.h.b16 %v772
        %v1475 = vunpack.c.l.b16 %v773
        %v1476 = vunpack.c.h.b16 %v773
        %v1477 = vunpack.c.l.b16 %v774
        %v1478 = vunpack.c.h.b16 %v774
        %v1479 = vunpack.c.l.b16 %v775
        %v1480 = vunpack.c.h.b16 %v775
        %v1481 = vunpack.c.l.b16 %v776
        %v1482 = vunpack.c.h.b16 %v776
        %v1483 = vunpack.c.l.b16 %v777
        %v1484 = vunpack.c.h.b16 %v777
        %v1485 = vunpack.c.l.b16 %v778
        %v1486 = vunpack.c.h.b16 %v778
        %v1487 = vunpack.c.l.b16 %v779
        %v1488 = vunpack.c.h.b16 %v779
        %v1489 = vunpack.c.l.b16 %v780
        %v1490 = vunpack.c.h.b16 %v780
        %v1491 = vunpack.c.l.b16 %v781
        %v1492 = vunpack.c.h.b16 %v781
        %v1493 = vunpack.c.l.b16 %v782
        %v1494 = vunpack.c.h.b16 %v782
        %v1495 = vunpack.c.l.b16 %v783
        %v1496 = vunpack.c.h.b16 %v783
        %v1497 = vunpack.c.l.b16 %v784
        %v1498 = vunpack.c.h.b16 %v784
        %v1499 = vunpack.c.l.b16 %v785
        %v1500 = vunpack.c.h.b16 %v785
        %v1501 = vunpack.c.l.b16 %v786
        %v1502 = vunpack.c.h.b16 %v786
        %v1503 = vunpack.c.l.b16 %v787
        %v1504 = vunpack.c.h.b16 %v787
        %v1505 = vunpack.c.l.b16 %v788
        %v1506 = vunpack.c.h.b16 %v788
        %v1507 = vunpack.c.l.b16 %v789
        %v1508 = vunpack.c.h.b16 %v789
        %v1509 = vunpack.c.l.b16 %v790
        %v1510 = vunpack.c.h.b16 %v790
        %v1511 = vunpack.c.l.b16 %v791
        %v1512 = vunpack.c.h.b16 %v791
        %v1513 = vunpack.c.l.b16 %v792
        %v1514 = vunpack.c.h.b16 %v792
        %v1515 = vunpack.c.l.b16 %v793
        %v1516 = vunpack.c.h.b16 %v793
        %v1517 = vunpack.c.l.b16 %v794
        %v1518 = vunpack.c.h.b16 %v794
        %v1519 = vunpack.c.l.b16 %v795
        %v1520 = vunpack.c.h.b16 %v795
        %v1521 = vunpack.c.l.b16 %v796
        %v1522 = vunpack.c.h.b16 %v796
        %v1523 = vunpack.c.l.b16 %v797
        %v1524 = vunpack.c.h.b16 %v797
        %v1525 = vunpack.c.l.b16 %v798
        %v1526 = vunpack.c.h.b16 %v798
        %v1527 = vunpack.c.l.b16 %v799
        %v1528 = vunpack.c.h.b16 %v799
        %v1529 = vunpack.c.l.b16 %v800
        %v1530 = vunpack.c.h.b16 %v800
        %v1531 = vunpack.c.l.b16 %v801
        %v1532 = vunpack.c.h.b16 %v801
        %v1533 = vunpack.c.l.b16 %v802
        %v1534 = vunpack.c.h.b16 %v802
        %v1535 = vunpack.c.l.b16 %v803
        %v1536 = vunpack.c.h.b16 %v803
        %v1537 = vunpack.c.l.b16 %v804
        %v1538 = vunpack.c.h.b16 %v804
        %v1539 = vunpack.c.l.b16 %v805
        %v1540 = vunpack.c.h.b16 %v805
        %v1541 = vunpack.c.l.b16 %v806
        %v1542 = vunpack.c.h.b16 %v806
        %v1543 = vunpack.c.l.b16 %v807
        %v1544 = vunpack.c.h.b16 %v807
        %v1545 = vpack.c.b16 %v1451, %v1449
        %v1546 = vpack.c.b16 %v1452, %v1450
        %v1547 = vpack.c.b16 %v1455, %v1453
        %v1548 = vpack.c.b16 %v1456, %v1454
        %v1549 = vpack.c.b16 %v1459, %v1457
        %v1550 = vpack.c.b16 %v1460, %v1458
        %v1551 = vpack.c.b16 %v1463, %v1461
        %v1552 = vpack.c.b16 %v1464, %v1462
        %v1553 = vpack.c.b16 %v1467, %v1465
        %v1554 = vpack.c.b16 %v1468, %v1466
        %v1555 = vpack.c.b16 %v1471, %v1469
        %v1556 = vpack.c.b16 %v1472, %v1470
        %v1557 = vpack.c.b16 %v1475, %v1473
        %v1558 = vpack.c.b16 %v1476, %v1474
        %v1559 = vpack.c.b16 %v1479, %v1477
        %v1560 = vpack.c.b16 %v1480, %v1478
        %v1561 = vpack.c.b16 %v1483, %v1481
        %v1562 = vpack.c.b16 %v1484, %v1482
        %v1563 = vpack.c.b16 %v1487, %v1485
        %v1564 = vpack.c.b16 %v1488, %v1486
        %v1565 = vpack.c.b16 %v1491, %v1489
        %v1566 = vpack.c.b16 %v1492, %v1490
        %v1567 = vpack.c.b16 %v1495, %v1493
        %v1568 = vpack.c.b16 %v1496, %v1494
        %v1569 = vpack.c.b16 %v1499, %v1497
        %v1570 = vpack.c.b16 %v1500, %v1498
        %v1571 = vpack.c.b16 %v1503, %v1501
        %v1572 = vpack.c.b16 %v1504, %v1502
        %v1573 = vpack.c.b16 %v1507, %v1505
        %v1574 = vpack.c.b16 %v1508, %v1506
        %v1575 = vpack.c.b16 %v1511, %v1509
        %v1576 = vpack.c.b16 %v1512, %v1510
        %v1577 = vpack.c.b16 %v1515, %v1513
        %v1578 = vpack.c.b16 %v1516, %v1514
        %v1579 = vpack.c.b16 %v1519, %v1517
        %v1580 = vpack.c.b16 %v1520, %v1518
        %v1581 = vpack.c.b16 %v1523, %v1521
        %v1582 = vpack.c.b16 %v1524, %v1522
        %v1583 = vpack.c.b16 %v1527, %v1525
        %v1584 = vpack.c.b16 %v1528, %v1526
        %v1585 = vpack.c.b16 %v1531, %v1529
        %v1586 = vpack.c.b16 %v1532, %v1530
        %v1587 = vpack.c.b16 %v1535, %v1533
        %v1588 = vpack.c.b16 %v1536, %v1534
        %v1589 = vpack.c.b16 %v1539, %v1537
        %v1590 = vpack.c.b16 %v1540, %v1538
        %v1591 = vpack.c.b16 %v1543, %v1541
        %v1592 = vpack.c.b16 %v1544, %v1542
        %1641 = vmatprep.subr.bf16.mxu0 %v1546
        %1642 = vmatpush1.bf16.msra.mxu0 %v1545
        %1643 = vmatprep.subr.bf16.mxu0 %v1548
        %1644 = vmatpush1.bf16.msra.mxu0 %v1547
        %1645 = vmatprep.subr.bf16.mxu0 %v1550
        %1646 = vmatpush1.bf16.msra.mxu0 %v1549
        %1647 = vmatprep.subr.bf16.mxu0 %v1552
        %1648 = vmatpush1.bf16.msra.mxu0 %v1551
        %1649 = vmatprep.subr.bf16.mxu0 %v1554
        %1650 = vmatpush1.bf16.msra.mxu0 %v1553
        %1651 = vmatprep.subr.bf16.mxu0 %v1556
        %1652 = vmatpush1.bf16.msra.mxu0 %v1555
        %1653 = vmatprep.subr.bf16.mxu0 %v1558
        %1654 = vmatpush1.bf16.msra.mxu0 %v1557
        %1655 = vmatprep.subr.bf16.mxu0 %v1560
        %1656 = vmatpush1.bf16.msra.mxu0 %v1559
        %1657 = vmatprep.subr.bf16.mxu0 %v1562
        %1658 = vmatpush1.bf16.msra.mxu0 %v1561
        %1659 = vmatprep.subr.bf16.mxu0 %v1564
        %1660 = vmatpush1.bf16.msra.mxu0 %v1563
        %1661 = vmatprep.subr.bf16.mxu0 %v1566
        %1662 = vmatpush1.bf16.msra.mxu0 %v1565
        %1663 = vmatprep.subr.bf16.mxu0 %v1568
        %1664 = vmatpush1.bf16.msra.mxu0 %v1567
        %1665 = vmatprep.subr.bf16.mxu0 %v1570
        %1666 = vmatpush1.bf16.msra.mxu0 %v1569
        %1667 = vmatprep.subr.bf16.mxu0 %v1572
        %1668 = vmatpush1.bf16.msra.mxu0 %v1571
        %1669 = vmatprep.subr.bf16.mxu0 %v1574
        %1670 = vmatpush1.bf16.msra.mxu0 %v1573
        %1671 = vmatprep.subr.bf16.mxu0 %v1576
        %1672 = vmatpush1.bf16.msra.mxu0 %v1575
        %1673 = vmatprep.mubr.bf16.mxu0 %v700
        %1674 = vmatmul.mubr.bf16.gmra.mrb[0].mxu0 %v660
        %v1675 = vpop.f32.mrb[0].mxu0
        %v1676 = vadd.f32 %v1307, %v1675
        %v1677 = vpop.f32.mrb[0].mxu0
        %v1678 = vpop.f32.mrb[0].mxu0
        %v1679 = vadd.f32 %v1310, %v1678
        %v1680 = vpop.f32.mrb[0].mxu0
        %1681 = vmatprep.mubr.bf16.mxu0 %v701
        %1682 = vmatmul.mubr.bf16.gmra.mrb[0].mxu0 %v661
        %v1683 = vpop.f32.mrb[0].mxu0
        %v1684 = vadd.f32 %v1315, %v1683
        %v1685 = vpop.f32.mrb[0].mxu0
        %v1686 = vadd.f32 %v1317, %v1685
        %v1687 = vpop.f32.mrb[0].mxu0
        %v1688 = vadd.f32 %v1319, %v1687
        %v1689 = vpop.f32.mrb[0].mxu0
        %v1690 = vadd.f32 %v1321, %v1689
        %1691 = vmatprep.mubr.bf16.mxu0 %v702
        %1692 = vmatmul.mubr.bf16.gmra.mrb[0].mxu0 %v662
        %v1693 = vpop.f32.mrb[0].mxu0
        %v1694 = vadd.f32 %v1325, %v1693
        %v1695 = vpop.f32.mrb[0].mxu0
        %v1696 = vadd.f32 %v1327, %v1695
        %v1697 = vpop.f32.mrb[0].mxu0
        %v1698 = vadd.f32 %v1329, %v1697
        %v1699 = vpop.f32.mrb[0].mxu0
        %v1700 = vadd.f32 %v1331, %v1699
        %1701 = vmatprep.mubr.bf16.mxu0 %v703
        %1702 = vmatmul.mubr.bf16.gmra.mrb[0].mxu0 %v663
        %v1703 = vpop.f32.mrb[0].mxu0
        %v1704 = vadd.f32 %v1335, %v1703
        %v1705 = vpop.f32.mrb[0].mxu0
        %v1706 = vadd.f32 %v1337, %v1705
        %v1707 = vpop.f32.mrb[0].mxu0
        %v1708 = vadd.f32 %v1339, %v1707
        %v1709 = vpop.f32.mrb[0].mxu0
        %v1710 = vadd.f32 %v1341, %v1709
        %1711 = vmatprep.mubr.bf16.mxu0 %v704
        %1712 = vmatmul.mubr.bf16.gmra.mrb[0].mxu0 %v664
        %v1713 = vpop.f32.mrb[0].mxu0
        %v1714 = vadd.f32 %v1345, %v1713
        %v1715 = vpop.f32.mrb[0].mxu0
        %v1716 = vadd.f32 %v1347, %v1715
        %v1717 = vpop.f32.mrb[0].mxu0
        %v1718 = vadd.f32 %v1349, %v1717
        %v1719 = vpop.f32.mrb[0].mxu0
        %v1720 = vadd.f32 %v1351, %v1719
        %1721 = vmatprep.mubr.bf16.mxu0 %v705
        %1722 = vmatmul.mubr.bf16.gmra.mrb[0].mxu0 %v665
        %v1723 = vpop.f32.mrb[0].mxu0
        %v1724 = vadd.f32 %v1355, %v1723
        %v1725 = vpop.f32.mrb[0].mxu0
        %v1726 = vadd.f32 %v1357, %v1725
        %v1727 = vpop.f32.mrb[0].mxu0
        %v1728 = vadd.f32 %v1359, %v1727
        %v1729 = vpop.f32.mrb[0].mxu0
        %v1730 = vadd.f32 %v1361, %v1729
        %1731 = vmatprep.mubr.bf16.mxu0 %v706
        %1732 = vmatmul.mubr.bf16.gmra.mrb[0].mxu0 %v666
        %v1733 = vpop.f32.mrb[0].mxu0
        %v1734 = vadd.f32 %v1365, %v1733
        %v1735 = vpop.f32.mrb[0].mxu0
        %v1736 = vadd.f32 %v1367, %v1735
        %v1737 = vpop.f32.mrb[0].mxu0
        %v1738 = vadd.f32 %v1369, %v1737
        %v1739 = vpop.f32.mrb[0].mxu0
        %v1740 = vadd.f32 %v1371, %v1739
        %1741 = vmatprep.mubr.bf16.mxu0 %v707
        %1742 = vmatmul.mubr.bf16.gmra.mrb[0].mxu0 %v667
        %v1743 = vpop.f32.mrb[0].mxu0
        %v1744 = vadd.f32 %v1375, %v1743
        %v1745 = vpop.f32.mrb[0].mxu0
        %v1746 = vadd.f32 %v1377, %v1745
        %v1747 = vpop.f32.mrb[0].mxu0
        %v1748 = vadd.f32 %v1379, %v1747
        %v1749 = vpop.f32.mrb[0].mxu0
        %v1750 = vadd.f32 %v1381, %v1749
        %1751 = vmatprep.mubr.bf16.mxu0 %v708
        %1752 = vmatmul.mubr.bf16.gmra.mrb[0].mxu0 %v668
        %v1753 = vpop.f32.mrb[0].mxu0
        %v1754 = vadd.f32 %v1385, %v1753
        %v1755 = vpop.f32.mrb[0].mxu0
        %v1756 = vadd.f32 %v1387, %v1755
        %v1757 = vpop.f32.mrb[0].mxu0
        %v1758 = vadd.f32 %v1389, %v1757
        %v1759 = vpop.f32.mrb[0].mxu0
        %v1760 = vadd.f32 %v1391, %v1759
        %1761 = vmatprep.mubr.bf16.mxu0 %v709
        %1762 = vmatmul.mubr.bf16.gmra.mrb[0].mxu0 %v669
        %v1763 = vpop.f32.mrb[0].mxu0
        %v1764 = vadd.f32 %v1395, %v1763
        %v1765 = vpop.f32.mrb[0].mxu0
        %v1766 = vpop.f32.mrb[0].mxu0
        %v1767 = vadd.f32 %v1398, %v1766
        %v1768 = vpop.f32.mrb[0].mxu0
        %1769 = vdwg.mxu0
        %1770 = vmatprep.subr.bf16.mxu0 %v1578
        %1771 = vmatpush1.bf16.msra.mxu0 %v1577
        %1772 = vmatprep.subr.bf16.mxu0 %v1580
        %1773 = vmatpush1.bf16.msra.mxu0 %v1579
        %1774 = vmatprep.subr.bf16.mxu0 %v1582
        %1775 = vmatpush1.bf16.msra.mxu0 %v1581
        %1776 = vmatprep.subr.bf16.mxu0 %v1584
        %1777 = vmatpush1.bf16.msra.mxu0 %v1583
        %1778 = vmatprep.subr.bf16.mxu0 %v1586
        %1779 = vmatpush1.bf16.msra.mxu0 %v1585
        %1780 = vmatprep.subr.bf16.mxu0 %v1588
        %1781 = vmatpush1.bf16.msra.mxu0 %v1587
        %1782 = vmatprep.subr.bf16.mxu0 %v1590
        %1783 = vmatpush1.bf16.msra.mxu0 %v1589
        %1784 = vmatprep.subr.bf16.mxu0 %v1592
        %1785 = vmatpush1.bf16.msra.mxu0 %v1591
        %1786 = vmatprep.subr.bf16.mxu0 0
        %1787 = vmatpush1.bf16.msra.mxu0 0
        %1788 = vmatprep.subr.bf16.mxu0 0
        %1789 = vmatpush1.bf16.msra.mxu0 0
        %1790 = vmatprep.subr.bf16.mxu0 0
        %1791 = vmatpush1.bf16.msra.mxu0 0
        %1792 = vmatprep.subr.bf16.mxu0 0
        %1793 = vmatpush1.bf16.msra.mxu0 0
        %1794 = vmatprep.subr.bf16.mxu0 0
        %1795 = vmatpush1.bf16.msra.mxu0 0
        %1796 = vmatprep.subr.bf16.mxu0 0
        %1797 = vmatpush1.bf16.msra.mxu0 0
        %1798 = vmatprep.subr.bf16.mxu0 0
        %1799 = vmatpush1.bf16.msra.mxu0 0
        %1800 = vmatprep.subr.bf16.mxu0 0
        %1801 = vmatpush1.bf16.msra.mxu0 0
        %1802 = vmatprep.mubr.bf16.mxu0 0
        %1803 = vmatmul.mubr.bf16.gmra.mrb[0].mxu0 %v740
        %v1804 = vpop.f32.mrb[0].mxu0
        %v1805 = vadd.f32 %v1676, %v1804
        %v1806 = vpop.f32.mrb[0].mxu0
        %v1807 = vpop.f32.mrb[0].mxu0
        %v1808 = vadd.f32 %v1679, %v1807
        %v1809 = vpop.f32.mrb[0].mxu0
        %1810 = vmatprep.mubr.bf16.mxu0 0
        %1811 = vmatmul.mubr.bf16.gmra.mrb[0].mxu0 %v741
        %v1812 = vpop.f32.mrb[0].mxu0
        %v1813 = vadd.f32 %v1684, %v1812
        %v1814 = vpop.f32.mrb[0].mxu0
        %v1815 = vadd.f32 %v1686, %v1814
        %v1816 = vpop.f32.mrb[0].mxu0
        %v1817 = vadd.f32 %v1688, %v1816
        %v1818 = vpop.f32.mrb[0].mxu0
        %v1819 = vadd.f32 %v1690, %v1818
        %1820 = vmatprep.mubr.bf16.mxu0 0
        %1821 = vmatmul.mubr.bf16.gmra.mrb[0].mxu0 %v742
        %v1822 = vpop.f32.mrb[0].mxu0
        %v1823 = vadd.f32 %v1694, %v1822
        %v1824 = vpop.f32.mrb[0].mxu0
        %v1825 = vadd.f32 %v1696, %v1824
        %v1826 = vpop.f32.mrb[0].mxu0
        %v1827 = vadd.f32 %v1698, %v1826
        %v1828 = vpop.f32.mrb[0].mxu0
        %v1829 = vadd.f32 %v1700, %v1828
        %1830 = vmatprep.mubr.bf16.mxu0 0
        %1831 = vmatmul.mubr.bf16.gmra.mrb[0].mxu0 %v743
        %v1832 = vpop.f32.mrb[0].mxu0
        %v1833 = vadd.f32 %v1704, %v1832
        %v1834 = vpop.f32.mrb[0].mxu0
        %v1835 = vadd.f32 %v1706, %v1834
        %v1836 = vpop.f32.mrb[0].mxu0
        %v1837 = vadd.f32 %v1708, %v1836
        %v1838 = vpop.f32.mrb[0].mxu0
        %v1839 = vadd.f32 %v1710, %v1838
        %1840 = vmatprep.mubr.bf16.mxu0 0
        %1841 = vmatmul.mubr.bf16.gmra.mrb[0].mxu0 %v744
        %v1842 = vpop.f32.mrb[0].mxu0
        %v1843 = vadd.f32 %v1714, %v1842
        %v1844 = vpop.f32.mrb[0].mxu0
        %v1845 = vadd.f32 %v1716, %v1844
        %v1846 = vpop.f32.mrb[0].mxu0
        %v1847 = vadd.f32 %v1718, %v1846
        %v1848 = vpop.f32.mrb[0].mxu0
        %v1849 = vadd.f32 %v1720, %v1848
        %1850 = vmatprep.mubr.bf16.mxu0 0
        %1851 = vmatmul.mubr.bf16.gmra.mrb[0].mxu0 %v745
        %v1852 = vpop.f32.mrb[0].mxu0
        %v1853 = vadd.f32 %v1724, %v1852
        %v1854 = vpop.f32.mrb[0].mxu0
        %v1855 = vadd.f32 %v1726, %v1854
        %v1856 = vpop.f32.mrb[0].mxu0
        %v1857 = vadd.f32 %v1728, %v1856
        %v1858 = vpop.f32.mrb[0].mxu0
        %v1859 = vadd.f32 %v1730, %v1858
        %1860 = vmatprep.mubr.bf16.mxu0 0
        %1861 = vmatmul.mubr.bf16.gmra.mrb[0].mxu0 %v746
        %v1862 = vpop.f32.mrb[0].mxu0
        %v1863 = vadd.f32 %v1734, %v1862
        %v1864 = vpop.f32.mrb[0].mxu0
        %v1865 = vadd.f32 %v1736, %v1864
        %v1866 = vpop.f32.mrb[0].mxu0
        %v1867 = vadd.f32 %v1738, %v1866
        %v1868 = vpop.f32.mrb[0].mxu0
        %v1869 = vadd.f32 %v1740, %v1868
        %1870 = vmatprep.mubr.bf16.mxu0 0
        %1871 = vmatmul.mubr.bf16.gmra.mrb[0].mxu0 %v747
        %v1872 = vpop.f32.mrb[0].mxu0
        %v1873 = vadd.f32 %v1744, %v1872
        %v1874 = vpop.f32.mrb[0].mxu0
        %v1875 = vadd.f32 %v1746, %v1874
        %v1876 = vpop.f32.mrb[0].mxu0
        %v1877 = vadd.f32 %v1748, %v1876
        %v1878 = vpop.f32.mrb[0].mxu0
        %v1879 = vadd.f32 %v1750, %v1878
        %1880 = vmatprep.mubr.bf16.mxu0 0
        %1881 = vmatmul.mubr.bf16.gmra.mrb[0].mxu0 %v748
        %v1882 = vpop.f32.mrb[0].mxu0
        %v1883 = vadd.f32 %v1754, %v1882
        %v1884 = vpop.f32.mrb[0].mxu0
        %v1885 = vadd.f32 %v1756, %v1884
        %v1886 = vpop.f32.mrb[0].mxu0
        %v1887 = vadd.f32 %v1758, %v1886
        %v1888 = vpop.f32.mrb[0].mxu0
        %v1889 = vadd.f32 %v1760, %v1888
        %1890 = vmatprep.mubr.bf16.mxu0 0
        %1891 = vmatmul.mubr.bf16.gmra.mrb[0].mxu0 %v749
        %v1892 = vpop.f32.mrb[0].mxu0
        %v1893 = vadd.f32 %v1764, %v1892
        %v1894 = vpop.f32.mrb[0].mxu0
        %v1895 = vpop.f32.mrb[0].mxu0
        %v1896 = vadd.f32 %v1767, %v1895
        %v1897 = vpop.f32.mrb[0].mxu0
        %1898 = vdwg.mxu0
        %v1900 = vshrl.u32 %v291, 16
        %v1902 = vrot.slane %v1900, 4
        %v1903 = vshll.u32 %v291, 16
        %v1905 = vrot.slane %v1903, 5
        %v1906 = vor.u32 %v1902, %v1905
        %v1907 = vrot.slane %v1906, 4
        %v1909 = vshll.u32 %v292, 16
        %v1911 = vrot.slane %v1909, 5
        %v1912 = vsel %vm296, %v1907, %v1911
        %v1913 = vshrl.u32 %v292, 16
        %v1915 = vrot.slane %v1913, 4
        %v1916 = vor.u32 %v1915, %v1911
        %v1917 = vrot.slane %v1916, 4
        %v1919 = vshll.u32 %v293, 16
        %v1921 = vrot.slane %v1919, 5
        %v1922 = vsel %vm296, %v1917, %v1921
        %v1926 = vrot.slane %v291, 5
        %v1927 = vrot.slane %v1926, 4
        %v1928 = vrot.slane %v292, 5
        %v1929 = vsel %vm569, %v1927, %v1928
        %v1930 = vrot.slane %v1928, 4
        %v1931 = vrot.slane %v293, 5
        %v1932 = vsel %vm569, %v1930, %v1931
        %v1933 = vunpack.c.l.b16 %v291
        %v1934 = vunpack.c.l.b16 %v292
        %v1935 = vpack.c.b16 %v1934, %v1933
        %v1937 = vunpack.c.l.b16 %v1912
        %v1938 = vunpack.c.l.b16 %v1922
        %v1939 = vpack.c.b16 %v1938, %v1937
        %v1941 = vunpack.c.l.b16 %v1929
        %v1942 = vunpack.c.l.b16 %v1932
        %v1943 = vpack.c.b16 %v1942, %v1941
        %s1945 = scalar_lea.vmem [#allocation3], 768
        %v1946 = vld [vmem:[%s1945] sm:$0xff]
        %v1947 = vld [vmem:[%s1945 + $0x8] sm:$0xff]
        %v1948 = vld [vmem:[%s1945 + $0x10] sm:$0xff]
        %v1949 = vld [vmem:[%s1945 + $0x18] sm:$0xff]
        %v1950 = vld [vmem:[%s1945 + $0x20] sm:$0xff]
        %v1951 = vld [vmem:[%s1945 + $0x28] sm:$0xff]
        %v1952 = vld [vmem:[%s1945 + $0x30] sm:$0xff]
        %v1953 = vld [vmem:[%s1945 + $0x38] sm:$0xff]
        %v1954 = vld [vmem:[%s1945 + $0x40] sm:$0xff]
        %v1955 = vld [vmem:[%s1945 + $0x48] sm:$0xff]
        %v1956 = vld [vmem:[%s1945 + $0x50] sm:$0xff]
        %v1957 = vld [vmem:[%s1945 + $0x58] sm:$0xff]
        %v1958 = vld [vmem:[%s1945 + $0x60] sm:$0xff]
        %v1959 = vld [vmem:[%s1945 + $0x68] sm:$0xff]
        %v1960 = vld [vmem:[%s1945 + $0x70] sm:$0xff]
        %v1961 = vld [vmem:[%s1945 + $0x78] sm:$0xff]
        %v1962 = vld [vmem:[%s1945 + $0x80] sm:$0xff]
        %v1963 = vld [vmem:[%s1945 + $0x88] sm:$0xff]
        %v1964 = vld [vmem:[%s1945 + $0x90] sm:$0xff]
        %v1965 = vld [vmem:[%s1945 + $0x98] sm:$0xff]
        %v1966 = vld [vmem:[%s1945 + $0xa0] sm:$0xff]
        %v1967 = vld [vmem:[%s1945 + $0xa8] sm:$0xff]
        %v1968 = vld [vmem:[%s1945 + $0xb0] sm:$0xff]
        %v1969 = vld [vmem:[%s1945 + $0xb8] sm:$0xff]
        %v1970 = vld [vmem:[%s1945 + $0xc0] sm:$0xff]
        %v1971 = vld [vmem:[%s1945 + $0xc8] sm:$0xff]
        %v1972 = vld [vmem:[%s1945 + $0xd0] sm:$0xff]
        %v1973 = vld [vmem:[%s1945 + $0xd8] sm:$0xff]
        %v1974 = vld [vmem:[%s1945 + $0xe0] sm:$0xff]
        %v1975 = vld [vmem:[%s1945 + $0xe8] sm:$0xff]
        %v1976 = vld [vmem:[%s1945 + $0xf0] sm:$0xff]
        %v1977 = vld [vmem:[%s1945 + $0xf8] sm:$0xff]
        %v1978 = vld [vmem:[%s1945 + $0x100] sm:$0xff]
        %v1979 = vld [vmem:[%s1945 + $0x108] sm:$0xff]
        %v1980 = vld [vmem:[%s1945 + $0x110] sm:$0xff]
        %v1981 = vld [vmem:[%s1945 + $0x118] sm:$0xff]
        %v1982 = vld [vmem:[%s1945 + $0x120] sm:$0xff]
        %v1983 = vld [vmem:[%s1945 + $0x128] sm:$0xff]
        %v1984 = vld [vmem:[%s1945 + $0x130] sm:$0xff]
        %v1985 = vld [vmem:[%s1945 + $0x138] sm:$0xff]
        %v1986 = vld [vmem:[%s1945 + $0x140] sm:$0xff]
        %v1987 = vld [vmem:[%s1945 + $0x148] sm:$0xff]
        %v1988 = vld [vmem:[%s1945 + $0x150] sm:$0xff]
        %v1989 = vld [vmem:[%s1945 + $0x158] sm:$0xff]
        %v1990 = vld [vmem:[%s1945 + $0x160] sm:$0xff]
        %v1991 = vld [vmem:[%s1945 + $0x168] sm:$0xff]
        %v1992 = vld [vmem:[%s1945 + $0x170] sm:$0xff]
        %v1993 = vld [vmem:[%s1945 + $0x178] sm:$0xff]
        %v2042 = vunpack.c.l.b16 %v1946
        %v2043 = vunpack.c.h.b16 %v1946
        %v2044 = vunpack.c.l.b16 %v1947
        %v2045 = vunpack.c.h.b16 %v1947
        %v2046 = vunpack.c.l.b16 %v1948
        %v2047 = vunpack.c.h.b16 %v1948
        %v2048 = vunpack.c.l.b16 %v1949
        %v2049 = vunpack.c.h.b16 %v1949
        %v2050 = vunpack.c.l.b16 %v1950
        %v2051 = vunpack.c.h.b16 %v1950
        %v2052 = vunpack.c.l.b16 %v1951
        %v2053 = vunpack.c.h.b16 %v1951
        %v2054 = vunpack.c.l.b16 %v1952
        %v2055 = vunpack.c.h.b16 %v1952
        %v2056 = vunpack.c.l.b16 %v1953
        %v2057 = vunpack.c.h.b16 %v1953
        %v2058 = vunpack.c.l.b16 %v1954
        %v2059 = vunpack.c.h.b16 %v1954
        %v2060 = vunpack.c.l.b16 %v1955
        %v2061 = vunpack.c.h.b16 %v1955
        %v2062 = vunpack.c.l.b16 %v1956
        %v2063 = vunpack.c.h.b16 %v1956
        %v2064 = vunpack.c.l.b16 %v1957
        %v2065 = vunpack.c.h.b16 %v1957
        %v2066 = vunpack.c.l.b16 %v1958
        %v2067 = vunpack.c.h.b16 %v1958
        %v2068 = vunpack.c.l.b16 %v1959
        %v2069 = vunpack.c.h.b16 %v1959
        %v2070 = vunpack.c.l.b16 %v1960
        %v2071 = vunpack.c.h.b16 %v1960
        %v2072 = vunpack.c.l.b16 %v1961
        %v2073 = vunpack.c.h.b16 %v1961
        %v2074 = vunpack.c.l.b16 %v1962
        %v2075 = vunpack.c.h.b16 %v1962
        %v2076 = vunpack.c.l.b16 %v1963
        %v2077 = vunpack.c.h.b16 %v1963
        %v2078 = vunpack.c.l.b16 %v1964
        %v2079 = vunpack.c.h.b16 %v1964
        %v2080 = vunpack.c.l.b16 %v1965
        %v2081 = vunpack.c.h.b16 %v1965
        %v2082 = vunpack.c.l.b16 %v1966
        %v2083 = vunpack.c.h.b16 %v1966
        %v2084 = vunpack.c.l.b16 %v1967
        %v2085 = vunpack.c.h.b16 %v1967
        %v2086 = vunpack.c.l.b16 %v1968
        %v2087 = vunpack.c.h.b16 %v1968
        %v2088 = vunpack.c.l.b16 %v1969
        %v2089 = vunpack.c.h.b16 %v1969
        %v2090 = vunpack.c.l.b16 %v1970
        %v2091 = vunpack.c.h.b16 %v1970
        %v2092 = vunpack.c.l.b16 %v1971
        %v2093 = vunpack.c.h.b16 %v1971
        %v2094 = vunpack.c.l.b16 %v1972
        %v2095 = vunpack.c.h.b16 %v1972
        %v2096 = vunpack.c.l.b16 %v1973
        %v2097 = vunpack.c.h.b16 %v1973
        %v2098 = vunpack.c.l.b16 %v1974
        %v2099 = vunpack.c.h.b16 %v1974
        %v2100 = vunpack.c.l.b16 %v1975
        %v2101 = vunpack.c.h.b16 %v1975
        %v2102 = vunpack.c.l.b16 %v1976
        %v2103 = vunpack.c.h.b16 %v1976
        %v2104 = vunpack.c.l.b16 %v1977
        %v2105 = vunpack.c.h.b16 %v1977
        %v2106 = vunpack.c.l.b16 %v1978
        %v2107 = vunpack.c.h.b16 %v1978
        %v2108 = vunpack.c.l.b16 %v1979
        %v2109 = vunpack.c.h.b16 %v1979
        %v2110 = vunpack.c.l.b16 %v1980
        %v2111 = vunpack.c.h.b16 %v1980
        %v2112 = vunpack.c.l.b16 %v1981
        %v2113 = vunpack.c.h.b16 %v1981
        %v2114 = vunpack.c.l.b16 %v1982
        %v2115 = vunpack.c.h.b16 %v1982
        %v2116 = vunpack.c.l.b16 %v1983
        %v2117 = vunpack.c.h.b16 %v1983
        %v2118 = vunpack.c.l.b16 %v1984
        %v2119 = vunpack.c.h.b16 %v1984
        %v2120 = vunpack.c.l.b16 %v1985
        %v2121 = vunpack.c.h.b16 %v1985
        %v2122 = vunpack.c.l.b16 %v1986
        %v2123 = vunpack.c.h.b16 %v1986
        %v2124 = vunpack.c.l.b16 %v1987
        %v2125 = vunpack.c.h.b16 %v1987
        %v2126 = vunpack.c.l.b16 %v1988
        %v2127 = vunpack.c.h.b16 %v1988
        %v2128 = vunpack.c.l.b16 %v1989
        %v2129 = vunpack.c.h.b16 %v1989
        %v2130 = vunpack.c.l.b16 %v1990
        %v2131 = vunpack.c.h.b16 %v1990
        %v2132 = vunpack.c.l.b16 %v1991
        %v2133 = vunpack.c.h.b16 %v1991
        %v2134 = vunpack.c.l.b16 %v1992
        %v2135 = vunpack.c.h.b16 %v1992
        %v2136 = vunpack.c.l.b16 %v1993
        %v2137 = vunpack.c.h.b16 %v1993
        %v2138 = vpack.c.b16 %v2044, %v2042
        %v2139 = vpack.c.b16 %v2045, %v2043
        %v2140 = vpack.c.b16 %v2048, %v2046
        %v2141 = vpack.c.b16 %v2049, %v2047
        %v2142 = vpack.c.b16 %v2052, %v2050
        %v2143 = vpack.c.b16 %v2053, %v2051
        %v2144 = vpack.c.b16 %v2056, %v2054
        %v2145 = vpack.c.b16 %v2057, %v2055
        %v2146 = vpack.c.b16 %v2060, %v2058
        %v2147 = vpack.c.b16 %v2061, %v2059
        %v2148 = vpack.c.b16 %v2064, %v2062
        %v2149 = vpack.c.b16 %v2065, %v2063
        %v2150 = vpack.c.b16 %v2068, %v2066
        %v2151 = vpack.c.b16 %v2069, %v2067
        %v2152 = vpack.c.b16 %v2072, %v2070
        %v2153 = vpack.c.b16 %v2073, %v2071
        %v2154 = vpack.c.b16 %v2076, %v2074
        %v2155 = vpack.c.b16 %v2077, %v2075
        %v2156 = vpack.c.b16 %v2080, %v2078
        %v2157 = vpack.c.b16 %v2081, %v2079
        %v2158 = vpack.c.b16 %v2084, %v2082
        %v2159 = vpack.c.b16 %v2085, %v2083
        %v2160 = vpack.c.b16 %v2088, %v2086
        %v2161 = vpack.c.b16 %v2089, %v2087
        %v2162 = vpack.c.b16 %v2092, %v2090
        %v2163 = vpack.c.b16 %v2093, %v2091
        %v2164 = vpack.c.b16 %v2096, %v2094
        %v2165 = vpack.c.b16 %v2097, %v2095
        %v2166 = vpack.c.b16 %v2100, %v2098
        %v2167 = vpack.c.b16 %v2101, %v2099
        %v2168 = vpack.c.b16 %v2104, %v2102
        %v2169 = vpack.c.b16 %v2105, %v2103
        %v2170 = vpack.c.b16 %v2108, %v2106
        %v2171 = vpack.c.b16 %v2109, %v2107
        %v2172 = vpack.c.b16 %v2112, %v2110
        %v2173 = vpack.c.b16 %v2113, %v2111
        %v2174 = vpack.c.b16 %v2116, %v2114
        %v2175 = vpack.c.b16 %v2117, %v2115
        %v2176 = vpack.c.b16 %v2120, %v2118
        %v2177 = vpack.c.b16 %v2121, %v2119
        %v2178 = vpack.c.b16 %v2124, %v2122
        %v2179 = vpack.c.b16 %v2125, %v2123
        %v2180 = vpack.c.b16 %v2128, %v2126
        %v2181 = vpack.c.b16 %v2129, %v2127
        %v2182 = vpack.c.b16 %v2132, %v2130
        %v2183 = vpack.c.b16 %v2133, %v2131
        %v2184 = vpack.c.b16 %v2136, %v2134
        %v2185 = vpack.c.b16 %v2137, %v2135
        %2234 = vmatprep.subr.bf16.mxu0 %v2139
        %2235 = vmatpush1.bf16.msra.mxu0 %v2138
        %2236 = vmatprep.subr.bf16.mxu0 %v2141
        %2237 = vmatpush1.bf16.msra.mxu0 %v2140
        %2238 = vmatprep.subr.bf16.mxu0 %v2143
        %2239 = vmatpush1.bf16.msra.mxu0 %v2142
        %2240 = vmatprep.subr.bf16.mxu0 %v2145
        %2241 = vmatpush1.bf16.msra.mxu0 %v2144
        %2242 = vmatprep.subr.bf16.mxu0 %v2147
        %2243 = vmatpush1.bf16.msra.mxu0 %v2146
        %2244 = vmatprep.subr.bf16.mxu0 %v2149
        %2245 = vmatpush1.bf16.msra.mxu0 %v2148
        %2246 = vmatprep.subr.bf16.mxu0 %v2151
        %2247 = vmatpush1.bf16.msra.mxu0 %v2150
        %2248 = vmatprep.subr.bf16.mxu0 %v2153
        %2249 = vmatpush1.bf16.msra.mxu0 %v2152
        %2250 = vmatprep.subr.bf16.mxu0 %v2155
        %2251 = vmatpush1.bf16.msra.mxu0 %v2154
        %2252 = vmatprep.subr.bf16.mxu0 %v2157
        %2253 = vmatpush1.bf16.msra.mxu0 %v2156
        %2254 = vmatprep.subr.bf16.mxu0 %v2159
        %2255 = vmatpush1.bf16.msra.mxu0 %v2158
        %2256 = vmatprep.subr.bf16.mxu0 %v2161
        %2257 = vmatpush1.bf16.msra.mxu0 %v2160
        %2258 = vmatprep.subr.bf16.mxu0 %v2163
        %2259 = vmatpush1.bf16.msra.mxu0 %v2162
        %2260 = vmatprep.subr.bf16.mxu0 %v2165
        %2261 = vmatpush1.bf16.msra.mxu0 %v2164
        %2262 = vmatprep.subr.bf16.mxu0 %v2167
        %2263 = vmatpush1.bf16.msra.mxu0 %v2166
        %2264 = vmatprep.subr.bf16.mxu0 %v2169
        %2265 = vmatpush1.bf16.msra.mxu0 %v2168
        %2266 = vmatprep.mubr.bf16.mxu0 %v702
        %2267 = vmatmul.mubr.bf16.gmra.mrb[0].mxu0 %v662
        %v2268 = vpop.f32.mrb[0].mxu0
        %v2269 = vadd.f32 0.0, %v2268
        %v2270 = vpop.f32.mrb[0].mxu0
        %v2271 = vpop.f32.mrb[0].mxu0
        %v2272 = vadd.f32 0.0, %v2271
        %v2273 = vpop.f32.mrb[0].mxu0
        %2274 = vmatprep.mubr.bf16.mxu0 %v703
        %2275 = vmatmul.mubr.bf16.gmra.mrb[0].mxu0 %v663
        %v2276 = vpop.f32.mrb[0].mxu0
        %v2277 = vadd.f32 0.0, %v2276
        %v2278 = vpop.f32.mrb[0].mxu0
        %v2279 = vadd.f32 0.0, %v2278
        %v2280 = vpop.f32.mrb[0].mxu0
        %v2281 = vadd.f32 0.0, %v2280
        %v2282 = vpop.f32.mrb[0].mxu0
        %v2283 = vadd.f32 0.0, %v2282
        %2284 = vmatprep.mubr.bf16.mxu0 %v704
        %2285 = vmatmul.mubr.bf16.gmra.mrb[0].mxu0 %v664
        %v2286 = vpop.f32.mrb[0].mxu0
        %v2287 = vadd.f32 0.0, %v2286
        %v2288 = vpop.f32.mrb[0].mxu0
        %v2289 = vadd.f32 0.0, %v2288
        %v2290 = vpop.f32.mrb[0].mxu0
        %v2291 = vadd.f32 0.0, %v2290
        %v2292 = vpop.f32.mrb[0].mxu0
        %v2293 = vadd.f32 0.0, %v2292
        %2294 = vmatprep.mubr.bf16.mxu0 %v705
        %2295 = vmatmul.mubr.bf16.gmra.mrb[0].mxu0 %v665
        %v2296 = vpop.f32.mrb[0].mxu0
        %v2297 = vadd.f32 0.0, %v2296
        %v2298 = vpop.f32.mrb[0].mxu0
        %v2299 = vadd.f32 0.0, %v2298
        %v2300 = vpop.f32.mrb[0].mxu0
        %v2301 = vadd.f32 0.0, %v2300
        %v2302 = vpop.f32.mrb[0].mxu0
        %v2303 = vadd.f32 0.0, %v2302
        %2304 = vmatprep.mubr.bf16.mxu0 %v706
        %2305 = vmatmul.mubr.bf16.gmra.mrb[0].mxu0 %v666
        %v2306 = vpop.f32.mrb[0].mxu0
        %v2307 = vadd.f32 0.0, %v2306
        %v2308 = vpop.f32.mrb[0].mxu0
        %v2309 = vadd.f32 0.0, %v2308
        %v2310 = vpop.f32.mrb[0].mxu0
        %v2311 = vadd.f32 0.0, %v2310
        %v2312 = vpop.f32.mrb[0].mxu0
        %v2313 = vadd.f32 0.0, %v2312
        %2314 = vmatprep.mubr.bf16.mxu0 %v707
        %2315 = vmatmul.mubr.bf16.gmra.mrb[0].mxu0 %v667
        %v2316 = vpop.f32.mrb[0].mxu0
        %v2317 = vadd.f32 0.0, %v2316
        %v2318 = vpop.f32.mrb[0].mxu0
        %v2319 = vadd.f32 0.0, %v2318
        %v2320 = vpop.f32.mrb[0].mxu0
        %v2321 = vadd.f32 0.0, %v2320
        %v2322 = vpop.f32.mrb[0].mxu0
        %v2323 = vadd.f32 0.0, %v2322
        %2324 = vmatprep.mubr.bf16.mxu0 %v708
        %2325 = vmatmul.mubr.bf16.gmra.mrb[0].mxu0 %v668
        %v2326 = vpop.f32.mrb[0].mxu0
        %v2327 = vadd.f32 0.0, %v2326
        %v2328 = vpop.f32.mrb[0].mxu0
        %v2329 = vadd.f32 0.0, %v2328
        %v2330 = vpop.f32.mrb[0].mxu0
        %v2331 = vadd.f32 0.0, %v2330
        %v2332 = vpop.f32.mrb[0].mxu0
        %v2333 = vadd.f32 0.0, %v2332
        %2334 = vmatprep.mubr.bf16.mxu0 %v709
        %2335 = vmatmul.mubr.bf16.gmra.mrb[0].mxu0 %v669
        %v2336 = vpop.f32.mrb[0].mxu0
        %v2337 = vadd.f32 0.0, %v2336
        %v2338 = vpop.f32.mrb[0].mxu0
        %v2339 = vadd.f32 0.0, %v2338
        %v2340 = vpop.f32.mrb[0].mxu0
        %v2341 = vadd.f32 0.0, %v2340
        %v2342 = vpop.f32.mrb[0].mxu0
        %v2343 = vadd.f32 0.0, %v2342
        %2344 = vmatprep.mubr.bf16.mxu0 %v848
        %2345 = vmatmul.mubr.bf16.gmra.mrb[0].mxu0 %v844
        %v2346 = vpop.f32.mrb[0].mxu0
        %v2347 = vadd.f32 0.0, %v2346
        %v2348 = vpop.f32.mrb[0].mxu0
        %v2349 = vadd.f32 0.0, %v2348
        %v2350 = vpop.f32.mrb[0].mxu0
        %v2351 = vadd.f32 0.0, %v2350
        %v2352 = vpop.f32.mrb[0].mxu0
        %v2353 = vadd.f32 0.0, %v2352
        %2354 = vmatprep.mubr.bf16.mxu0 %v1939
        %2355 = vmatmul.mubr.bf16.gmra.mrb[0].mxu0 %v1935
        %v2356 = vpop.f32.mrb[0].mxu0
        %v2357 = vadd.f32 0.0, %v2356
        %v2358 = vpop.f32.mrb[0].mxu0
        %v2359 = vpop.f32.mrb[0].mxu0
        %v2360 = vadd.f32 0.0, %v2359
        %v2361 = vpop.f32.mrb[0].mxu0
        %2362 = vdwg.mxu0
        %2363 = vmatprep.subr.bf16.mxu0 %v2171
        %2364 = vmatpush1.bf16.msra.mxu0 %v2170
        %2365 = vmatprep.subr.bf16.mxu0 %v2173
        %2366 = vmatpush1.bf16.msra.mxu0 %v2172
        %2367 = vmatprep.subr.bf16.mxu0 %v2175
        %2368 = vmatpush1.bf16.msra.mxu0 %v2174
        %2369 = vmatprep.subr.bf16.mxu0 %v2177
        %2370 = vmatpush1.bf16.msra.mxu0 %v2176
        %2371 = vmatprep.subr.bf16.mxu0 %v2179
        %2372 = vmatpush1.bf16.msra.mxu0 %v2178
        %2373 = vmatprep.subr.bf16.mxu0 %v2181
        %2374 = vmatpush1.bf16.msra.mxu0 %v2180
        %2375 = vmatprep.subr.bf16.mxu0 %v2183
        %2376 = vmatpush1.bf16.msra.mxu0 %v2182
        %2377 = vmatprep.subr.bf16.mxu0 %v2185
        %2378 = vmatpush1.bf16.msra.mxu0 %v2184
        %2379 = vmatprep.subr.bf16.mxu0 0
        %2380 = vmatpush1.bf16.msra.mxu0 0
        %2381 = vmatprep.subr.bf16.mxu0 0
        %2382 = vmatpush1.bf16.msra.mxu0 0
        %2383 = vmatprep.subr.bf16.mxu0 0
        %2384 = vmatpush1.bf16.msra.mxu0 0
        %2385 = vmatprep.subr.bf16.mxu0 0
        %2386 = vmatpush1.bf16.msra.mxu0 0
        %2387 = vmatprep.subr.bf16.mxu0 0
        %2388 = vmatpush1.bf16.msra.mxu0 0
        %2389 = vmatprep.subr.bf16.mxu0 0
        %2390 = vmatpush1.bf16.msra.mxu0 0
        %2391 = vmatprep.subr.bf16.mxu0 0
        %2392 = vmatpush1.bf16.msra.mxu0 0
        %2393 = vmatprep.subr.bf16.mxu0 0
        %2394 = vmatpush1.bf16.msra.mxu0 0
        %2395 = vmatprep.mubr.bf16.mxu0 0
        %2396 = vmatmul.mubr.bf16.gmra.mrb[0].mxu0 %v742
        %v2397 = vpop.f32.mrb[0].mxu0
        %v2398 = vadd.f32 %v2269, %v2397
        %v2399 = vpop.f32.mrb[0].mxu0
        %v2400 = vpop.f32.mrb[0].mxu0
        %v2401 = vadd.f32 %v2272, %v2400
        %v2402 = vpop.f32.mrb[0].mxu0
        %2403 = vmatprep.mubr.bf16.mxu0 0
        %2404 = vmatmul.mubr.bf16.gmra.mrb[0].mxu0 %v743
        %v2405 = vpop.f32.mrb[0].mxu0
        %v2406 = vadd.f32 %v2277, %v2405
        %v2407 = vpop.f32.mrb[0].mxu0
        %v2408 = vadd.f32 %v2279, %v2407
        %v2409 = vpop.f32.mrb[0].mxu0
        %v2410 = vadd.f32 %v2281, %v2409
        %v2411 = vpop.f32.mrb[0].mxu0
        %v2412 = vadd.f32 %v2283, %v2411
        %2413 = vmatprep.mubr.bf16.mxu0 0
        %2414 = vmatmul.mubr.bf16.gmra.mrb[0].mxu0 %v744
        %v2415 = vpop.f32.mrb[0].mxu0
        %v2416 = vadd.f32 %v2287, %v2415
        %v2417 = vpop.f32.mrb[0].mxu0
        %v2418 = vadd.f32 %v2289, %v2417
        %v2419 = vpop.f32.mrb[0].mxu0
        %v2420 = vadd.f32 %v2291, %v2419
        %v2421 = vpop.f32.mrb[0].mxu0
        %v2422 = vadd.f32 %v2293, %v2421
        %2423 = vmatprep.mubr.bf16.mxu0 0
        %2424 = vmatmul.mubr.bf16.gmra.mrb[0].mxu0 %v745
        %v2425 = vpop.f32.mrb[0].mxu0
        %v2426 = vadd.f32 %v2297, %v2425
        %v2427 = vpop.f32.mrb[0].mxu0
        %v2428 = vadd.f32 %v2299, %v2427
        %v2429 = vpop.f32.mrb[0].mxu0
        %v2430 = vadd.f32 %v2301, %v2429
        %v2431 = vpop.f32.mrb[0].mxu0
        %v2432 = vadd.f32 %v2303, %v2431
        %2433 = vmatprep.mubr.bf16.mxu0 0
        %2434 = vmatmul.mubr.bf16.gmra.mrb[0].mxu0 %v746
        %v2435 = vpop.f32.mrb[0].mxu0
        %v2436 = vadd.f32 %v2307, %v2435
        %v2437 = vpop.f32.mrb[0].mxu0
        %v2438 = vadd.f32 %v2309, %v2437
        %v2439 = vpop.f32.mrb[0].mxu0
        %v2440 = vadd.f32 %v2311, %v2439
        %v2441 = vpop.f32.mrb[0].mxu0
        %v2442 = vadd.f32 %v2313, %v2441
        %2443 = vmatprep.mubr.bf16.mxu0 0
        %2444 = vmatmul.mubr.bf16.gmra.mrb[0].mxu0 %v747
        %v2445 = vpop.f32.mrb[0].mxu0
        %v2446 = vadd.f32 %v2317, %v2445
        %v2447 = vpop.f32.mrb[0].mxu0
        %v2448 = vadd.f32 %v2319, %v2447
        %v2449 = vpop.f32.mrb[0].mxu0
        %v2450 = vadd.f32 %v2321, %v2449
        %v2451 = vpop.f32.mrb[0].mxu0
        %v2452 = vadd.f32 %v2323, %v2451
        %2453 = vmatprep.mubr.bf16.mxu0 0
        %2454 = vmatmul.mubr.bf16.gmra.mrb[0].mxu0 %v748
        %v2455 = vpop.f32.mrb[0].mxu0
        %v2456 = vadd.f32 %v2327, %v2455
        %v2457 = vpop.f32.mrb[0].mxu0
        %v2458 = vadd.f32 %v2329, %v2457
        %v2459 = vpop.f32.mrb[0].mxu0
        %v2460 = vadd.f32 %v2331, %v2459
        %v2461 = vpop.f32.mrb[0].mxu0
        %v2462 = vadd.f32 %v2333, %v2461
        %2463 = vmatprep.mubr.bf16.mxu0 0
        %2464 = vmatmul.mubr.bf16.gmra.mrb[0].mxu0 %v749
        %v2465 = vpop.f32.mrb[0].mxu0
        %v2466 = vadd.f32 %v2337, %v2465
        %v2467 = vpop.f32.mrb[0].mxu0
        %v2468 = vadd.f32 %v2339, %v2467
        %v2469 = vpop.f32.mrb[0].mxu0
        %v2470 = vadd.f32 %v2341, %v2469
        %v2471 = vpop.f32.mrb[0].mxu0
        %v2472 = vadd.f32 %v2343, %v2471
        %2473 = vmatprep.mubr.bf16.mxu0 0
        %2474 = vmatmul.mubr.bf16.gmra.mrb[0].mxu0 %v852
        %v2475 = vpop.f32.mrb[0].mxu0
        %v2476 = vadd.f32 %v2347, %v2475
        %v2477 = vpop.f32.mrb[0].mxu0
        %v2478 = vadd.f32 %v2349, %v2477
        %v2479 = vpop.f32.mrb[0].mxu0
        %v2480 = vadd.f32 %v2351, %v2479
        %v2481 = vpop.f32.mrb[0].mxu0
        %v2482 = vadd.f32 %v2353, %v2481
        %2483 = vmatprep.mubr.bf16.mxu0 0
        %2484 = vmatmul.mubr.bf16.gmra.mrb[0].mxu0 %v1943
        %v2485 = vpop.f32.mrb[0].mxu0
        %v2486 = vadd.f32 %v2357, %v2485
        %v2487 = vpop.f32.mrb[0].mxu0
        %v2488 = vpop.f32.mrb[0].mxu0
        %v2489 = vadd.f32 %v2360, %v2488
        %v2490 = vpop.f32.mrb[0].mxu0
        %2491 = vdwg.mxu0
        %v2492 = vadd.f32 %v1805, %v2398
        %v2493 = vadd.f32 %v1808, %v2401
        %v2494 = vadd.f32 %v1813, %v2406
        %v2495 = vadd.f32 %v1815, %v2408
        %v2496 = vadd.f32 %v1817, %v2410
        %v2497 = vadd.f32 %v1819, %v2412
        %v2498 = vadd.f32 %v1823, %v2416
        %v2499 = vadd.f32 %v1825, %v2418
        %v2500 = vadd.f32 %v1827, %v2420
        %v2501 = vadd.f32 %v1829, %v2422
        %v2502 = vadd.f32 %v1833, %v2426
        %v2503 = vadd.f32 %v1835, %v2428
        %v2504 = vadd.f32 %v1837, %v2430
        %v2505 = vadd.f32 %v1839, %v2432
        %v2506 = vadd.f32 %v1843, %v2436
        %v2507 = vadd.f32 %v1845, %v2438
        %v2508 = vadd.f32 %v1847, %v2440
        %v2509 = vadd.f32 %v1849, %v2442
        %v2510 = vadd.f32 %v1853, %v2446
        %v2511 = vadd.f32 %v1855, %v2448
        %v2512 = vadd.f32 %v1857, %v2450
        %v2513 = vadd.f32 %v1859, %v2452
        %v2514 = vadd.f32 %v1863, %v2456
        %v2515 = vadd.f32 %v1865, %v2458
        %v2516 = vadd.f32 %v1867, %v2460
        %v2517 = vadd.f32 %v1869, %v2462
        %v2518 = vadd.f32 %v1873, %v2466
        %v2519 = vadd.f32 %v1875, %v2468
        %v2520 = vadd.f32 %v1877, %v2470
        %v2521 = vadd.f32 %v1879, %v2472
        %v2522 = vadd.f32 %v1883, %v2476
        %v2523 = vadd.f32 %v1885, %v2478
        %v2524 = vadd.f32 %v1887, %v2480
        %v2525 = vadd.f32 %v1889, %v2482
        %v2526 = vadd.f32 %v1893, %v2486
        %v2527 = vadd.f32 %v1896, %v2489
        %v2528 = vld [vmem:[%s2] sm:$0x3]
        %v2530 = vlaneseq
        %v2531 = vshrl.u32 %v2530, 7
        %v2532 = vsub.s32 0, %v2531
        %v2533 = vrot.slane %v2528, %v2532
        %v2534 = vlaneseq
        %v2535 = vshrl.u32 %v2534, 7
        %v2536 = vsub.s32 1, %v2535
        %v2537 = vrot.slane %v2528, %v2536
        %v2540 = vadd.f32 %v2492, %v2533
        %v2541 = vadd.f32 %v2493, %v2533
        %v2542 = vadd.f32 %v2494, %v2533
        %v2543 = vadd.f32 %v2495, %v2537
        %v2544 = vadd.f32 %v2496, %v2533
        %v2545 = vadd.f32 %v2497, %v2537
        %v2546 = vadd.f32 %v2498, %v2533
        %v2547 = vadd.f32 %v2499, %v2537
        %v2548 = vadd.f32 %v2500, %v2533
        %v2549 = vadd.f32 %v2501, %v2537
        %v2550 = vadd.f32 %v2502, %v2533
        %v2551 = vadd.f32 %v2503, %v2537
        %v2552 = vadd.f32 %v2504, %v2533
        %v2553 = vadd.f32 %v2505, %v2537
        %v2554 = vadd.f32 %v2506, %v2533
        %v2555 = vadd.f32 %v2507, %v2537
        %v2556 = vadd.f32 %v2508, %v2533
        %v2557 = vadd.f32 %v2509, %v2537
        %v2558 = vadd.f32 %v2510, %v2533
        %v2559 = vadd.f32 %v2511, %v2537
        %v2560 = vadd.f32 %v2512, %v2533
        %v2561 = vadd.f32 %v2513, %v2537
        %v2562 = vadd.f32 %v2514, %v2533
        %v2563 = vadd.f32 %v2515, %v2537
        %v2564 = vadd.f32 %v2516, %v2533
        %v2565 = vadd.f32 %v2517, %v2537
        %v2566 = vadd.f32 %v2518, %v2533
        %v2567 = vadd.f32 %v2519, %v2537
        %v2568 = vadd.f32 %v2520, %v2533
        %v2569 = vadd.f32 %v2521, %v2537
        %v2570 = vadd.f32 %v2522, %v2533
        %v2571 = vadd.f32 %v2523, %v2537
        %v2572 = vadd.f32 %v2524, %v2533
        %v2573 = vadd.f32 %v2525, %v2537
        %v2574 = vadd.f32 %v2526, %v2533
        %v2575 = vadd.f32 %v2527, %v2533
        %v2576 = vmax.f32 %v2540, 0.0
        %v2577 = vmax.f32 %v2541, 0.0
        %v2578 = vmax.f32 %v2542, 0.0
        %v2579 = vmax.f32 %v2544, 0.0
        %v2580 = vmax.f32 %v2546, 0.0
        %v2581 = vmax.f32 %v2548, 0.0
        %v2582 = vmax.f32 %v2550, 0.0
        %v2583 = vmax.f32 %v2552, 0.0
        %v2584 = vmax.f32 %v2554, 0.0
        %v2585 = vmax.f32 %v2556, 0.0
        %v2586 = vmax.f32 %v2558, 0.0
        %v2587 = vmax.f32 %v2560, 0.0
        %v2588 = vmax.f32 %v2562, 0.0
        %v2589 = vmax.f32 %v2564, 0.0
        %v2590 = vmax.f32 %v2566, 0.0
        %v2591 = vmax.f32 %v2568, 0.0
        %v2592 = vmax.f32 %v2570, 0.0
        %v2593 = vmax.f32 %v2572, 0.0
        %v2594 = vmax.f32 %v2574, 0.0
        %v2595 = vmax.f32 %v2575, 0.0
        %vm2596 = vcmask 1040384
        %vm2597 = vsmask.f32 256
        %vm2598 = vmand %vm2596, %vm2597
        %v2599 = vld [vmem:[#allocation2] sm:$0x1]
        %v2600 = vsel %vm2598, 0, %v2599
        %2601 = vst [vmem:[#allocation2] sm:$0x1] %v2600
        %v2602 = vld [vmem:[#allocation2 + $0xc] sm:$0x1]
        %v2603 = vsel %vm2598, 0, %v2602
        %2604 = vst [vmem:[#allocation2 + $0xc] sm:$0x1] %v2603
        %v2605 = vld [vmem:[#allocation2 + $0x18] sm:$0x1]
        %v2606 = vsel %vm2598, 0, %v2605
        %2607 = vst [vmem:[#allocation2 + $0x18] sm:$0x1] %v2606
        %v2608 = vld [vmem:[#allocation2 + $0x24] sm:$0x1]
        %v2609 = vsel %vm2598, 0, %v2608
        %2610 = vst [vmem:[#allocation2 + $0x24] sm:$0x1] %v2609
        %v2611 = vld [vmem:[#allocation2 + $0x30] sm:$0x1]
        %v2612 = vsel %vm2598, 0, %v2611
        %2613 = vst [vmem:[#allocation2 + $0x30] sm:$0x1] %v2612
        %v2614 = vld [vmem:[#allocation2 + $0x3c] sm:$0x1]
        %v2615 = vsel %vm2598, 0, %v2614
        %2616 = vst [vmem:[#allocation2 + $0x3c] sm:$0x1] %v2615
        %v2617 = vld [vmem:[#allocation2 + $0x48] sm:$0x1]
        %v2618 = vsel %vm2598, 0, %v2617
        %2619 = vst [vmem:[#allocation2 + $0x48] sm:$0x1] %v2618
        %v2620 = vld [vmem:[#allocation2 + $0x54] sm:$0x1]
        %v2621 = vsel %vm2598, 0, %v2620
        %2622 = vst [vmem:[#allocation2 + $0x54] sm:$0x1] %v2621
        %v2623 = vld [vmem:[#allocation2 + $0x60] sm:$0x1]
        %v2624 = vsel %vm2598, 0, %v2623
        %2625 = vst [vmem:[#allocation2 + $0x60] sm:$0x1] %v2624
        %v2626 = vld [vmem:[#allocation2 + $0x6c] sm:$0x1]
        %v2627 = vsel %vm2598, 0, %v2626
        %2628 = vst [vmem:[#allocation2 + $0x6c] sm:$0x1] %v2627
        %vm2629 = vsmask.f32 7938
        %vm2630 = vmand %vm2596, %vm2629
        %v2631 = vld [vmem:[#allocation2 + $0x8] sm:$0x1]
        %v2632 = vsel %vm2630, 0, %v2631
        %2633 = vst [vmem:[#allocation2 + $0x8] sm:$0x1] %v2632
        %v2634 = vld [vmem:[#allocation2 + $0x14] sm:$0x1]
        %v2635 = vsel %vm2630, 0, %v2634
        %2636 = vst [vmem:[#allocation2 + $0x14] sm:$0x1] %v2635
        %v2637 = vld [vmem:[#allocation2 + $0x20] sm:$0x1]
        %v2638 = vsel %vm2630, 0, %v2637
        %2639 = vst [vmem:[#allocation2 + $0x20] sm:$0x1] %v2638
        %v2640 = vld [vmem:[#allocation2 + $0x2c] sm:$0x1]
        %v2641 = vsel %vm2630, 0, %v2640
        %2642 = vst [vmem:[#allocation2 + $0x2c] sm:$0x1] %v2641
        %v2643 = vld [vmem:[#allocation2 + $0x38] sm:$0x1]
        %v2644 = vsel %vm2630, 0, %v2643
        %2645 = vst [vmem:[#allocation2 + $0x38] sm:$0x1] %v2644
        %v2646 = vld [vmem:[#allocation2 + $0x44] sm:$0x1]
        %v2647 = vsel %vm2630, 0, %v2646
        %2648 = vst [vmem:[#allocation2 + $0x44] sm:$0x1] %v2647
        %v2649 = vld [vmem:[#allocation2 + $0x50] sm:$0x1]
        %v2650 = vsel %vm2630, 0, %v2649
        %2651 = vst [vmem:[#allocation2 + $0x50] sm:$0x1] %v2650
        %v2652 = vld [vmem:[#allocation2 + $0x5c] sm:$0x1]
        %v2653 = vsel %vm2630, 0, %v2652
        %2654 = vst [vmem:[#allocation2 + $0x5c] sm:$0x1] %v2653
        %v2655 = vld [vmem:[#allocation2 + $0x68] sm:$0x1]
        %v2656 = vsel %vm2630, 0, %v2655
        %2657 = vst [vmem:[#allocation2 + $0x68] sm:$0x1] %v2656
        %v2658 = vld [vmem:[#allocation2 + $0x74] sm:$0x1]
        %v2659 = vsel %vm2630, 0, %v2658
        %2660 = vst [vmem:[#allocation2 + $0x74] sm:$0x1] %v2659
        %v2661 = vpack.c.bf16 %v2577, %v2576
        %v2662 = vpack.c.bf16 %v2579, %v2578
        %v2663 = vpack.c.bf16 %v2581, %v2580
        %v2664 = vpack.c.bf16 %v2583, %v2582
        %v2665 = vpack.c.bf16 %v2585, %v2584
        %v2666 = vpack.c.bf16 %v2587, %v2586
        %v2667 = vpack.c.bf16 %v2589, %v2588
        %v2668 = vpack.c.bf16 %v2591, %v2590
        %v2669 = vpack.c.bf16 %v2593, %v2592
        %v2670 = vpack.c.bf16 %v2595, %v2594
        %v2681 = vunpack.c.l.b16 %v2661
        %v2682 = vunpack.c.h.b16 %v2661
        %v2683 = vunpack.c.l.b16 %v2662
        %v2684 = vunpack.c.h.b16 %v2662
        %v2685 = vunpack.c.l.b16 %v2663
        %v2686 = vunpack.c.h.b16 %v2663
        %v2687 = vunpack.c.l.b16 %v2664
        %v2688 = vunpack.c.h.b16 %v2664
        %v2689 = vunpack.c.l.b16 %v2665
        %v2690 = vunpack.c.h.b16 %v2665
        %v2691 = vunpack.c.l.b16 %v2666
        %v2692 = vunpack.c.h.b16 %v2666
        %v2693 = vunpack.c.l.b16 %v2667
        %v2694 = vunpack.c.h.b16 %v2667
        %v2695 = vunpack.c.l.b16 %v2668
        %v2696 = vunpack.c.h.b16 %v2668
        %v2697 = vunpack.c.l.b16 %v2669
        %v2698 = vunpack.c.h.b16 %v2669
        %v2699 = vunpack.c.l.b16 %v2670
        %v2700 = vunpack.c.h.b16 %v2670
        %v2701 = vpack.c.b16 %v2681, %v2681
        %v2702 = vpack.c.b16 %v2682, %v2682
        %v2703 = vpack.c.b16 %v2683, %v2683
        %v2704 = vpack.c.b16 %v2684, %v2684
        %v2705 = vpack.c.b16 %v2685, %v2685
        %v2706 = vpack.c.b16 %v2686, %v2686
        %v2707 = vpack.c.b16 %v2687, %v2687
        %v2708 = vpack.c.b16 %v2688, %v2688
        %v2709 = vpack.c.b16 %v2689, %v2689
        %v2710 = vpack.c.b16 %v2690, %v2690
        %v2711 = vpack.c.b16 %v2691, %v2691
        %v2712 = vpack.c.b16 %v2692, %v2692
        %v2713 = vpack.c.b16 %v2693, %v2693
        %v2714 = vpack.c.b16 %v2694, %v2694
        %v2715 = vpack.c.b16 %v2695, %v2695
        %v2716 = vpack.c.b16 %v2696, %v2696
        %v2717 = vpack.c.b16 %v2697, %v2697
        %v2718 = vpack.c.b16 %v2698, %v2698
        %v2719 = vpack.c.b16 %v2699, %v2699
        %v2720 = vpack.c.b16 %v2700, %v2700
        %vm2721 = vsmask.f32 4368
        %vm2722 = vmor %vm2597, %vm2721
        %v2724 = vshrl.u32 %v2701, 16
        %v2726 = vrot.slane %v2724, 7
        %v2727 = vshll.u32 %v2701, 16
        %v2729 = vor.u32 %v2726, %v2727
        %v2730 = vrot.slane %v2726, 4
        %v2732 = vshrl.u32 %v2702, 16
        %v2734 = vrot.slane %v2732, 7
        %v2735 = vshll.u32 %v2702, 16
        %v2737 = vor.u32 %v2734, %v2735
        %v2738 = vsel %vm2722, %v2730, %v2737
        %v2739 = vrot.slane %v2734, 4
        %v2741 = vshrl.u32 %v2703, 16
        %v2743 = vrot.slane %v2741, 7
        %v2744 = vshll.u32 %v2703, 16
        %v2746 = vor.u32 %v2743, %v2744
        %v2747 = vrot.slane %v2743, 4
        %v2749 = vshrl.u32 %v2704, 16
        %v2751 = vrot.slane %v2749, 7
        %v2752 = vshll.u32 %v2704, 16
        %v2754 = vor.u32 %v2751, %v2752
        %v2755 = vsel %vm2722, %v2747, %v2754
        %v2756 = vrot.slane %v2751, 4
        %v2758 = vshrl.u32 %v2705, 16
        %v2760 = vrot.slane %v2758, 7
        %v2761 = vshll.u32 %v2705, 16
        %v2763 = vor.u32 %v2760, %v2761
        %v2764 = vrot.slane %v2760, 4
        %v2766 = vshrl.u32 %v2706, 16
        %v2768 = vrot.slane %v2766, 7
        %v2769 = vshll.u32 %v2706, 16
        %v2771 = vor.u32 %v2768, %v2769
        %v2772 = vsel %vm2722, %v2764, %v2771
        %v2773 = vrot.slane %v2768, 4
        %v2775 = vshrl.u32 %v2707, 16
        %v2777 = vrot.slane %v2775, 7
        %v2778 = vshll.u32 %v2707, 16
        %v2780 = vor.u32 %v2777, %v2778
        %v2781 = vrot.slane %v2777, 4
        %v2783 = vshrl.u32 %v2708, 16
        %v2785 = vrot.slane %v2783, 7
        %v2786 = vshll.u32 %v2708, 16
        %v2788 = vor.u32 %v2785, %v2786
        %v2789 = vsel %vm2722, %v2781, %v2788
        %v2790 = vrot.slane %v2785, 4
        %v2792 = vshrl.u32 %v2709, 16
        %v2794 = vrot.slane %v2792, 7
        %v2795 = vshll.u32 %v2709, 16
        %v2797 = vor.u32 %v2794, %v2795
        %v2798 = vrot.slane %v2794, 4
        %v2800 = vshrl.u32 %v2710, 16
        %v2802 = vrot.slane %v2800, 7
        %v2803 = vshll.u32 %v2710, 16
        %v2805 = vor.u32 %v2802, %v2803
        %v2806 = vsel %vm2722, %v2798, %v2805
        %v2807 = vrot.slane %v2802, 4
        %v2809 = vshrl.u32 %v2711, 16
        %v2811 = vrot.slane %v2809, 7
        %v2812 = vshll.u32 %v2711, 16
        %v2814 = vor.u32 %v2811, %v2812
        %v2815 = vrot.slane %v2811, 4
        %v2817 = vshrl.u32 %v2712, 16
        %v2819 = vrot.slane %v2817, 7
        %v2820 = vshll.u32 %v2712, 16
        %v2822 = vor.u32 %v2819, %v2820
        %v2823 = vsel %vm2722, %v2815, %v2822
        %v2824 = vrot.slane %v2819, 4
        %v2826 = vshrl.u32 %v2713, 16
        %v2828 = vrot.slane %v2826, 7
        %v2829 = vshll.u32 %v2713, 16
        %v2831 = vor.u32 %v2828, %v2829
        %v2832 = vrot.slane %v2828, 4
        %v2834 = vshrl.u32 %v2714, 16
        %v2836 = vrot.slane %v2834, 7
        %v2837 = vshll.u32 %v2714, 16
        %v2839 = vor.u32 %v2836, %v2837
        %v2840 = vsel %vm2722, %v2832, %v2839
        %v2841 = vrot.slane %v2836, 4
        %v2843 = vshrl.u32 %v2715, 16
        %v2845 = vrot.slane %v2843, 7
        %v2846 = vshll.u32 %v2715, 16
        %v2848 = vor.u32 %v2845, %v2846
        %v2849 = vrot.slane %v2845, 4
        %v2851 = vshrl.u32 %v2716, 16
        %v2853 = vrot.slane %v2851, 7
        %v2854 = vshll.u32 %v2716, 16
        %v2856 = vor.u32 %v2853, %v2854
        %v2857 = vsel %vm2722, %v2849, %v2856
        %v2858 = vrot.slane %v2853, 4
        %v2860 = vshrl.u32 %v2717, 16
        %v2862 = vrot.slane %v2860, 7
        %v2863 = vshll.u32 %v2717, 16
        %v2865 = vor.u32 %v2862, %v2863
        %v2866 = vrot.slane %v2862, 4
        %v2868 = vshrl.u32 %v2718, 16
        %v2870 = vrot.slane %v2868, 7
        %v2871 = vshll.u32 %v2718, 16
        %v2873 = vor.u32 %v2870, %v2871
        %v2874 = vsel %vm2722, %v2866, %v2873
        %v2875 = vrot.slane %v2870, 4
        %v2877 = vshrl.u32 %v2719, 16
        %v2879 = vrot.slane %v2877, 7
        %v2880 = vshll.u32 %v2719, 16
        %v2882 = vor.u32 %v2879, %v2880
        %v2883 = vrot.slane %v2879, 4
        %v2885 = vshrl.u32 %v2720, 16
        %v2887 = vrot.slane %v2885, 7
        %v2888 = vshll.u32 %v2720, 16
        %v2890 = vor.u32 %v2887, %v2888
        %v2891 = vsel %vm2722, %v2883, %v2890
        %v2892 = vrot.slane %v2887, 4
        %vm2923 = vcmask 1043456
        %vm2924 = vmand %vm2923, %vm2629
        %v2925 = vld [vmem:[#allocation2] sm:$0xf]
        %v2926 = vsel %vm2924, %v2729, %v2925
        %2927 = vst [vmem:[#allocation2] sm:$0xf] %v2926
        %2928 = vst [vmem:[#allocation2 + $0x4] sm:$0xf] %v2738
        %v2929 = vld [vmem:[#allocation2 + $0x8] sm:$0x1]
        %v2930 = vsel %vm2598, %v2739, %v2929
        %2931 = vst [vmem:[#allocation2 + $0x8] sm:$0x1] %v2930
        %v2932 = vld [vmem:[#allocation2 + $0xc] sm:$0xf]
        %v2933 = vsel %vm2924, %v2746, %v2932
        %2934 = vst [vmem:[#allocation2 + $0xc] sm:$0xf] %v2933
        %2935 = vst [vmem:[#allocation2 + $0x10] sm:$0xf] %v2755
        %v2936 = vld [vmem:[#allocation2 + $0x14] sm:$0x1]
        %v2937 = vsel %vm2598, %v2756, %v2936
        %2938 = vst [vmem:[#allocation2 + $0x14] sm:$0x1] %v2937
        %v2939 = vld [vmem:[#allocation2 + $0x18] sm:$0xf]
        %v2940 = vsel %vm2924, %v2763, %v2939
        %2941 = vst [vmem:[#allocation2 + $0x18] sm:$0xf] %v2940
        %2942 = vst [vmem:[#allocation2 + $0x1c] sm:$0xf] %v2772
        %v2943 = vld [vmem:[#allocation2 + $0x20] sm:$0x1]
        %v2944 = vsel %vm2598, %v2773, %v2943
        %2945 = vst [vmem:[#allocation2 + $0x20] sm:$0x1] %v2944
        %v2946 = vld [vmem:[#allocation2 + $0x24] sm:$0xf]
        %v2947 = vsel %vm2924, %v2780, %v2946
        %2948 = vst [vmem:[#allocation2 + $0x24] sm:$0xf] %v2947
        %2949 = vst [vmem:[#allocation2 + $0x28] sm:$0xf] %v2789
        %v2950 = vld [vmem:[#allocation2 + $0x2c] sm:$0x1]
        %v2951 = vsel %vm2598, %v2790, %v2950
        %2952 = vst [vmem:[#allocation2 + $0x2c] sm:$0x1] %v2951
        %v2953 = vld [vmem:[#allocation2 + $0x30] sm:$0xf]
        %v2954 = vsel %vm2924, %v2797, %v2953
        %2955 = vst [vmem:[#allocation2 + $0x30] sm:$0xf] %v2954
        %2956 = vst [vmem:[#allocation2 + $0x34] sm:$0xf] %v2806
        %v2957 = vld [vmem:[#allocation2 + $0x38] sm:$0x1]
        %v2958 = vsel %vm2598, %v2807, %v2957
        %2959 = vst [vmem:[#allocation2 + $0x38] sm:$0x1] %v2958
        %v2960 = vld [vmem:[#allocation2 + $0x3c] sm:$0xf]
        %v2961 = vsel %vm2924, %v2814, %v2960
        %2962 = vst [vmem:[#allocation2 + $0x3c] sm:$0xf] %v2961
        %2963 = vst [vmem:[#allocation2 + $0x40] sm:$0xf] %v2823
        %v2964 = vld [vmem:[#allocation2 + $0x44] sm:$0x1]
        %v2965 = vsel %vm2598, %v2824, %v2964
        %2966 = vst [vmem:[#allocation2 + $0x44] sm:$0x1] %v2965
        %v2967 = vld [vmem:[#allocation2 + $0x48] sm:$0xf]
        %v2968 = vsel %vm2924, %v2831, %v2967
        %2969 = vst [vmem:[#allocation2 + $0x48] sm:$0xf] %v2968
        %2970 = vst [vmem:[#allocation2 + $0x4c] sm:$0xf] %v2840
        %v2971 = vld [vmem:[#allocation2 + $0x50] sm:$0x1]
        %v2972 = vsel %vm2598, %v2841, %v2971
        %2973 = vst [vmem:[#allocation2 + $0x50] sm:$0x1] %v2972
        %v2974 = vld [vmem:[#allocation2 + $0x54] sm:$0xf]
        %v2975 = vsel %vm2924, %v2848, %v2974
        %2976 = vst [vmem:[#allocation2 + $0x54] sm:$0xf] %v2975
        %2977 = vst [vmem:[#allocation2 + $0x58] sm:$0xf] %v2857
        %v2978 = vld [vmem:[#allocation2 + $0x5c] sm:$0x1]
        %v2979 = vsel %vm2598, %v2858, %v2978
        %2980 = vst [vmem:[#allocation2 + $0x5c] sm:$0x1] %v2979
        %v2981 = vld [vmem:[#allocation2 + $0x60] sm:$0xf]
        %v2982 = vsel %vm2924, %v2865, %v2981
        %2983 = vst [vmem:[#allocation2 + $0x60] sm:$0xf] %v2982
        %2984 = vst [vmem:[#allocation2 + $0x64] sm:$0xf] %v2874
        %v2985 = vld [vmem:[#allocation2 + $0x68] sm:$0x1]
        %v2986 = vsel %vm2598, %v2875, %v2985
        %2987 = vst [vmem:[#allocation2 + $0x68] sm:$0x1] %v2986
        %v2988 = vld [vmem:[#allocation2 + $0x6c] sm:$0xf]
        %v2989 = vsel %vm2924, %v2882, %v2988
        %2990 = vst [vmem:[#allocation2 + $0x6c] sm:$0xf] %v2989
        %2991 = vst [vmem:[#allocation2 + $0x70] sm:$0xf] %v2891
        %v2992 = vld [vmem:[#allocation2 + $0x74] sm:$0x1]
        %v2993 = vsel %vm2598, %v2892, %v2992
        %2994 = vst [vmem:[#allocation2 + $0x74] sm:$0x1] %v2993
        %p2995 = scmp.eq.s32.totalorder %s254, 0
        // Predicated region
        $region45: #{tpu_custom_call.1} parent=39 // pred_check
          %p2996 = pneg %p2995
        $region46: #{tpu_custom_call.1} parent=39 // pred_check_branch
          %2998 = sbr.rel (%p2996) target = $region48
        $region47: #{tpu_custom_call.1} parent=39 // pred_region
          %2999 = vst [vmem:[#allocation2] sm:$0xf] 0
          %3000 = vst [vmem:[#allocation2 + $0x4] sm:$0xf] 0
          %3001 = vst [vmem:[#allocation2 + $0x8] sm:$0x1] 0
        $region48: #{tpu_custom_call.1} parent=39 // pred_fallthru
          _
        %s3002 = sadd.s32 %s254, 8
        %p3003 = scmp.eq.s32.totalorder %s3002, 16
        // Predicated region
        $region49: #{tpu_custom_call.1} parent=39 // pred_check
          %p3004 = pneg %p3003
        $region50: #{tpu_custom_call.1} parent=39 // pred_check_branch
          %3006 = sbr.rel (%p3004) target = $region52
        $region51: #{tpu_custom_call.1} parent=39 // pred_region
          %s3007 = scalar_lea.vmem [#allocation2], 108
          %3008 = vst [vmem:[%s3007] sm:$0xf] 0
          %3009 = vst [vmem:[%s3007 + $0x4] sm:$0xf] 0
          %3010 = vst [vmem:[%s3007 + $0x8] sm:$0x1] 0
        $region52: #{tpu_custom_call.1} parent=39 // pred_fallthru
          _
        %v3011 = vld [vmem:[#allocation2] sm:$0xf]
        %v3012 = vld [vmem:[#allocation2 + $0x4] sm:$0xf]
        %v3013 = vld [vmem:[#allocation2 + $0xc] sm:$0xf]
        %v3014 = vld [vmem:[#allocation2 + $0x10] sm:$0xf]
        %v3015 = vld [vmem:[#allocation2 + $0x18] sm:$0xf]
        %v3016 = vld [vmem:[#allocation2 + $0x1c] sm:$0xf]
        %v3017 = vld [vmem:[#allocation2 + $0x24] sm:$0xf]
        %v3018 = vld [vmem:[#allocation2 + $0x28] sm:$0xf]
        %v3019 = vld [vmem:[#allocation2 + $0x30] sm:$0xf]
        %v3020 = vld [vmem:[#allocation2 + $0x34] sm:$0xf]
        %v3021 = vld [vmem:[#allocation2 + $0x3c] sm:$0xf]
        %v3022 = vld [vmem:[#allocation2 + $0x40] sm:$0xf]
        %v3023 = vld [vmem:[#allocation2 + $0x48] sm:$0xf]
        %v3024 = vld [vmem:[#allocation2 + $0x4c] sm:$0xf]
        %v3025 = vld [vmem:[#allocation2 + $0x54] sm:$0xf]
        %v3026 = vld [vmem:[#allocation2 + $0x58] sm:$0xf]
        %v3027 = vld [vmem:[#allocation2 + $0x8] sm:$0x1]
        %v3028 = vld [vmem:[#allocation2 + $0x14] sm:$0x1]
        %v3029 = vld [vmem:[#allocation2 + $0x20] sm:$0x1]
        %v3030 = vld [vmem:[#allocation2 + $0x2c] sm:$0x1]
        %v3031 = vld [vmem:[#allocation2 + $0x38] sm:$0x1]
        %v3032 = vld [vmem:[#allocation2 + $0x44] sm:$0x1]
        %v3033 = vld [vmem:[#allocation2 + $0x50] sm:$0x1]
        %v3034 = vld [vmem:[#allocation2 + $0x5c] sm:$0x1]
        %v3036 = vshrl.u32 %v3011, 16
        %v3038 = vrot.slane %v3036, 4
        %v3039 = vshll.u32 %v3011, 16
        %v3041 = vrot.slane %v3039, 5
        %v3042 = vor.u32 %v3038, %v3041
        %v3043 = vrot.slane %v3042, 4
        %v3045 = vshll.u32 %v3012, 16
        %v3047 = vrot.slane %v3045, 5
        %v3048 = vsel %vm296, %v3043, %v3047
        %v3049 = vshrl.u32 %v3012, 16
        %v3051 = vrot.slane %v3049, 4
        %v3052 = vor.u32 %v3051, %v3047
        %v3053 = vrot.slane %v3052, 4
        %v3055 = vshll.u32 %v3027, 16
        %v3057 = vrot.slane %v3055, 5
        %v3058 = vsel %vm296, %v3053, %v3057
        %v3060 = vshrl.u32 %v3013, 16
        %v3062 = vrot.slane %v3060, 4
        %v3063 = vshll.u32 %v3013, 16
        %v3065 = vrot.slane %v3063, 5
        %v3066 = vor.u32 %v3062, %v3065
        %v3067 = vrot.slane %v3066, 4
        %v3069 = vshll.u32 %v3014, 16
        %v3071 = vrot.slane %v3069, 5
        %v3072 = vsel %vm296, %v3067, %v3071
        %v3073 = vshrl.u32 %v3014, 16
        %v3075 = vrot.slane %v3073, 4
        %v3076 = vor.u32 %v3075, %v3071
        %v3077 = vrot.slane %v3076, 4
        %v3079 = vshll.u32 %v3028, 16
        %v3081 = vrot.slane %v3079, 5
        %v3082 = vsel %vm296, %v3077, %v3081
        %v3084 = vshrl.u32 %v3015, 16
        %v3086 = vrot.slane %v3084, 4
        %v3087 = vshll.u32 %v3015, 16
        %v3089 = vrot.slane %v3087, 5
        %v3090 = vor.u32 %v3086, %v3089
        %v3091 = vrot.slane %v3090, 4
        %v3093 = vshll.u32 %v3016, 16
        %v3095 = vrot.slane %v3093, 5
        %v3096 = vsel %vm296, %v3091, %v3095
        %v3097 = vshrl.u32 %v3016, 16
        %v3099 = vrot.slane %v3097, 4
        %v3100 = vor.u32 %v3099, %v3095
        %v3101 = vrot.slane %v3100, 4
        %v3103 = vshll.u32 %v3029, 16
        %v3105 = vrot.slane %v3103, 5
        %v3106 = vsel %vm296, %v3101, %v3105
        %v3108 = vshrl.u32 %v3017, 16
        %v3110 = vrot.slane %v3108, 4
        %v3111 = vshll.u32 %v3017, 16
        %v3113 = vrot.slane %v3111, 5
        %v3114 = vor.u32 %v3110, %v3113
        %v3115 = vrot.slane %v3114, 4
        %v3117 = vshll.u32 %v3018, 16
        %v3119 = vrot.slane %v3117, 5
        %v3120 = vsel %vm296, %v3115, %v3119
        %v3121 = vshrl.u32 %v3018, 16
        %v3123 = vrot.slane %v3121, 4
        %v3124 = vor.u32 %v3123, %v3119
        %v3125 = vrot.slane %v3124, 4
        %v3127 = vshll.u32 %v3030, 16
        %v3129 = vrot.slane %v3127, 5
        %v3130 = vsel %vm296, %v3125, %v3129
        %v3132 = vshrl.u32 %v3019, 16
        %v3134 = vrot.slane %v3132, 4
        %v3135 = vshll.u32 %v3019, 16
        %v3137 = vrot.slane %v3135, 5
        %v3138 = vor.u32 %v3134, %v3137
        %v3139 = vrot.slane %v3138, 4
        %v3141 = vshll.u32 %v3020, 16
        %v3143 = vrot.slane %v3141, 5
        %v3144 = vsel %vm296, %v3139, %v3143
        %v3145 = vshrl.u32 %v3020, 16
        %v3147 = vrot.slane %v3145, 4
        %v3148 = vor.u32 %v3147, %v3143
        %v3149 = vrot.slane %v3148, 4
        %v3151 = vshll.u32 %v3031, 16
        %v3153 = vrot.slane %v3151, 5
        %v3154 = vsel %vm296, %v3149, %v3153
        %v3156 = vshrl.u32 %v3021, 16
        %v3158 = vrot.slane %v3156, 4
        %v3159 = vshll.u32 %v3021, 16
        %v3161 = vrot.slane %v3159, 5
        %v3162 = vor.u32 %v3158, %v3161
        %v3163 = vrot.slane %v3162, 4
        %v3165 = vshll.u32 %v3022, 16
        %v3167 = vrot.slane %v3165, 5
        %v3168 = vsel %vm296, %v3163, %v3167
        %v3169 = vshrl.u32 %v3022, 16
        %v3171 = vrot.slane %v3169, 4
        %v3172 = vor.u32 %v3171, %v3167
        %v3173 = vrot.slane %v3172, 4
        %v3175 = vshll.u32 %v3032, 16
        %v3177 = vrot.slane %v3175, 5
        %v3178 = vsel %vm296, %v3173, %v3177
        %v3180 = vshrl.u32 %v3023, 16
        %v3182 = vrot.slane %v3180, 4
        %v3183 = vshll.u32 %v3023, 16
        %v3185 = vrot.slane %v3183, 5
        %v3186 = vor.u32 %v3182, %v3185
        %v3187 = vrot.slane %v3186, 4
        %v3189 = vshll.u32 %v3024, 16
        %v3191 = vrot.slane %v3189, 5
        %v3192 = vsel %vm296, %v3187, %v3191
        %v3193 = vshrl.u32 %v3024, 16
        %v3195 = vrot.slane %v3193, 4
        %v3196 = vor.u32 %v3195, %v3191
        %v3197 = vrot.slane %v3196, 4
        %v3199 = vshll.u32 %v3033, 16
        %v3201 = vrot.slane %v3199, 5
        %v3202 = vsel %vm296, %v3197, %v3201
        %v3204 = vshrl.u32 %v3025, 16
        %v3206 = vrot.slane %v3204, 4
        %v3207 = vshll.u32 %v3025, 16
        %v3209 = vrot.slane %v3207, 5
        %v3210 = vor.u32 %v3206, %v3209
        %v3211 = vrot.slane %v3210, 4
        %v3213 = vshll.u32 %v3026, 16
        %v3215 = vrot.slane %v3213, 5
        %v3216 = vsel %vm296, %v3211, %v3215
        %v3217 = vshrl.u32 %v3026, 16
        %v3219 = vrot.slane %v3217, 4
        %v3220 = vor.u32 %v3219, %v3215
        %v3221 = vrot.slane %v3220, 4
        %v3223 = vshll.u32 %v3034, 16
        %v3225 = vrot.slane %v3223, 5
        %v3226 = vsel %vm296, %v3221, %v3225
        %v3227 = vld [vmem:[#allocation2] sm:$0xe]
        %v3228 = vld [vmem:[#allocation2 + $0xc] sm:$0xe]
        %v3229 = vld [vmem:[#allocation2 + $0x18] sm:$0xe]
        %v3230 = vld [vmem:[#allocation2 + $0x24] sm:$0xe]
        %v3231 = vld [vmem:[#allocation2 + $0x30] sm:$0xe]
        %v3232 = vld [vmem:[#allocation2 + $0x3c] sm:$0xe]
        %v3233 = vld [vmem:[#allocation2 + $0x48] sm:$0xe]
        %v3234 = vld [vmem:[#allocation2 + $0x54] sm:$0xe]
        %v3259 = vrot.slane %v3227, 5
        %v3260 = vrot.slane %v3259, 4
        %v3261 = vrot.slane %v3012, 5
        %v3262 = vsel %vm569, %v3260, %v3261
        %v3263 = vrot.slane %v3261, 4
        %v3264 = vrot.slane %v3027, 5
        %v3265 = vsel %vm569, %v3263, %v3264
        %v3266 = vrot.slane %v3228, 5
        %v3267 = vrot.slane %v3266, 4
        %v3268 = vrot.slane %v3014, 5
        %v3269 = vsel %vm569, %v3267, %v3268
        %v3270 = vrot.slane %v3268, 4
        %v3271 = vrot.slane %v3028, 5
        %v3272 = vsel %vm569, %v3270, %v3271
        %v3273 = vrot.slane %v3229, 5
        %v3274 = vrot.slane %v3273, 4
        %v3275 = vrot.slane %v3016, 5
        %v3276 = vsel %vm569, %v3274, %v3275
        %v3277 = vrot.slane %v3275, 4
        %v3278 = vrot.slane %v3029, 5
        %v3279 = vsel %vm569, %v3277, %v3278
        %v3280 = vrot.slane %v3230, 5
        %v3281 = vrot.slane %v3280, 4
        %v3282 = vrot.slane %v3018, 5
        %v3283 = vsel %vm569, %v3281, %v3282
        %v3284 = vrot.slane %v3282, 4
        %v3285 = vrot.slane %v3030, 5
        %v3286 = vsel %vm569, %v3284, %v3285
        %v3287 = vrot.slane %v3231, 5
        %v3288 = vrot.slane %v3287, 4
        %v3289 = vrot.slane %v3020, 5
        %v3290 = vsel %vm569, %v3288, %v3289
        %v3291 = vrot.slane %v3289, 4
        %v3292 = vrot.slane %v3031, 5
        %v3293 = vsel %vm569, %v3291, %v3292
        %v3294 = vrot.slane %v3232, 5
        %v3295 = vrot.slane %v3294, 4
        %v3296 = vrot.slane %v3022, 5
        %v3297 = vsel %vm569, %v3295, %v3296
        %v3298 = vrot.slane %v3296, 4
        %v3299 = vrot.slane %v3032, 5
        %v3300 = vsel %vm569, %v3298, %v3299
        %v3301 = vrot.slane %v3233, 5
        %v3302 = vrot.slane %v3301, 4
        %v3303 = vrot.slane %v3024, 5
        %v3304 = vsel %vm569, %v3302, %v3303
        %v3305 = vrot.slane %v3303, 4
        %v3306 = vrot.slane %v3033, 5
        %v3307 = vsel %vm569, %v3305, %v3306
        %v3308 = vrot.slane %v3234, 5
        %v3309 = vrot.slane %v3308, 4
        %v3310 = vrot.slane %v3026, 5
        %v3311 = vsel %vm569, %v3309, %v3310
        %v3312 = vrot.slane %v3310, 4
        %v3313 = vrot.slane %v3034, 5
        %v3314 = vsel %vm569, %v3312, %v3313
        %v3323 = vunpack.c.l.b16 %v3011
        %v3324 = vunpack.c.l.b16 %v3012
        %v3325 = vunpack.c.l.b16 %v3013
        %v3326 = vunpack.c.l.b16 %v3014
        %v3327 = vunpack.c.l.b16 %v3015
        %v3328 = vunpack.c.l.b16 %v3016
        %v3329 = vunpack.c.l.b16 %v3017
        %v3330 = vunpack.c.l.b16 %v3018
        %v3331 = vunpack.c.l.b16 %v3019
        %v3332 = vunpack.c.l.b16 %v3020
        %v3333 = vunpack.c.l.b16 %v3021
        %v3334 = vunpack.c.l.b16 %v3022
        %v3335 = vunpack.c.l.b16 %v3023
        %v3336 = vunpack.c.l.b16 %v3024
        %v3337 = vunpack.c.l.b16 %v3025
        %v3338 = vunpack.c.l.b16 %v3026
        %v3339 = vpack.c.b16 %v3324, %v3323
        %v3340 = vpack.c.b16 %v3326, %v3325
        %v3341 = vpack.c.b16 %v3328, %v3327
        %v3342 = vpack.c.b16 %v3330, %v3329
        %v3343 = vpack.c.b16 %v3332, %v3331
        %v3344 = vpack.c.b16 %v3334, %v3333
        %v3345 = vpack.c.b16 %v3336, %v3335
        %v3346 = vpack.c.b16 %v3338, %v3337
        %v3355 = vunpack.c.l.b16 %v3048
        %v3356 = vunpack.c.l.b16 %v3058
        %v3357 = vunpack.c.l.b16 %v3072
        %v3358 = vunpack.c.l.b16 %v3082
        %v3359 = vunpack.c.l.b16 %v3096
        %v3360 = vunpack.c.l.b16 %v3106
        %v3361 = vunpack.c.l.b16 %v3120
        %v3362 = vunpack.c.l.b16 %v3130
        %v3363 = vunpack.c.l.b16 %v3144
        %v3364 = vunpack.c.l.b16 %v3154
        %v3365 = vunpack.c.l.b16 %v3168
        %v3366 = vunpack.c.l.b16 %v3178
        %v3367 = vunpack.c.l.b16 %v3192
        %v3368 = vunpack.c.l.b16 %v3202
        %v3369 = vunpack.c.l.b16 %v3216
        %v3370 = vunpack.c.l.b16 %v3226
        %v3371 = vpack.c.b16 %v3356, %v3355
        %v3372 = vpack.c.b16 %v3358, %v3357
        %v3373 = vpack.c.b16 %v3360, %v3359
        %v3374 = vpack.c.b16 %v3362, %v3361
        %v3375 = vpack.c.b16 %v3364, %v3363
        %v3376 = vpack.c.b16 %v3366, %v3365
        %v3377 = vpack.c.b16 %v3368, %v3367
        %v3378 = vpack.c.b16 %v3370, %v3369
        %v3387 = vunpack.c.l.b16 %v3262
        %v3388 = vunpack.c.l.b16 %v3265
        %v3389 = vunpack.c.l.b16 %v3269
        %v3390 = vunpack.c.l.b16 %v3272
        %v3391 = vunpack.c.l.b16 %v3276
        %v3392 = vunpack.c.l.b16 %v3279
        %v3393 = vunpack.c.l.b16 %v3283
        %v3394 = vunpack.c.l.b16 %v3286
        %v3395 = vunpack.c.l.b16 %v3290
        %v3396 = vunpack.c.l.b16 %v3293
        %v3397 = vunpack.c.l.b16 %v3297
        %v3398 = vunpack.c.l.b16 %v3300
        %v3399 = vunpack.c.l.b16 %v3304
        %v3400 = vunpack.c.l.b16 %v3307
        %v3401 = vunpack.c.l.b16 %v3311
        %v3402 = vunpack.c.l.b16 %v3314
        %v3403 = vpack.c.b16 %v3388, %v3387
        %v3404 = vpack.c.b16 %v3390, %v3389
        %v3405 = vpack.c.b16 %v3392, %v3391
        %v3406 = vpack.c.b16 %v3394, %v3393
        %v3407 = vpack.c.b16 %v3396, %v3395
        %v3408 = vpack.c.b16 %v3398, %v3397
        %v3409 = vpack.c.b16 %v3400, %v3399
        %v3410 = vpack.c.b16 %v3402, %v3401
        %v3419 = vld [vmem:[%s3] sm:$0xf]
        %v3420 = vld [vmem:[%s3 + $0x4] sm:$0xf]
        %v3421 = vld [vmem:[%s3 + $0x8] sm:$0xf]
        %v3422 = vld [vmem:[%s3 + $0xc] sm:$0xf]
        %v3423 = vld [vmem:[%s3 + $0x10] sm:$0xf]
        %v3424 = vld [vmem:[%s3 + $0x14] sm:$0xf]
        %v3425 = vld [vmem:[%s3 + $0x18] sm:$0xf]
        %v3426 = vld [vmem:[%s3 + $0x1c] sm:$0xf]
        %v3427 = vld [vmem:[%s3 + $0x20] sm:$0xf]
        %v3428 = vld [vmem:[%s3 + $0x24] sm:$0xf]
        %v3429 = vld [vmem:[%s3 + $0x28] sm:$0xf]
        %v3430 = vld [vmem:[%s3 + $0x2c] sm:$0xf]
        %v3431 = vld [vmem:[%s3 + $0x30] sm:$0xf]
        %v3432 = vld [vmem:[%s3 + $0x34] sm:$0xf]
        %v3433 = vld [vmem:[%s3 + $0x38] sm:$0xf]
        %v3434 = vld [vmem:[%s3 + $0x3c] sm:$0xf]
        %v3435 = vld [vmem:[%s3 + $0x40] sm:$0xf]
        %v3436 = vld [vmem:[%s3 + $0x44] sm:$0xf]
        %v3437 = vld [vmem:[%s3 + $0x48] sm:$0xf]
        %v3438 = vld [vmem:[%s3 + $0x4c] sm:$0xf]
        %v3439 = vld [vmem:[%s3 + $0x50] sm:$0xf]
        %v3440 = vld [vmem:[%s3 + $0x54] sm:$0xf]
        %v3441 = vld [vmem:[%s3 + $0x58] sm:$0xf]
        %v3442 = vld [vmem:[%s3 + $0x5c] sm:$0xf]
        %v3443 = vld [vmem:[%s3 + $0x60] sm:$0xf]
        %v3444 = vld [vmem:[%s3 + $0x64] sm:$0xf]
        %v3445 = vld [vmem:[%s3 + $0x68] sm:$0xf]
        %v3446 = vld [vmem:[%s3 + $0x6c] sm:$0xf]
        %v3447 = vld [vmem:[%s3 + $0x70] sm:$0xf]
        %v3448 = vld [vmem:[%s3 + $0x74] sm:$0xf]
        %v3449 = vld [vmem:[%s3 + $0x78] sm:$0xf]
        %v3450 = vld [vmem:[%s3 + $0x7c] sm:$0xf]
        %v3451 = vld [vmem:[%s3 + $0x80] sm:$0xf]
        %v3452 = vld [vmem:[%s3 + $0x84] sm:$0xf]
        %v3453 = vld [vmem:[%s3 + $0x88] sm:$0xf]
        %v3454 = vld [vmem:[%s3 + $0x8c] sm:$0xf]
        %v3455 = vld [vmem:[%s3 + $0x90] sm:$0xf]
        %v3456 = vld [vmem:[%s3 + $0x94] sm:$0xf]
        %v3457 = vld [vmem:[%s3 + $0x98] sm:$0xf]
        %v3458 = vld [vmem:[%s3 + $0x9c] sm:$0xf]
        %v3459 = vld [vmem:[%s3 + $0xa0] sm:$0xf]
        %v3460 = vld [vmem:[%s3 + $0xa4] sm:$0xf]
        %v3461 = vld [vmem:[%s3 + $0xa8] sm:$0xf]
        %v3462 = vld [vmem:[%s3 + $0xac] sm:$0xf]
        %v3463 = vld [vmem:[%s3 + $0xb0] sm:$0xf]
        %v3464 = vld [vmem:[%s3 + $0xb4] sm:$0xf]
        %v3465 = vld [vmem:[%s3 + $0xb8] sm:$0xf]
        %v3466 = vld [vmem:[%s3 + $0xbc] sm:$0xf]
        %s3467 = scalar_lea.vmem [#allocation2], 12
        %v3468 = vld [vmem:[%s3467] sm:$0xf]
        %v3469 = vld [vmem:[%s3467 + $0x4] sm:$0xf]
        %v3470 = vld [vmem:[%s3467 + $0xc] sm:$0xf]
        %v3471 = vld [vmem:[%s3467 + $0x10] sm:$0xf]
        %v3472 = vld [vmem:[%s3467 + $0x18] sm:$0xf]
        %v3473 = vld [vmem:[%s3467 + $0x1c] sm:$0xf]
        %v3474 = vld [vmem:[%s3467 + $0x24] sm:$0xf]
        %v3475 = vld [vmem:[%s3467 + $0x28] sm:$0xf]
        %v3476 = vld [vmem:[%s3467 + $0x30] sm:$0xf]
        %v3477 = vld [vmem:[%s3467 + $0x34] sm:$0xf]
        %v3478 = vld [vmem:[%s3467 + $0x3c] sm:$0xf]
        %v3479 = vld [vmem:[%s3467 + $0x40] sm:$0xf]
        %v3480 = vld [vmem:[%s3467 + $0x48] sm:$0xf]
        %v3481 = vld [vmem:[%s3467 + $0x4c] sm:$0xf]
        %v3482 = vld [vmem:[%s3467 + $0x54] sm:$0xf]
        %v3483 = vld [vmem:[%s3467 + $0x58] sm:$0xf]
        %v3484 = vld [vmem:[%s3467 + $0x8] sm:$0x1]
        %v3485 = vld [vmem:[%s3467 + $0x14] sm:$0x1]
        %v3486 = vld [vmem:[%s3467 + $0x20] sm:$0x1]
        %v3487 = vld [vmem:[%s3467 + $0x2c] sm:$0x1]
        %v3488 = vld [vmem:[%s3467 + $0x38] sm:$0x1]
        %v3489 = vld [vmem:[%s3467 + $0x44] sm:$0x1]
        %v3490 = vld [vmem:[%s3467 + $0x50] sm:$0x1]
        %v3491 = vld [vmem:[%s3467 + $0x5c] sm:$0x1]
        %v3493 = vshrl.u32 %v3468, 16
        %v3495 = vrot.slane %v3493, 4
        %v3496 = vshll.u32 %v3468, 16
        %v3498 = vrot.slane %v3496, 5
        %v3499 = vor.u32 %v3495, %v3498
        %v3500 = vrot.slane %v3499, 4
        %v3502 = vshll.u32 %v3469, 16
        %v3504 = vrot.slane %v3502, 5
        %v3505 = vsel %vm296, %v3500, %v3504
        %v3506 = vshrl.u32 %v3469, 16
        %v3508 = vrot.slane %v3506, 4
        %v3509 = vor.u32 %v3508, %v3504
        %v3510 = vrot.slane %v3509, 4
        %v3512 = vshll.u32 %v3484, 16
        %v3514 = vrot.slane %v3512, 5
        %v3515 = vsel %vm296, %v3510, %v3514
        %v3517 = vshrl.u32 %v3470, 16
        %v3519 = vrot.slane %v3517, 4
        %v3520 = vshll.u32 %v3470, 16
        %v3522 = vrot.slane %v3520, 5
        %v3523 = vor.u32 %v3519, %v3522
        %v3524 = vrot.slane %v3523, 4
        %v3526 = vshll.u32 %v3471, 16
        %v3528 = vrot.slane %v3526, 5
        %v3529 = vsel %vm296, %v3524, %v3528
        %v3530 = vshrl.u32 %v3471, 16
        %v3532 = vrot.slane %v3530, 4
        %v3533 = vor.u32 %v3532, %v3528
        %v3534 = vrot.slane %v3533, 4
        %v3536 = vshll.u32 %v3485, 16
        %v3538 = vrot.slane %v3536, 5
        %v3539 = vsel %vm296, %v3534, %v3538
        %v3541 = vshrl.u32 %v3472, 16
        %v3543 = vrot.slane %v3541, 4
        %v3544 = vshll.u32 %v3472, 16
        %v3546 = vrot.slane %v3544, 5
        %v3547 = vor.u32 %v3543, %v3546
        %v3548 = vrot.slane %v3547, 4
        %v3550 = vshll.u32 %v3473, 16
        %v3552 = vrot.slane %v3550, 5
        %v3553 = vsel %vm296, %v3548, %v3552
        %v3554 = vshrl.u32 %v3473, 16
        %v3556 = vrot.slane %v3554, 4
        %v3557 = vor.u32 %v3556, %v3552
        %v3558 = vrot.slane %v3557, 4
        %v3560 = vshll.u32 %v3486, 16
        %v3562 = vrot.slane %v3560, 5
        %v3563 = vsel %vm296, %v3558, %v3562
        %v3565 = vshrl.u32 %v3474, 16
        %v3567 = vrot.slane %v3565, 4
        %v3568 = vshll.u32 %v3474, 16
        %v3570 = vrot.slane %v3568, 5
        %v3571 = vor.u32 %v3567, %v3570
        %v3572 = vrot.slane %v3571, 4
        %v3574 = vshll.u32 %v3475, 16
        %v3576 = vrot.slane %v3574, 5
        %v3577 = vsel %vm296, %v3572, %v3576
        %v3578 = vshrl.u32 %v3475, 16
        %v3580 = vrot.slane %v3578, 4
        %v3581 = vor.u32 %v3580, %v3576
        %v3582 = vrot.slane %v3581, 4
        %v3584 = vshll.u32 %v3487, 16
        %v3586 = vrot.slane %v3584, 5
        %v3587 = vsel %vm296, %v3582, %v3586
        %v3589 = vshrl.u32 %v3476, 16
        %v3591 = vrot.slane %v3589, 4
        %v3592 = vshll.u32 %v3476, 16
        %v3594 = vrot.slane %v3592, 5
        %v3595 = vor.u32 %v3591, %v3594
        %v3596 = vrot.slane %v3595, 4
        %v3598 = vshll.u32 %v3477, 16
        %v3600 = vrot.slane %v3598, 5
        %v3601 = vsel %vm296, %v3596, %v3600
        %v3602 = vshrl.u32 %v3477, 16
        %v3604 = vrot.slane %v3602, 4
        %v3605 = vor.u32 %v3604, %v3600
        %v3606 = vrot.slane %v3605, 4
        %v3608 = vshll.u32 %v3488, 16
        %v3610 = vrot.slane %v3608, 5
        %v3611 = vsel %vm296, %v3606, %v3610
        %v3613 = vshrl.u32 %v3478, 16
        %v3615 = vrot.slane %v3613, 4
        %v3616 = vshll.u32 %v3478, 16
        %v3618 = vrot.slane %v3616, 5
        %v3619 = vor.u32 %v3615, %v3618
        %v3620 = vrot.slane %v3619, 4
        %v3622 = vshll.u32 %v3479, 16
        %v3624 = vrot.slane %v3622, 5
        %v3625 = vsel %vm296, %v3620, %v3624
        %v3626 = vshrl.u32 %v3479, 16
        %v3628 = vrot.slane %v3626, 4
        %v3629 = vor.u32 %v3628, %v3624
        %v3630 = vrot.slane %v3629, 4
        %v3632 = vshll.u32 %v3489, 16
        %v3634 = vrot.slane %v3632, 5
        %v3635 = vsel %vm296, %v3630, %v3634
        %v3637 = vshrl.u32 %v3480, 16
        %v3639 = vrot.slane %v3637, 4
        %v3640 = vshll.u32 %v3480, 16
        %v3642 = vrot.slane %v3640, 5
        %v3643 = vor.u32 %v3639, %v3642
        %v3644 = vrot.slane %v3643, 4
        %v3646 = vshll.u32 %v3481, 16
        %v3648 = vrot.slane %v3646, 5
        %v3649 = vsel %vm296, %v3644, %v3648
        %v3650 = vshrl.u32 %v3481, 16
        %v3652 = vrot.slane %v3650, 4
        %v3653 = vor.u32 %v3652, %v3648
        %v3654 = vrot.slane %v3653, 4
        %v3656 = vshll.u32 %v3490, 16
        %v3658 = vrot.slane %v3656, 5
        %v3659 = vsel %vm296, %v3654, %v3658
        %v3661 = vshrl.u32 %v3482, 16
        %v3663 = vrot.slane %v3661, 4
        %v3664 = vshll.u32 %v3482, 16
        %v3666 = vrot.slane %v3664, 5
        %v3667 = vor.u32 %v3663, %v3666
        %v3668 = vrot.slane %v3667, 4
        %v3670 = vshll.u32 %v3483, 16
        %v3672 = vrot.slane %v3670, 5
        %v3673 = vsel %vm296, %v3668, %v3672
        %v3674 = vshrl.u32 %v3483, 16
        %v3676 = vrot.slane %v3674, 4
        %v3677 = vor.u32 %v3676, %v3672
        %v3678 = vrot.slane %v3677, 4
        %v3680 = vshll.u32 %v3491, 16
        %v3682 = vrot.slane %v3680, 5
        %v3683 = vsel %vm296, %v3678, %v3682
        %v3684 = vld [vmem:[%s3467] sm:$0xe]
        %v3685 = vld [vmem:[%s3467 + $0xc] sm:$0xe]
        %v3686 = vld [vmem:[%s3467 + $0x18] sm:$0xe]
        %v3687 = vld [vmem:[%s3467 + $0x24] sm:$0xe]
        %v3688 = vld [vmem:[%s3467 + $0x30] sm:$0xe]
        %v3689 = vld [vmem:[%s3467 + $0x3c] sm:$0xe]
        %v3690 = vld [vmem:[%s3467 + $0x48] sm:$0xe]
        %v3691 = vld [vmem:[%s3467 + $0x54] sm:$0xe]
        %v3716 = vrot.slane %v3684, 5
        %v3717 = vrot.slane %v3716, 4
        %v3718 = vrot.slane %v3469, 5
        %v3719 = vsel %vm569, %v3717, %v3718
        %v3720 = vrot.slane %v3718, 4
        %v3721 = vrot.slane %v3484, 5
        %v3722 = vsel %vm569, %v3720, %v3721
        %v3723 = vrot.slane %v3685, 5
        %v3724 = vrot.slane %v3723, 4
        %v3725 = vrot.slane %v3471, 5
        %v3726 = vsel %vm569, %v3724, %v3725
        %v3727 = vrot.slane %v3725, 4
        %v3728 = vrot.slane %v3485, 5
        %v3729 = vsel %vm569, %v3727, %v3728
        %v3730 = vrot.slane %v3686, 5
        %v3731 = vrot.slane %v3730, 4
        %v3732 = vrot.slane %v3473, 5
        %v3733 = vsel %vm569, %v3731, %v3732
        %v3734 = vrot.slane %v3732, 4
        %v3735 = vrot.slane %v3486, 5
        %v3736 = vsel %vm569, %v3734, %v3735
        %v3737 = vrot.slane %v3687, 5
        %v3738 = vrot.slane %v3737, 4
        %v3739 = vrot.slane %v3475, 5
        %v3740 = vsel %vm569, %v3738, %v3739
        %v3741 = vrot.slane %v3739, 4
        %v3742 = vrot.slane %v3487, 5
        %v3743 = vsel %vm569, %v3741, %v3742
        %v3744 = vrot.slane %v3688, 5
        %v3745 = vrot.slane %v3744, 4
        %v3746 = vrot.slane %v3477, 5
        %v3747 = vsel %vm569, %v3745, %v3746
        %v3748 = vrot.slane %v3746, 4
        %v3749 = vrot.slane %v3488, 5
        %v3750 = vsel %vm569, %v3748, %v3749
        %v3751 = vrot.slane %v3689, 5
        %v3752 = vrot.slane %v3751, 4
        %v3753 = vrot.slane %v3479, 5
        %v3754 = vsel %vm569, %v3752, %v3753
        %v3755 = vrot.slane %v3753, 4
        %v3756 = vrot.slane %v3489, 5
        %v3757 = vsel %vm569, %v3755, %v3756
        %v3758 = vrot.slane %v3690, 5
        %v3759 = vrot.slane %v3758, 4
        %v3760 = vrot.slane %v3481, 5
        %v3761 = vsel %vm569, %v3759, %v3760
        %v3762 = vrot.slane %v3760, 4
        %v3763 = vrot.slane %v3490, 5
        %v3764 = vsel %vm569, %v3762, %v3763
        %v3765 = vrot.slane %v3691, 5
        %v3766 = vrot.slane %v3765, 4
        %v3767 = vrot.slane %v3483, 5
        %v3768 = vsel %vm569, %v3766, %v3767
        %v3769 = vrot.slane %v3767, 4
        %v3770 = vrot.slane %v3491, 5
        %v3771 = vsel %vm569, %v3769, %v3770
        %v3780 = vunpack.c.l.b16 %v3468
        %v3781 = vunpack.c.l.b16 %v3469
        %v3782 = vunpack.c.l.b16 %v3470
        %v3783 = vunpack.c.l.b16 %v3471
        %v3784 = vunpack.c.l.b16 %v3472
        %v3785 = vunpack.c.l.b16 %v3473
        %v3786 = vunpack.c.l.b16 %v3474
        %v3787 = vunpack.c.l.b16 %v3475
        %v3788 = vunpack.c.l.b16 %v3476
        %v3789 = vunpack.c.l.b16 %v3477
        %v3790 = vunpack.c.l.b16 %v3478
        %v3791 = vunpack.c.l.b16 %v3479
        %v3792 = vunpack.c.l.b16 %v3480
        %v3793 = vunpack.c.l.b16 %v3481
        %v3794 = vunpack.c.l.b16 %v3482
        %v3795 = vunpack.c.l.b16 %v3483
        %v3796 = vpack.c.b16 %v3781, %v3780
        %v3797 = vpack.c.b16 %v3783, %v3782
        %v3798 = vpack.c.b16 %v3785, %v3784
        %v3799 = vpack.c.b16 %v3787, %v3786
        %v3800 = vpack.c.b16 %v3789, %v3788
        %v3801 = vpack.c.b16 %v3791, %v3790
        %v3802 = vpack.c.b16 %v3793, %v3792
        %v3803 = vpack.c.b16 %v3795, %v3794
        %v3812 = vunpack.c.l.b16 %v3505
        %v3813 = vunpack.c.l.b16 %v3515
        %v3814 = vunpack.c.l.b16 %v3529
        %v3815 = vunpack.c.l.b16 %v3539
        %v3816 = vunpack.c.l.b16 %v3553
        %v3817 = vunpack.c.l.b16 %v3563
        %v3818 = vunpack.c.l.b16 %v3577
        %v3819 = vunpack.c.l.b16 %v3587
        %v3820 = vunpack.c.l.b16 %v3601
        %v3821 = vunpack.c.l.b16 %v3611
        %v3822 = vunpack.c.l.b16 %v3625
        %v3823 = vunpack.c.l.b16 %v3635
        %v3824 = vunpack.c.l.b16 %v3649
        %v3825 = vunpack.c.l.b16 %v3659
        %v3826 = vunpack.c.l.b16 %v3673
        %v3827 = vunpack.c.l.b16 %v3683
        %v3828 = vpack.c.b16 %v3813, %v3812
        %v3829 = vpack.c.b16 %v3815, %v3814
        %v3830 = vpack.c.b16 %v3817, %v3816
        %v3831 = vpack.c.b16 %v3819, %v3818
        %v3832 = vpack.c.b16 %v3821, %v3820
        %v3833 = vpack.c.b16 %v3823, %v3822
        %v3834 = vpack.c.b16 %v3825, %v3824
        %v3835 = vpack.c.b16 %v3827, %v3826
        %v3844 = vunpack.c.l.b16 %v3719
        %v3845 = vunpack.c.l.b16 %v3722
        %v3846 = vunpack.c.l.b16 %v3726
        %v3847 = vunpack.c.l.b16 %v3729
        %v3848 = vunpack.c.l.b16 %v3733
        %v3849 = vunpack.c.l.b16 %v3736
        %v3850 = vunpack.c.l.b16 %v3740
        %v3851 = vunpack.c.l.b16 %v3743
        %v3852 = vunpack.c.l.b16 %v3747
        %v3853 = vunpack.c.l.b16 %v3750
        %v3854 = vunpack.c.l.b16 %v3754
        %v3855 = vunpack.c.l.b16 %v3757
        %v3856 = vunpack.c.l.b16 %v3761
        %v3857 = vunpack.c.l.b16 %v3764
        %v3858 = vunpack.c.l.b16 %v3768
        %v3859 = vunpack.c.l.b16 %v3771
        %v3860 = vpack.c.b16 %v3845, %v3844
        %v3861 = vpack.c.b16 %v3847, %v3846
        %v3862 = vpack.c.b16 %v3849, %v3848
        %v3863 = vpack.c.b16 %v3851, %v3850
        %v3864 = vpack.c.b16 %v3853, %v3852
        %v3865 = vpack.c.b16 %v3855, %v3854
        %v3866 = vpack.c.b16 %v3857, %v3856
        %v3867 = vpack.c.b16 %v3859, %v3858
        %s3876 = scalar_lea.vmem %s3, 192
        %v3877 = vld [vmem:[%s3876] sm:$0xf]
        %v3878 = vld [vmem:[%s3876 + $0x4] sm:$0xf]
        %v3879 = vld [vmem:[%s3876 + $0x8] sm:$0xf]
        %v3880 = vld [vmem:[%s3876 + $0xc] sm:$0xf]
        %v3881 = vld [vmem:[%s3876 + $0x10] sm:$0xf]
        %v3882 = vld [vmem:[%s3876 + $0x14] sm:$0xf]
        %v3883 = vld [vmem:[%s3876 + $0x18] sm:$0xf]
        %v3884 = vld [vmem:[%s3876 + $0x1c] sm:$0xf]
        %v3885 = vld [vmem:[%s3876 + $0x20] sm:$0xf]
        %v3886 = vld [vmem:[%s3876 + $0x24] sm:$0xf]
        %v3887 = vld [vmem:[%s3876 + $0x28] sm:$0xf]
        %v3888 = vld [vmem:[%s3876 + $0x2c] sm:$0xf]
        %v3889 = vld [vmem:[%s3876 + $0x30] sm:$0xf]
        %v3890 = vld [vmem:[%s3876 + $0x34] sm:$0xf]
        %v3891 = vld [vmem:[%s3876 + $0x38] sm:$0xf]
        %v3892 = vld [vmem:[%s3876 + $0x3c] sm:$0xf]
        %v3893 = vld [vmem:[%s3876 + $0x40] sm:$0xf]
        %v3894 = vld [vmem:[%s3876 + $0x44] sm:$0xf]
        %v3895 = vld [vmem:[%s3876 + $0x48] sm:$0xf]
        %v3896 = vld [vmem:[%s3876 + $0x4c] sm:$0xf]
        %v3897 = vld [vmem:[%s3876 + $0x50] sm:$0xf]
        %v3898 = vld [vmem:[%s3876 + $0x54] sm:$0xf]
        %v3899 = vld [vmem:[%s3876 + $0x58] sm:$0xf]
        %v3900 = vld [vmem:[%s3876 + $0x5c] sm:$0xf]
        %v3901 = vld [vmem:[%s3876 + $0x60] sm:$0xf]
        %v3902 = vld [vmem:[%s3876 + $0x64] sm:$0xf]
        %v3903 = vld [vmem:[%s3876 + $0x68] sm:$0xf]
        %v3904 = vld [vmem:[%s3876 + $0x6c] sm:$0xf]
        %v3905 = vld [vmem:[%s3876 + $0x70] sm:$0xf]
        %v3906 = vld [vmem:[%s3876 + $0x74] sm:$0xf]
        %v3907 = vld [vmem:[%s3876 + $0x78] sm:$0xf]
        %v3908 = vld [vmem:[%s3876 + $0x7c] sm:$0xf]
        %v3909 = vld [vmem:[%s3876 + $0x80] sm:$0xf]
        %v3910 = vld [vmem:[%s3876 + $0x84] sm:$0xf]
        %v3911 = vld [vmem:[%s3876 + $0x88] sm:$0xf]
        %v3912 = vld [vmem:[%s3876 + $0x8c] sm:$0xf]
        %v3913 = vld [vmem:[%s3876 + $0x90] sm:$0xf]
        %v3914 = vld [vmem:[%s3876 + $0x94] sm:$0xf]
        %v3915 = vld [vmem:[%s3876 + $0x98] sm:$0xf]
        %v3916 = vld [vmem:[%s3876 + $0x9c] sm:$0xf]
        %v3917 = vld [vmem:[%s3876 + $0xa0] sm:$0xf]
        %v3918 = vld [vmem:[%s3876 + $0xa4] sm:$0xf]
        %v3919 = vld [vmem:[%s3876 + $0xa8] sm:$0xf]
        %v3920 = vld [vmem:[%s3876 + $0xac] sm:$0xf]
        %v3921 = vld [vmem:[%s3876 + $0xb0] sm:$0xf]
        %v3922 = vld [vmem:[%s3876 + $0xb4] sm:$0xf]
        %v3923 = vld [vmem:[%s3876 + $0xb8] sm:$0xf]
        %v3924 = vld [vmem:[%s3876 + $0xbc] sm:$0xf]
        %v3973 = vunpack.c.l.b16 %v3877
        %v3974 = vunpack.c.l.b16 %v3878
        %v3975 = vunpack.c.l.b16 %v3879
        %v3976 = vunpack.c.l.b16 %v3880
        %v3977 = vunpack.c.l.b16 %v3881
        %v3978 = vunpack.c.l.b16 %v3882
        %v3979 = vunpack.c.l.b16 %v3883
        %v3980 = vunpack.c.l.b16 %v3884
        %v3981 = vunpack.c.l.b16 %v3885
        %v3982 = vunpack.c.l.b16 %v3886
        %v3983 = vunpack.c.l.b16 %v3887
        %v3984 = vunpack.c.l.b16 %v3888
        %v3985 = vunpack.c.l.b16 %v3889
        %v3986 = vunpack.c.l.b16 %v3890
        %v3987 = vunpack.c.l.b16 %v3891
        %v3988 = vunpack.c.l.b16 %v3892
        %v3989 = vunpack.c.l.b16 %v3893
        %v3990 = vunpack.c.l.b16 %v3894
        %v3991 = vunpack.c.l.b16 %v3895
        %v3992 = vunpack.c.l.b16 %v3896
        %v3993 = vunpack.c.l.b16 %v3897
        %v3994 = vunpack.c.l.b16 %v3898
        %v3995 = vunpack.c.l.b16 %v3899
        %v3996 = vunpack.c.l.b16 %v3900
        %v3997 = vunpack.c.l.b16 %v3901
        %v3998 = vunpack.c.l.b16 %v3902
        %v3999 = vunpack.c.l.b16 %v3903
        %v4000 = vunpack.c.l.b16 %v3904
        %v4001 = vunpack.c.l.b16 %v3905
        %v4002 = vunpack.c.l.b16 %v3906
        %v4003 = vunpack.c.l.b16 %v3907
        %v4004 = vunpack.c.l.b16 %v3908
        %v4005 = vunpack.c.l.b16 %v3909
        %v4006 = vunpack.c.l.b16 %v3910
        %v4007 = vunpack.c.l.b16 %v3911
        %v4008 = vunpack.c.l.b16 %v3912
        %v4009 = vunpack.c.l.b16 %v3913
        %v4010 = vunpack.c.l.b16 %v3914
        %v4011 = vunpack.c.l.b16 %v3915
        %v4012 = vunpack.c.l.b16 %v3916
        %v4013 = vunpack.c.l.b16 %v3917
        %v4014 = vunpack.c.l.b16 %v3918
        %v4015 = vunpack.c.l.b16 %v3919
        %v4016 = vunpack.c.l.b16 %v3920
        %v4017 = vunpack.c.l.b16 %v3921
        %v4018 = vunpack.c.l.b16 %v3922
        %v4019 = vunpack.c.l.b16 %v3923
        %v4020 = vunpack.c.l.b16 %v3924
        %v4021 = vpack.c.b16 %v3974, %v3973
        %v4022 = vpack.c.b16 %v3976, %v3975
        %v4023 = vpack.c.b16 %v3978, %v3977
        %v4024 = vpack.c.b16 %v3980, %v3979
        %v4025 = vpack.c.b16 %v3982, %v3981
        %v4026 = vpack.c.b16 %v3984, %v3983
        %v4027 = vpack.c.b16 %v3986, %v3985
        %v4028 = vpack.c.b16 %v3988, %v3987
        %v4029 = vpack.c.b16 %v3990, %v3989
        %v4030 = vpack.c.b16 %v3992, %v3991
        %v4031 = vpack.c.b16 %v3994, %v3993
        %v4032 = vpack.c.b16 %v3996, %v3995
        %v4033 = vpack.c.b16 %v3998, %v3997
        %v4034 = vpack.c.b16 %v4000, %v3999
        %v4035 = vpack.c.b16 %v4002, %v4001
        %v4036 = vpack.c.b16 %v4004, %v4003
        %v4037 = vpack.c.b16 %v4006, %v4005
        %v4038 = vpack.c.b16 %v4008, %v4007
        %v4039 = vpack.c.b16 %v4010, %v4009
        %v4040 = vpack.c.b16 %v4012, %v4011
        %v4041 = vpack.c.b16 %v4014, %v4013
        %v4042 = vpack.c.b16 %v4016, %v4015
        %v4043 = vpack.c.b16 %v4018, %v4017
        %v4044 = vpack.c.b16 %v4020, %v4019
        %4069 = vmatprep.subr.bf16.mxu0 0
        %4070 = vmatpush1.bf16.msra.mxu0 %v4021
        %4071 = vmatprep.subr.bf16.mxu0 0
        %4072 = vmatpush1.bf16.msra.mxu0 %v4022
        %4073 = vmatprep.subr.bf16.mxu0 0
        %4074 = vmatpush1.bf16.msra.mxu0 %v4023
        %4075 = vmatprep.subr.bf16.mxu0 0
        %4076 = vmatpush1.bf16.msra.mxu0 %v4024
        %4077 = vmatprep.subr.bf16.mxu0 0
        %4078 = vmatpush1.bf16.msra.mxu0 %v4025
        %4079 = vmatprep.subr.bf16.mxu0 0
        %4080 = vmatpush1.bf16.msra.mxu0 %v4026
        %4081 = vmatprep.subr.bf16.mxu0 0
        %4082 = vmatpush1.bf16.msra.mxu0 %v4027
        %4083 = vmatprep.subr.bf16.mxu0 0
        %4084 = vmatpush1.bf16.msra.mxu0 %v4028
        %4085 = vmatprep.subr.bf16.mxu0 0
        %4086 = vmatpush1.bf16.msra.mxu0 %v4029
        %4087 = vmatprep.subr.bf16.mxu0 0
        %4088 = vmatpush1.bf16.msra.mxu0 %v4030
        %4089 = vmatprep.subr.bf16.mxu0 0
        %4090 = vmatpush1.bf16.msra.mxu0 %v4031
        %4091 = vmatprep.subr.bf16.mxu0 0
        %4092 = vmatpush1.bf16.msra.mxu0 %v4032
        %4093 = vmatprep.subr.bf16.mxu0 0
        %4094 = vmatpush1.bf16.msra.mxu0 %v4033
        %4095 = vmatprep.subr.bf16.mxu0 0
        %4096 = vmatpush1.bf16.msra.mxu0 %v4034
        %4097 = vmatprep.subr.bf16.mxu0 0
        %4098 = vmatpush1.bf16.msra.mxu0 %v4035
        %4099 = vmatprep.subr.bf16.mxu0 0
        %4100 = vmatpush1.bf16.msra.mxu0 %v4036
        %4101 = vmatprep.mubr.bf16.mxu0 %v3828
        %4102 = vmatmul.mubr.bf16.gmra.mrb[0].mxu0 %v3796
        %v4103 = vpop.f32.mrb[0].mxu0
        %v4104 = vadd.f32 0.0, %v4103
        %v4105 = vpop.f32.mrb[0].mxu0
        %v4106 = vpop.f32.mrb[0].mxu0
        %v4107 = vadd.f32 0.0, %v4106
        %v4108 = vpop.f32.mrb[0].mxu0
        %4109 = vmatprep.mubr.bf16.mxu0 %v3829
        %4110 = vmatmul.mubr.bf16.gmra.mrb[0].mxu0 %v3797
        %v4111 = vpop.f32.mrb[0].mxu0
        %v4112 = vadd.f32 0.0, %v4111
        %v4113 = vpop.f32.mrb[0].mxu0
        %v4114 = vpop.f32.mrb[0].mxu0
        %v4115 = vadd.f32 0.0, %v4114
        %v4116 = vpop.f32.mrb[0].mxu0
        %4117 = vmatprep.mubr.bf16.mxu0 %v3830
        %4118 = vmatmul.mubr.bf16.gmra.mrb[0].mxu0 %v3798
        %v4119 = vpop.f32.mrb[0].mxu0
        %v4120 = vadd.f32 0.0, %v4119
        %v4121 = vpop.f32.mrb[0].mxu0
        %v4122 = vpop.f32.mrb[0].mxu0
        %v4123 = vadd.f32 0.0, %v4122
        %v4124 = vpop.f32.mrb[0].mxu0
        %4125 = vmatprep.mubr.bf16.mxu0 %v3831
        %4126 = vmatmul.mubr.bf16.gmra.mrb[0].mxu0 %v3799
        %v4127 = vpop.f32.mrb[0].mxu0
        %v4128 = vadd.f32 0.0, %v4127
        %v4129 = vpop.f32.mrb[0].mxu0
        %v4130 = vpop.f32.mrb[0].mxu0
        %v4131 = vadd.f32 0.0, %v4130
        %v4132 = vpop.f32.mrb[0].mxu0
        %4133 = vmatprep.mubr.bf16.mxu0 %v3832
        %4134 = vmatmul.mubr.bf16.gmra.mrb[0].mxu0 %v3800
        %v4135 = vpop.f32.mrb[0].mxu0
        %v4136 = vadd.f32 0.0, %v4135
        %v4137 = vpop.f32.mrb[0].mxu0
        %v4138 = vpop.f32.mrb[0].mxu0
        %v4139 = vadd.f32 0.0, %v4138
        %v4140 = vpop.f32.mrb[0].mxu0
        %4141 = vmatprep.mubr.bf16.mxu0 %v3833
        %4142 = vmatmul.mubr.bf16.gmra.mrb[0].mxu0 %v3801
        %v4143 = vpop.f32.mrb[0].mxu0
        %v4144 = vadd.f32 0.0, %v4143
        %v4145 = vpop.f32.mrb[0].mxu0
        %v4146 = vpop.f32.mrb[0].mxu0
        %v4147 = vadd.f32 0.0, %v4146
        %v4148 = vpop.f32.mrb[0].mxu0
        %4149 = vmatprep.mubr.bf16.mxu0 %v3834
        %4150 = vmatmul.mubr.bf16.gmra.mrb[0].mxu0 %v3802
        %v4151 = vpop.f32.mrb[0].mxu0
        %v4152 = vadd.f32 0.0, %v4151
        %v4153 = vpop.f32.mrb[0].mxu0
        %v4154 = vpop.f32.mrb[0].mxu0
        %v4155 = vadd.f32 0.0, %v4154
        %v4156 = vpop.f32.mrb[0].mxu0
        %4157 = vmatprep.mubr.bf16.mxu0 %v3835
        %4158 = vmatmul.mubr.bf16.gmra.mrb[0].mxu0 %v3803
        %v4159 = vpop.f32.mrb[0].mxu0
        %v4160 = vadd.f32 0.0, %v4159
        %v4161 = vpop.f32.mrb[0].mxu0
        %v4162 = vpop.f32.mrb[0].mxu0
        %v4163 = vadd.f32 0.0, %v4162
        %v4164 = vpop.f32.mrb[0].mxu0
        %4165 = vdwg.mxu0
        %4166 = vmatprep.subr.bf16.mxu0 0
        %4167 = vmatpush1.bf16.msra.mxu0 %v4037
        %4168 = vmatprep.subr.bf16.mxu0 0
        %4169 = vmatpush1.bf16.msra.mxu0 %v4038
        %4170 = vmatprep.subr.bf16.mxu0 0
        %4171 = vmatpush1.bf16.msra.mxu0 %v4039
        %4172 = vmatprep.subr.bf16.mxu0 0
        %4173 = vmatpush1.bf16.msra.mxu0 %v4040
        %4174 = vmatprep.subr.bf16.mxu0 0
        %4175 = vmatpush1.bf16.msra.mxu0 %v4041
        %4176 = vmatprep.subr.bf16.mxu0 0
        %4177 = vmatpush1.bf16.msra.mxu0 %v4042
        %4178 = vmatprep.subr.bf16.mxu0 0
        %4179 = vmatpush1.bf16.msra.mxu0 %v4043
        %4180 = vmatprep.subr.bf16.mxu0 0
        %4181 = vmatpush1.bf16.msra.mxu0 %v4044
        %4182 = vmatprep.subr.bf16.mxu0 0
        %4183 = vmatpush1.bf16.msra.mxu0 0
        %4184 = vmatprep.subr.bf16.mxu0 0
        %4185 = vmatpush1.bf16.msra.mxu0 0
        %4186 = vmatprep.subr.bf16.mxu0 0
        %4187 = vmatpush1.bf16.msra.mxu0 0
        %4188 = vmatprep.subr.bf16.mxu0 0
        %4189 = vmatpush1.bf16.msra.mxu0 0
        %4190 = vmatprep.subr.bf16.mxu0 0
        %4191 = vmatpush1.bf16.msra.mxu0 0
        %4192 = vmatprep.subr.bf16.mxu0 0
        %4193 = vmatpush1.bf16.msra.mxu0 0
        %4194 = vmatprep.subr.bf16.mxu0 0
        %4195 = vmatpush1.bf16.msra.mxu0 0
        %4196 = vmatprep.subr.bf16.mxu0 0
        %4197 = vmatpush1.bf16.msra.mxu0 0
        %4198 = vmatprep.mubr.bf16.mxu0 0
        %4199 = vmatmul.mubr.bf16.gmra.mrb[0].mxu0 %v3860
        %v4200 = vpop.f32.mrb[0].mxu0
        %v4201 = vadd.f32 %v4104, %v4200
        %v4202 = vpop.f32.mrb[0].mxu0
        %v4203 = vpop.f32.mrb[0].mxu0
        %v4204 = vadd.f32 %v4107, %v4203
        %v4205 = vpop.f32.mrb[0].mxu0
        %4206 = vmatprep.mubr.bf16.mxu0 0
        %4207 = vmatmul.mubr.bf16.gmra.mrb[0].mxu0 %v3861
        %v4208 = vpop.f32.mrb[0].mxu0
        %v4209 = vadd.f32 %v4112, %v4208
        %v4210 = vpop.f32.mrb[0].mxu0
        %v4211 = vpop.f32.mrb[0].mxu0
        %v4212 = vadd.f32 %v4115, %v4211
        %v4213 = vpop.f32.mrb[0].mxu0
        %4214 = vmatprep.mubr.bf16.mxu0 0
        %4215 = vmatmul.mubr.bf16.gmra.mrb[0].mxu0 %v3862
        %v4216 = vpop.f32.mrb[0].mxu0
        %v4217 = vadd.f32 %v4120, %v4216
        %v4218 = vpop.f32.mrb[0].mxu0
        %v4219 = vpop.f32.mrb[0].mxu0
        %v4220 = vadd.f32 %v4123, %v4219
        %v4221 = vpop.f32.mrb[0].mxu0
        %4222 = vmatprep.mubr.bf16.mxu0 0
        %4223 = vmatmul.mubr.bf16.gmra.mrb[0].mxu0 %v3863
        %v4224 = vpop.f32.mrb[0].mxu0
        %v4225 = vadd.f32 %v4128, %v4224
        %v4226 = vpop.f32.mrb[0].mxu0
        %v4227 = vpop.f32.mrb[0].mxu0
        %v4228 = vadd.f32 %v4131, %v4227
        %v4229 = vpop.f32.mrb[0].mxu0
        %4230 = vmatprep.mubr.bf16.mxu0 0
        %4231 = vmatmul.mubr.bf16.gmra.mrb[0].mxu0 %v3864
        %v4232 = vpop.f32.mrb[0].mxu0
        %v4233 = vadd.f32 %v4136, %v4232
        %v4234 = vpop.f32.mrb[0].mxu0
        %v4235 = vpop.f32.mrb[0].mxu0
        %v4236 = vadd.f32 %v4139, %v4235
        %v4237 = vpop.f32.mrb[0].mxu0
        %4238 = vmatprep.mubr.bf16.mxu0 0
        %4239 = vmatmul.mubr.bf16.gmra.mrb[0].mxu0 %v3865
        %v4240 = vpop.f32.mrb[0].mxu0
        %v4241 = vadd.f32 %v4144, %v4240
        %v4242 = vpop.f32.mrb[0].mxu0
        %v4243 = vpop.f32.mrb[0].mxu0
        %v4244 = vadd.f32 %v4147, %v4243
        %v4245 = vpop.f32.mrb[0].mxu0
        %4246 = vmatprep.mubr.bf16.mxu0 0
        %4247 = vmatmul.mubr.bf16.gmra.mrb[0].mxu0 %v3866
        %v4248 = vpop.f32.mrb[0].mxu0
        %v4249 = vadd.f32 %v4152, %v4248
        %v4250 = vpop.f32.mrb[0].mxu0
        %v4251 = vpop.f32.mrb[0].mxu0
        %v4252 = vadd.f32 %v4155, %v4251
        %v4253 = vpop.f32.mrb[0].mxu0
        %4254 = vmatprep.mubr.bf16.mxu0 0
        %4255 = vmatmul.mubr.bf16.gmra.mrb[0].mxu0 %v3867
        %v4256 = vpop.f32.mrb[0].mxu0
        %v4257 = vadd.f32 %v4160, %v4256
        %v4258 = vpop.f32.mrb[0].mxu0
        %v4259 = vpop.f32.mrb[0].mxu0
        %v4260 = vadd.f32 %v4163, %v4259
        %v4261 = vpop.f32.mrb[0].mxu0
        %4262 = vdwg.mxu0
        %v4311 = vunpack.c.l.b16 %v3419
        %v4312 = vunpack.c.l.b16 %v3420
        %v4313 = vunpack.c.l.b16 %v3421
        %v4314 = vunpack.c.l.b16 %v3422
        %v4315 = vunpack.c.l.b16 %v3423
        %v4316 = vunpack.c.l.b16 %v3424
        %v4317 = vunpack.c.l.b16 %v3425
        %v4318 = vunpack.c.l.b16 %v3426
        %v4319 = vunpack.c.l.b16 %v3427
        %v4320 = vunpack.c.l.b16 %v3428
        %v4321 = vunpack.c.l.b16 %v3429
        %v4322 = vunpack.c.l.b16 %v3430
        %v4323 = vunpack.c.l.b16 %v3431
        %v4324 = vunpack.c.l.b16 %v3432
        %v4325 = vunpack.c.l.b16 %v3433
        %v4326 = vunpack.c.l.b16 %v3434
        %v4327 = vunpack.c.l.b16 %v3435
        %v4328 = vunpack.c.l.b16 %v3436
        %v4329 = vunpack.c.l.b16 %v3437
        %v4330 = vunpack.c.l.b16 %v3438
        %v4331 = vunpack.c.l.b16 %v3439
        %v4332 = vunpack.c.l.b16 %v3440
        %v4333 = vunpack.c.l.b16 %v3441
        %v4334 = vunpack.c.l.b16 %v3442
        %v4335 = vunpack.c.l.b16 %v3443
        %v4336 = vunpack.c.l.b16 %v3444
        %v4337 = vunpack.c.l.b16 %v3445
        %v4338 = vunpack.c.l.b16 %v3446
        %v4339 = vunpack.c.l.b16 %v3447
        %v4340 = vunpack.c.l.b16 %v3448
        %v4341 = vunpack.c.l.b16 %v3449
        %v4342 = vunpack.c.l.b16 %v3450
        %v4343 = vunpack.c.l.b16 %v3451
        %v4344 = vunpack.c.l.b16 %v3452
        %v4345 = vunpack.c.l.b16 %v3453
        %v4346 = vunpack.c.l.b16 %v3454
        %v4347 = vunpack.c.l.b16 %v3455
        %v4348 = vunpack.c.l.b16 %v3456
        %v4349 = vunpack.c.l.b16 %v3457
        %v4350 = vunpack.c.l.b16 %v3458
        %v4351 = vunpack.c.l.b16 %v3459
        %v4352 = vunpack.c.l.b16 %v3460
        %v4353 = vunpack.c.l.b16 %v3461
        %v4354 = vunpack.c.l.b16 %v3462
        %v4355 = vunpack.c.l.b16 %v3463
        %v4356 = vunpack.c.l.b16 %v3464
        %v4357 = vunpack.c.l.b16 %v3465
        %v4358 = vunpack.c.l.b16 %v3466
        %v4359 = vpack.c.b16 %v4312, %v4311
        %v4360 = vpack.c.b16 %v4314, %v4313
        %v4361 = vpack.c.b16 %v4316, %v4315
        %v4362 = vpack.c.b16 %v4318, %v4317
        %v4363 = vpack.c.b16 %v4320, %v4319
        %v4364 = vpack.c.b16 %v4322, %v4321
        %v4365 = vpack.c.b16 %v4324, %v4323
        %v4366 = vpack.c.b16 %v4326, %v4325
        %v4367 = vpack.c.b16 %v4328, %v4327
        %v4368 = vpack.c.b16 %v4330, %v4329
        %v4369 = vpack.c.b16 %v4332, %v4331
        %v4370 = vpack.c.b16 %v4334, %v4333
        %v4371 = vpack.c.b16 %v4336, %v4335
        %v4372 = vpack.c.b16 %v4338, %v4337
        %v4373 = vpack.c.b16 %v4340, %v4339
        %v4374 = vpack.c.b16 %v4342, %v4341
        %v4375 = vpack.c.b16 %v4344, %v4343
        %v4376 = vpack.c.b16 %v4346, %v4345
        %v4377 = vpack.c.b16 %v4348, %v4347
        %v4378 = vpack.c.b16 %v4350, %v4349
        %v4379 = vpack.c.b16 %v4352, %v4351
        %v4380 = vpack.c.b16 %v4354, %v4353
        %v4381 = vpack.c.b16 %v4356, %v4355
        %v4382 = vpack.c.b16 %v4358, %v4357
        %4407 = vmatprep.subr.bf16.mxu0 0
        %4408 = vmatpush1.bf16.msra.mxu0 %v4359
        %4409 = vmatprep.subr.bf16.mxu0 0
        %4410 = vmatpush1.bf16.msra.mxu0 %v4360
        %4411 = vmatprep.subr.bf16.mxu0 0
        %4412 = vmatpush1.bf16.msra.mxu0 %v4361
        %4413 = vmatprep.subr.bf16.mxu0 0
        %4414 = vmatpush1.bf16.msra.mxu0 %v4362
        %4415 = vmatprep.subr.bf16.mxu0 0
        %4416 = vmatpush1.bf16.msra.mxu0 %v4363
        %4417 = vmatprep.subr.bf16.mxu0 0
        %4418 = vmatpush1.bf16.msra.mxu0 %v4364
        %4419 = vmatprep.subr.bf16.mxu0 0
        %4420 = vmatpush1.bf16.msra.mxu0 %v4365
        %4421 = vmatprep.subr.bf16.mxu0 0
        %4422 = vmatpush1.bf16.msra.mxu0 %v4366
        %4423 = vmatprep.subr.bf16.mxu0 0
        %4424 = vmatpush1.bf16.msra.mxu0 %v4367
        %4425 = vmatprep.subr.bf16.mxu0 0
        %4426 = vmatpush1.bf16.msra.mxu0 %v4368
        %4427 = vmatprep.subr.bf16.mxu0 0
        %4428 = vmatpush1.bf16.msra.mxu0 %v4369
        %4429 = vmatprep.subr.bf16.mxu0 0
        %4430 = vmatpush1.bf16.msra.mxu0 %v4370
        %4431 = vmatprep.subr.bf16.mxu0 0
        %4432 = vmatpush1.bf16.msra.mxu0 %v4371
        %4433 = vmatprep.subr.bf16.mxu0 0
        %4434 = vmatpush1.bf16.msra.mxu0 %v4372
        %4435 = vmatprep.subr.bf16.mxu0 0
        %4436 = vmatpush1.bf16.msra.mxu0 %v4373
        %4437 = vmatprep.subr.bf16.mxu0 0
        %4438 = vmatpush1.bf16.msra.mxu0 %v4374
        %4439 = vmatprep.mubr.bf16.mxu0 %v3371
        %4440 = vmatmul.mubr.bf16.gmra.mrb[0].mxu0 %v3339
        %v4441 = vpop.f32.mrb[0].mxu0
        %v4442 = vadd.f32 %v4201, %v4441
        %v4443 = vpop.f32.mrb[0].mxu0
        %v4444 = vpop.f32.mrb[0].mxu0
        %v4445 = vadd.f32 %v4204, %v4444
        %v4446 = vpop.f32.mrb[0].mxu0
        %4447 = vmatprep.mubr.bf16.mxu0 %v3372
        %4448 = vmatmul.mubr.bf16.gmra.mrb[0].mxu0 %v3340
        %v4449 = vpop.f32.mrb[0].mxu0
        %v4450 = vadd.f32 %v4209, %v4449
        %v4451 = vpop.f32.mrb[0].mxu0
        %v4452 = vpop.f32.mrb[0].mxu0
        %v4453 = vadd.f32 %v4212, %v4452
        %v4454 = vpop.f32.mrb[0].mxu0
        %4455 = vmatprep.mubr.bf16.mxu0 %v3373
        %4456 = vmatmul.mubr.bf16.gmra.mrb[0].mxu0 %v3341
        %v4457 = vpop.f32.mrb[0].mxu0
        %v4458 = vadd.f32 %v4217, %v4457
        %v4459 = vpop.f32.mrb[0].mxu0
        %v4460 = vpop.f32.mrb[0].mxu0
        %v4461 = vadd.f32 %v4220, %v4460
        %v4462 = vpop.f32.mrb[0].mxu0
        %4463 = vmatprep.mubr.bf16.mxu0 %v3374
        %4464 = vmatmul.mubr.bf16.gmra.mrb[0].mxu0 %v3342
        %v4465 = vpop.f32.mrb[0].mxu0
        %v4466 = vadd.f32 %v4225, %v4465
        %v4467 = vpop.f32.mrb[0].mxu0
        %v4468 = vpop.f32.mrb[0].mxu0
        %v4469 = vadd.f32 %v4228, %v4468
        %v4470 = vpop.f32.mrb[0].mxu0
        %4471 = vmatprep.mubr.bf16.mxu0 %v3375
        %4472 = vmatmul.mubr.bf16.gmra.mrb[0].mxu0 %v3343
        %v4473 = vpop.f32.mrb[0].mxu0
        %v4474 = vadd.f32 %v4233, %v4473
        %v4475 = vpop.f32.mrb[0].mxu0
        %v4476 = vpop.f32.mrb[0].mxu0
        %v4477 = vadd.f32 %v4236, %v4476
        %v4478 = vpop.f32.mrb[0].mxu0
        %4479 = vmatprep.mubr.bf16.mxu0 %v3376
        %4480 = vmatmul.mubr.bf16.gmra.mrb[0].mxu0 %v3344
        %v4481 = vpop.f32.mrb[0].mxu0
        %v4482 = vadd.f32 %v4241, %v4481
        %v4483 = vpop.f32.mrb[0].mxu0
        %v4484 = vpop.f32.mrb[0].mxu0
        %v4485 = vadd.f32 %v4244, %v4484
        %v4486 = vpop.f32.mrb[0].mxu0
        %4487 = vmatprep.mubr.bf16.mxu0 %v3377
        %4488 = vmatmul.mubr.bf16.gmra.mrb[0].mxu0 %v3345
        %v4489 = vpop.f32.mrb[0].mxu0
        %v4490 = vadd.f32 %v4249, %v4489
        %v4491 = vpop.f32.mrb[0].mxu0
        %v4492 = vpop.f32.mrb[0].mxu0
        %v4493 = vadd.f32 %v4252, %v4492
        %v4494 = vpop.f32.mrb[0].mxu0
        %4495 = vmatprep.mubr.bf16.mxu0 %v3378
        %4496 = vmatmul.mubr.bf16.gmra.mrb[0].mxu0 %v3346
        %v4497 = vpop.f32.mrb[0].mxu0
        %v4498 = vadd.f32 %v4257, %v4497
        %v4499 = vpop.f32.mrb[0].mxu0
        %v4500 = vpop.f32.mrb[0].mxu0
        %v4501 = vadd.f32 %v4260, %v4500
        %v4502 = vpop.f32.mrb[0].mxu0
        %4503 = vdwg.mxu0
        %4504 = vmatprep.subr.bf16.mxu0 0
        %4505 = vmatpush1.bf16.msra.mxu0 %v4375
        %4506 = vmatprep.subr.bf16.mxu0 0
        %4507 = vmatpush1.bf16.msra.mxu0 %v4376
        %4508 = vmatprep.subr.bf16.mxu0 0
        %4509 = vmatpush1.bf16.msra.mxu0 %v4377
        %4510 = vmatprep.subr.bf16.mxu0 0
        %4511 = vmatpush1.bf16.msra.mxu0 %v4378
        %4512 = vmatprep.subr.bf16.mxu0 0
        %4513 = vmatpush1.bf16.msra.mxu0 %v4379
        %4514 = vmatprep.subr.bf16.mxu0 0
        %4515 = vmatpush1.bf16.msra.mxu0 %v4380
        %4516 = vmatprep.subr.bf16.mxu0 0
        %4517 = vmatpush1.bf16.msra.mxu0 %v4381
        %4518 = vmatprep.subr.bf16.mxu0 0
        %4519 = vmatpush1.bf16.msra.mxu0 %v4382
        %4520 = vmatprep.subr.bf16.mxu0 0
        %4521 = vmatpush1.bf16.msra.mxu0 0
        %4522 = vmatprep.subr.bf16.mxu0 0
        %4523 = vmatpush1.bf16.msra.mxu0 0
        %4524 = vmatprep.subr.bf16.mxu0 0
        %4525 = vmatpush1.bf16.msra.mxu0 0
        %4526 = vmatprep.subr.bf16.mxu0 0
        %4527 = vmatpush1.bf16.msra.mxu0 0
        %4528 = vmatprep.subr.bf16.mxu0 0
        %4529 = vmatpush1.bf16.msra.mxu0 0
        %4530 = vmatprep.subr.bf16.mxu0 0
        %4531 = vmatpush1.bf16.msra.mxu0 0
        %4532 = vmatprep.subr.bf16.mxu0 0
        %4533 = vmatpush1.bf16.msra.mxu0 0
        %4534 = vmatprep.subr.bf16.mxu0 0
        %4535 = vmatpush1.bf16.msra.mxu0 0
        %4536 = vmatprep.mubr.bf16.mxu0 0
        %4537 = vmatmul.mubr.bf16.gmra.mrb[0].mxu0 %v3403
        %v4538 = vpop.f32.mrb[0].mxu0
        %v4539 = vadd.f32 %v4442, %v4538
        %v4540 = vpop.f32.mrb[0].mxu0
        %v4541 = vpop.f32.mrb[0].mxu0
        %v4542 = vadd.f32 %v4445, %v4541
        %v4543 = vpop.f32.mrb[0].mxu0
        %4544 = vmatprep.mubr.bf16.mxu0 0
        %4545 = vmatmul.mubr.bf16.gmra.mrb[0].mxu0 %v3404
        %v4546 = vpop.f32.mrb[0].mxu0
        %v4547 = vadd.f32 %v4450, %v4546
        %v4548 = vpop.f32.mrb[0].mxu0
        %v4549 = vpop.f32.mrb[0].mxu0
        %v4550 = vadd.f32 %v4453, %v4549
        %v4551 = vpop.f32.mrb[0].mxu0
        %4552 = vmatprep.mubr.bf16.mxu0 0
        %4553 = vmatmul.mubr.bf16.gmra.mrb[0].mxu0 %v3405
        %v4554 = vpop.f32.mrb[0].mxu0
        %v4555 = vadd.f32 %v4458, %v4554
        %v4556 = vpop.f32.mrb[0].mxu0
        %v4557 = vpop.f32.mrb[0].mxu0
        %v4558 = vadd.f32 %v4461, %v4557
        %v4559 = vpop.f32.mrb[0].mxu0
        %4560 = vmatprep.mubr.bf16.mxu0 0
        %4561 = vmatmul.mubr.bf16.gmra.mrb[0].mxu0 %v3406
        %v4562 = vpop.f32.mrb[0].mxu0
        %v4563 = vadd.f32 %v4466, %v4562
        %v4564 = vpop.f32.mrb[0].mxu0
        %v4565 = vpop.f32.mrb[0].mxu0
        %v4566 = vadd.f32 %v4469, %v4565
        %v4567 = vpop.f32.mrb[0].mxu0
        %4568 = vmatprep.mubr.bf16.mxu0 0
        %4569 = vmatmul.mubr.bf16.gmra.mrb[0].mxu0 %v3407
        %v4570 = vpop.f32.mrb[0].mxu0
        %v4571 = vadd.f32 %v4474, %v4570
        %v4572 = vpop.f32.mrb[0].mxu0
        %v4573 = vpop.f32.mrb[0].mxu0
        %v4574 = vadd.f32 %v4477, %v4573
        %v4575 = vpop.f32.mrb[0].mxu0
        %4576 = vmatprep.mubr.bf16.mxu0 0
        %4577 = vmatmul.mubr.bf16.gmra.mrb[0].mxu0 %v3408
        %v4578 = vpop.f32.mrb[0].mxu0
        %v4579 = vadd.f32 %v4482, %v4578
        %v4580 = vpop.f32.mrb[0].mxu0
        %v4581 = vpop.f32.mrb[0].mxu0
        %v4582 = vadd.f32 %v4485, %v4581
        %v4583 = vpop.f32.mrb[0].mxu0
        %4584 = vmatprep.mubr.bf16.mxu0 0
        %4585 = vmatmul.mubr.bf16.gmra.mrb[0].mxu0 %v3409
        %v4586 = vpop.f32.mrb[0].mxu0
        %v4587 = vadd.f32 %v4490, %v4586
        %v4588 = vpop.f32.mrb[0].mxu0
        %v4589 = vpop.f32.mrb[0].mxu0
        %v4590 = vadd.f32 %v4493, %v4589
        %v4591 = vpop.f32.mrb[0].mxu0
        %4592 = vmatprep.mubr.bf16.mxu0 0
        %4593 = vmatmul.mubr.bf16.gmra.mrb[0].mxu0 %v3410
        %v4594 = vpop.f32.mrb[0].mxu0
        %v4595 = vadd.f32 %v4498, %v4594
        %v4596 = vpop.f32.mrb[0].mxu0
        %v4597 = vpop.f32.mrb[0].mxu0
        %v4598 = vadd.f32 %v4501, %v4597
        %v4599 = vpop.f32.mrb[0].mxu0
        %4600 = vdwg.mxu0
        %s4601 = scalar_lea.vmem [#allocation2], 24
        %v4602 = vld [vmem:[%s4601] sm:$0xf]
        %v4603 = vld [vmem:[%s4601 + $0x4] sm:$0xf]
        %v4604 = vld [vmem:[%s4601 + $0xc] sm:$0xf]
        %v4605 = vld [vmem:[%s4601 + $0x10] sm:$0xf]
        %v4606 = vld [vmem:[%s4601 + $0x18] sm:$0xf]
        %v4607 = vld [vmem:[%s4601 + $0x1c] sm:$0xf]
        %v4608 = vld [vmem:[%s4601 + $0x24] sm:$0xf]
        %v4609 = vld [vmem:[%s4601 + $0x28] sm:$0xf]
        %v4610 = vld [vmem:[%s4601 + $0x30] sm:$0xf]
        %v4611 = vld [vmem:[%s4601 + $0x34] sm:$0xf]
        %v4612 = vld [vmem:[%s4601 + $0x3c] sm:$0xf]
        %v4613 = vld [vmem:[%s4601 + $0x40] sm:$0xf]
        %v4614 = vld [vmem:[%s4601 + $0x48] sm:$0xf]
        %v4615 = vld [vmem:[%s4601 + $0x4c] sm:$0xf]
        %v4616 = vld [vmem:[%s4601 + $0x54] sm:$0xf]
        %v4617 = vld [vmem:[%s4601 + $0x58] sm:$0xf]
        %v4618 = vld [vmem:[%s4601 + $0x8] sm:$0x1]
        %v4619 = vld [vmem:[%s4601 + $0x14] sm:$0x1]
        %v4620 = vld [vmem:[%s4601 + $0x20] sm:$0x1]
        %v4621 = vld [vmem:[%s4601 + $0x2c] sm:$0x1]
        %v4622 = vld [vmem:[%s4601 + $0x38] sm:$0x1]
        %v4623 = vld [vmem:[%s4601 + $0x44] sm:$0x1]
        %v4624 = vld [vmem:[%s4601 + $0x50] sm:$0x1]
        %v4625 = vld [vmem:[%s4601 + $0x5c] sm:$0x1]
        %v4627 = vshrl.u32 %v4602, 16
        %v4629 = vrot.slane %v4627, 4
        %v4630 = vshll.u32 %v4602, 16
        %v4632 = vrot.slane %v4630, 5
        %v4633 = vor.u32 %v4629, %v4632
        %v4634 = vrot.slane %v4633, 4
        %v4636 = vshll.u32 %v4603, 16
        %v4638 = vrot.slane %v4636, 5
        %v4639 = vsel %vm296, %v4634, %v4638
        %v4640 = vshrl.u32 %v4603, 16
        %v4642 = vrot.slane %v4640, 4
        %v4643 = vor.u32 %v4642, %v4638
        %v4644 = vrot.slane %v4643, 4
        %v4646 = vshll.u32 %v4618, 16
        %v4648 = vrot.slane %v4646, 5
        %v4649 = vsel %vm296, %v4644, %v4648
        %v4651 = vshrl.u32 %v4604, 16
        %v4653 = vrot.slane %v4651, 4
        %v4654 = vshll.u32 %v4604, 16
        %v4656 = vrot.slane %v4654, 5
        %v4657 = vor.u32 %v4653, %v4656
        %v4658 = vrot.slane %v4657, 4
        %v4660 = vshll.u32 %v4605, 16
        %v4662 = vrot.slane %v4660, 5
        %v4663 = vsel %vm296, %v4658, %v4662
        %v4664 = vshrl.u32 %v4605, 16
        %v4666 = vrot.slane %v4664, 4
        %v4667 = vor.u32 %v4666, %v4662
        %v4668 = vrot.slane %v4667, 4
        %v4670 = vshll.u32 %v4619, 16
        %v4672 = vrot.slane %v4670, 5
        %v4673 = vsel %vm296, %v4668, %v4672
        %v4675 = vshrl.u32 %v4606, 16
        %v4677 = vrot.slane %v4675, 4
        %v4678 = vshll.u32 %v4606, 16
        %v4680 = vrot.slane %v4678, 5
        %v4681 = vor.u32 %v4677, %v4680
        %v4682 = vrot.slane %v4681, 4
        %v4684 = vshll.u32 %v4607, 16
        %v4686 = vrot.slane %v4684, 5
        %v4687 = vsel %vm296, %v4682, %v4686
        %v4688 = vshrl.u32 %v4607, 16
        %v4690 = vrot.slane %v4688, 4
        %v4691 = vor.u32 %v4690, %v4686
        %v4692 = vrot.slane %v4691, 4
        %v4694 = vshll.u32 %v4620, 16
        %v4696 = vrot.slane %v4694, 5
        %v4697 = vsel %vm296, %v4692, %v4696
        %v4699 = vshrl.u32 %v4608, 16
        %v4701 = vrot.slane %v4699, 4
        %v4702 = vshll.u32 %v4608, 16
        %v4704 = vrot.slane %v4702, 5
        %v4705 = vor.u32 %v4701, %v4704
        %v4706 = vrot.slane %v4705, 4
        %v4708 = vshll.u32 %v4609, 16
        %v4710 = vrot.slane %v4708, 5
        %v4711 = vsel %vm296, %v4706, %v4710
        %v4712 = vshrl.u32 %v4609, 16
        %v4714 = vrot.slane %v4712, 4
        %v4715 = vor.u32 %v4714, %v4710
        %v4716 = vrot.slane %v4715, 4
        %v4718 = vshll.u32 %v4621, 16
        %v4720 = vrot.slane %v4718, 5
        %v4721 = vsel %vm296, %v4716, %v4720
        %v4723 = vshrl.u32 %v4610, 16
        %v4725 = vrot.slane %v4723, 4
        %v4726 = vshll.u32 %v4610, 16
        %v4728 = vrot.slane %v4726, 5
        %v4729 = vor.u32 %v4725, %v4728
        %v4730 = vrot.slane %v4729, 4
        %v4732 = vshll.u32 %v4611, 16
        %v4734 = vrot.slane %v4732, 5
        %v4735 = vsel %vm296, %v4730, %v4734
        %v4736 = vshrl.u32 %v4611, 16
        %v4738 = vrot.slane %v4736, 4
        %v4739 = vor.u32 %v4738, %v4734
        %v4740 = vrot.slane %v4739, 4
        %v4742 = vshll.u32 %v4622, 16
        %v4744 = vrot.slane %v4742, 5
        %v4745 = vsel %vm296, %v4740, %v4744
        %v4747 = vshrl.u32 %v4612, 16
        %v4749 = vrot.slane %v4747, 4
        %v4750 = vshll.u32 %v4612, 16
        %v4752 = vrot.slane %v4750, 5
        %v4753 = vor.u32 %v4749, %v4752
        %v4754 = vrot.slane %v4753, 4
        %v4756 = vshll.u32 %v4613, 16
        %v4758 = vrot.slane %v4756, 5
        %v4759 = vsel %vm296, %v4754, %v4758
        %v4760 = vshrl.u32 %v4613, 16
        %v4762 = vrot.slane %v4760, 4
        %v4763 = vor.u32 %v4762, %v4758
        %v4764 = vrot.slane %v4763, 4
        %v4766 = vshll.u32 %v4623, 16
        %v4768 = vrot.slane %v4766, 5
        %v4769 = vsel %vm296, %v4764, %v4768
        %v4771 = vshrl.u32 %v4614, 16
        %v4773 = vrot.slane %v4771, 4
        %v4774 = vshll.u32 %v4614, 16
        %v4776 = vrot.slane %v4774, 5
        %v4777 = vor.u32 %v4773, %v4776
        %v4778 = vrot.slane %v4777, 4
        %v4780 = vshll.u32 %v4615, 16
        %v4782 = vrot.slane %v4780, 5
        %v4783 = vsel %vm296, %v4778, %v4782
        %v4784 = vshrl.u32 %v4615, 16
        %v4786 = vrot.slane %v4784, 4
        %v4787 = vor.u32 %v4786, %v4782
        %v4788 = vrot.slane %v4787, 4
        %v4790 = vshll.u32 %v4624, 16
        %v4792 = vrot.slane %v4790, 5
        %v4793 = vsel %vm296, %v4788, %v4792
        %v4795 = vshrl.u32 %v4616, 16
        %v4797 = vrot.slane %v4795, 4
        %v4798 = vshll.u32 %v4616, 16
        %v4800 = vrot.slane %v4798, 5
        %v4801 = vor.u32 %v4797, %v4800
        %v4802 = vrot.slane %v4801, 4
        %v4804 = vshll.u32 %v4617, 16
        %v4806 = vrot.slane %v4804, 5
        %v4807 = vsel %vm296, %v4802, %v4806
        %v4808 = vshrl.u32 %v4617, 16
        %v4810 = vrot.slane %v4808, 4
        %v4811 = vor.u32 %v4810, %v4806
        %v4812 = vrot.slane %v4811, 4
        %v4814 = vshll.u32 %v4625, 16
        %v4816 = vrot.slane %v4814, 5
        %v4817 = vsel %vm296, %v4812, %v4816
        %v4818 = vld [vmem:[%s4601] sm:$0xe]
        %v4819 = vld [vmem:[%s4601 + $0xc] sm:$0xe]
        %v4820 = vld [vmem:[%s4601 + $0x18] sm:$0xe]
        %v4821 = vld [vmem:[%s4601 + $0x24] sm:$0xe]
        %v4822 = vld [vmem:[%s4601 + $0x30] sm:$0xe]
        %v4823 = vld [vmem:[%s4601 + $0x3c] sm:$0xe]
        %v4824 = vld [vmem:[%s4601 + $0x48] sm:$0xe]
        %v4825 = vld [vmem:[%s4601 + $0x54] sm:$0xe]
        %v4850 = vrot.slane %v4818, 5
        %v4851 = vrot.slane %v4850, 4
        %v4852 = vrot.slane %v4603, 5
        %v4853 = vsel %vm569, %v4851, %v4852
        %v4854 = vrot.slane %v4852, 4
        %v4855 = vrot.slane %v4618, 5
        %v4856 = vsel %vm569, %v4854, %v4855
        %v4857 = vrot.slane %v4819, 5
        %v4858 = vrot.slane %v4857, 4
        %v4859 = vrot.slane %v4605, 5
        %v4860 = vsel %vm569, %v4858, %v4859
        %v4861 = vrot.slane %v4859, 4
        %v4862 = vrot.slane %v4619, 5
        %v4863 = vsel %vm569, %v4861, %v4862
        %v4864 = vrot.slane %v4820, 5
        %v4865 = vrot.slane %v4864, 4
        %v4866 = vrot.slane %v4607, 5
        %v4867 = vsel %vm569, %v4865, %v4866
        %v4868 = vrot.slane %v4866, 4
        %v4869 = vrot.slane %v4620, 5
        %v4870 = vsel %vm569, %v4868, %v4869
        %v4871 = vrot.slane %v4821, 5
        %v4872 = vrot.slane %v4871, 4
        %v4873 = vrot.slane %v4609, 5
        %v4874 = vsel %vm569, %v4872, %v4873
        %v4875 = vrot.slane %v4873, 4
        %v4876 = vrot.slane %v4621, 5
        %v4877 = vsel %vm569, %v4875, %v4876
        %v4878 = vrot.slane %v4822, 5
        %v4879 = vrot.slane %v4878, 4
        %v4880 = vrot.slane %v4611, 5
        %v4881 = vsel %vm569, %v4879, %v4880
        %v4882 = vrot.slane %v4880, 4
        %v4883 = vrot.slane %v4622, 5
        %v4884 = vsel %vm569, %v4882, %v4883
        %v4885 = vrot.slane %v4823, 5
        %v4886 = vrot.slane %v4885, 4
        %v4887 = vrot.slane %v4613, 5
        %v4888 = vsel %vm569, %v4886, %v4887
        %v4889 = vrot.slane %v4887, 4
        %v4890 = vrot.slane %v4623, 5
        %v4891 = vsel %vm569, %v4889, %v4890
        %v4892 = vrot.slane %v4824, 5
        %v4893 = vrot.slane %v4892, 4
        %v4894 = vrot.slane %v4615, 5
        %v4895 = vsel %vm569, %v4893, %v4894
        %v4896 = vrot.slane %v4894, 4
        %v4897 = vrot.slane %v4624, 5
        %v4898 = vsel %vm569, %v4896, %v4897
        %v4899 = vrot.slane %v4825, 5
        %v4900 = vrot.slane %v4899, 4
        %v4901 = vrot.slane %v4617, 5
        %v4902 = vsel %vm569, %v4900, %v4901
        %v4903 = vrot.slane %v4901, 4
        %v4904 = vrot.slane %v4625, 5
        %v4905 = vsel %vm569, %v4903, %v4904
        %v4914 = vunpack.c.l.b16 %v4602
        %v4915 = vunpack.c.l.b16 %v4603
        %v4916 = vunpack.c.l.b16 %v4604
        %v4917 = vunpack.c.l.b16 %v4605
        %v4918 = vunpack.c.l.b16 %v4606
        %v4919 = vunpack.c.l.b16 %v4607
        %v4920 = vunpack.c.l.b16 %v4608
        %v4921 = vunpack.c.l.b16 %v4609
        %v4922 = vunpack.c.l.b16 %v4610
        %v4923 = vunpack.c.l.b16 %v4611
        %v4924 = vunpack.c.l.b16 %v4612
        %v4925 = vunpack.c.l.b16 %v4613
        %v4926 = vunpack.c.l.b16 %v4614
        %v4927 = vunpack.c.l.b16 %v4615
        %v4928 = vunpack.c.l.b16 %v4616
        %v4929 = vunpack.c.l.b16 %v4617
        %v4930 = vpack.c.b16 %v4915, %v4914
        %v4931 = vpack.c.b16 %v4917, %v4916
        %v4932 = vpack.c.b16 %v4919, %v4918
        %v4933 = vpack.c.b16 %v4921, %v4920
        %v4934 = vpack.c.b16 %v4923, %v4922
        %v4935 = vpack.c.b16 %v4925, %v4924
        %v4936 = vpack.c.b16 %v4927, %v4926
        %v4937 = vpack.c.b16 %v4929, %v4928
        %v4946 = vunpack.c.l.b16 %v4639
        %v4947 = vunpack.c.l.b16 %v4649
        %v4948 = vunpack.c.l.b16 %v4663
        %v4949 = vunpack.c.l.b16 %v4673
        %v4950 = vunpack.c.l.b16 %v4687
        %v4951 = vunpack.c.l.b16 %v4697
        %v4952 = vunpack.c.l.b16 %v4711
        %v4953 = vunpack.c.l.b16 %v4721
        %v4954 = vunpack.c.l.b16 %v4735
        %v4955 = vunpack.c.l.b16 %v4745
        %v4956 = vunpack.c.l.b16 %v4759
        %v4957 = vunpack.c.l.b16 %v4769
        %v4958 = vunpack.c.l.b16 %v4783
        %v4959 = vunpack.c.l.b16 %v4793
        %v4960 = vunpack.c.l.b16 %v4807
        %v4961 = vunpack.c.l.b16 %v4817
        %v4962 = vpack.c.b16 %v4947, %v4946
        %v4963 = vpack.c.b16 %v4949, %v4948
        %v4964 = vpack.c.b16 %v4951, %v4950
        %v4965 = vpack.c.b16 %v4953, %v4952
        %v4966 = vpack.c.b16 %v4955, %v4954
        %v4967 = vpack.c.b16 %v4957, %v4956
        %v4968 = vpack.c.b16 %v4959, %v4958
        %v4969 = vpack.c.b16 %v4961, %v4960
        %v4978 = vunpack.c.l.b16 %v4853
        %v4979 = vunpack.c.l.b16 %v4856
        %v4980 = vunpack.c.l.b16 %v4860
        %v4981 = vunpack.c.l.b16 %v4863
        %v4982 = vunpack.c.l.b16 %v4867
        %v4983 = vunpack.c.l.b16 %v4870
        %v4984 = vunpack.c.l.b16 %v4874
        %v4985 = vunpack.c.l.b16 %v4877
        %v4986 = vunpack.c.l.b16 %v4881
        %v4987 = vunpack.c.l.b16 %v4884
        %v4988 = vunpack.c.l.b16 %v4888
        %v4989 = vunpack.c.l.b16 %v4891
        %v4990 = vunpack.c.l.b16 %v4895
        %v4991 = vunpack.c.l.b16 %v4898
        %v4992 = vunpack.c.l.b16 %v4902
        %v4993 = vunpack.c.l.b16 %v4905
        %v4994 = vpack.c.b16 %v4979, %v4978
        %v4995 = vpack.c.b16 %v4981, %v4980
        %v4996 = vpack.c.b16 %v4983, %v4982
        %v4997 = vpack.c.b16 %v4985, %v4984
        %v4998 = vpack.c.b16 %v4987, %v4986
        %v4999 = vpack.c.b16 %v4989, %v4988
        %v5000 = vpack.c.b16 %v4991, %v4990
        %v5001 = vpack.c.b16 %v4993, %v4992
        %s5010 = scalar_lea.vmem %s3, 384
        %v5011 = vld [vmem:[%s5010] sm:$0xf]
        %v5012 = vld [vmem:[%s5010 + $0x4] sm:$0xf]
        %v5013 = vld [vmem:[%s5010 + $0x8] sm:$0xf]
        %v5014 = vld [vmem:[%s5010 + $0xc] sm:$0xf]
        %v5015 = vld [vmem:[%s5010 + $0x10] sm:$0xf]
        %v5016 = vld [vmem:[%s5010 + $0x14] sm:$0xf]
        %v5017 = vld [vmem:[%s5010 + $0x18] sm:$0xf]
        %v5018 = vld [vmem:[%s5010 + $0x1c] sm:$0xf]
        %v5019 = vld [vmem:[%s5010 + $0x20] sm:$0xf]
        %v5020 = vld [vmem:[%s5010 + $0x24] sm:$0xf]
        %v5021 = vld [vmem:[%s5010 + $0x28] sm:$0xf]
        %v5022 = vld [vmem:[%s5010 + $0x2c] sm:$0xf]
        %v5023 = vld [vmem:[%s5010 + $0x30] sm:$0xf]
        %v5024 = vld [vmem:[%s5010 + $0x34] sm:$0xf]
        %v5025 = vld [vmem:[%s5010 + $0x38] sm:$0xf]
        %v5026 = vld [vmem:[%s5010 + $0x3c] sm:$0xf]
        %v5027 = vld [vmem:[%s5010 + $0x40] sm:$0xf]
        %v5028 = vld [vmem:[%s5010 + $0x44] sm:$0xf]
        %v5029 = vld [vmem:[%s5010 + $0x48] sm:$0xf]
        %v5030 = vld [vmem:[%s5010 + $0x4c] sm:$0xf]
        %v5031 = vld [vmem:[%s5010 + $0x50] sm:$0xf]
        %v5032 = vld [vmem:[%s5010 + $0x54] sm:$0xf]
        %v5033 = vld [vmem:[%s5010 + $0x58] sm:$0xf]
        %v5034 = vld [vmem:[%s5010 + $0x5c] sm:$0xf]
        %v5035 = vld [vmem:[%s5010 + $0x60] sm:$0xf]
        %v5036 = vld [vmem:[%s5010 + $0x64] sm:$0xf]
        %v5037 = vld [vmem:[%s5010 + $0x68] sm:$0xf]
        %v5038 = vld [vmem:[%s5010 + $0x6c] sm:$0xf]
        %v5039 = vld [vmem:[%s5010 + $0x70] sm:$0xf]
        %v5040 = vld [vmem:[%s5010 + $0x74] sm:$0xf]
        %v5041 = vld [vmem:[%s5010 + $0x78] sm:$0xf]
        %v5042 = vld [vmem:[%s5010 + $0x7c] sm:$0xf]
        %v5043 = vld [vmem:[%s5010 + $0x80] sm:$0xf]
        %v5044 = vld [vmem:[%s5010 + $0x84] sm:$0xf]
        %v5045 = vld [vmem:[%s5010 + $0x88] sm:$0xf]
        %v5046 = vld [vmem:[%s5010 + $0x8c] sm:$0xf]
        %v5047 = vld [vmem:[%s5010 + $0x90] sm:$0xf]
        %v5048 = vld [vmem:[%s5010 + $0x94] sm:$0xf]
        %v5049 = vld [vmem:[%s5010 + $0x98] sm:$0xf]
        %v5050 = vld [vmem:[%s5010 + $0x9c] sm:$0xf]
        %v5051 = vld [vmem:[%s5010 + $0xa0] sm:$0xf]
        %v5052 = vld [vmem:[%s5010 + $0xa4] sm:$0xf]
        %v5053 = vld [vmem:[%s5010 + $0xa8] sm:$0xf]
        %v5054 = vld [vmem:[%s5010 + $0xac] sm:$0xf]
        %v5055 = vld [vmem:[%s5010 + $0xb0] sm:$0xf]
        %v5056 = vld [vmem:[%s5010 + $0xb4] sm:$0xf]
        %v5057 = vld [vmem:[%s5010 + $0xb8] sm:$0xf]
        %v5058 = vld [vmem:[%s5010 + $0xbc] sm:$0xf]
        %v5107 = vunpack.c.l.b16 %v5011
        %v5108 = vunpack.c.l.b16 %v5012
        %v5109 = vunpack.c.l.b16 %v5013
        %v5110 = vunpack.c.l.b16 %v5014
        %v5111 = vunpack.c.l.b16 %v5015
        %v5112 = vunpack.c.l.b16 %v5016
        %v5113 = vunpack.c.l.b16 %v5017
        %v5114 = vunpack.c.l.b16 %v5018
        %v5115 = vunpack.c.l.b16 %v5019
        %v5116 = vunpack.c.l.b16 %v5020
        %v5117 = vunpack.c.l.b16 %v5021
        %v5118 = vunpack.c.l.b16 %v5022
        %v5119 = vunpack.c.l.b16 %v5023
        %v5120 = vunpack.c.l.b16 %v5024
        %v5121 = vunpack.c.l.b16 %v5025
        %v5122 = vunpack.c.l.b16 %v5026
        %v5123 = vunpack.c.l.b16 %v5027
        %v5124 = vunpack.c.l.b16 %v5028
        %v5125 = vunpack.c.l.b16 %v5029
        %v5126 = vunpack.c.l.b16 %v5030
        %v5127 = vunpack.c.l.b16 %v5031
        %v5128 = vunpack.c.l.b16 %v5032
        %v5129 = vunpack.c.l.b16 %v5033
        %v5130 = vunpack.c.l.b16 %v5034
        %v5131 = vunpack.c.l.b16 %v5035
        %v5132 = vunpack.c.l.b16 %v5036
        %v5133 = vunpack.c.l.b16 %v5037
        %v5134 = vunpack.c.l.b16 %v5038
        %v5135 = vunpack.c.l.b16 %v5039
        %v5136 = vunpack.c.l.b16 %v5040
        %v5137 = vunpack.c.l.b16 %v5041
        %v5138 = vunpack.c.l.b16 %v5042
        %v5139 = vunpack.c.l.b16 %v5043
        %v5140 = vunpack.c.l.b16 %v5044
        %v5141 = vunpack.c.l.b16 %v5045
        %v5142 = vunpack.c.l.b16 %v5046
        %v5143 = vunpack.c.l.b16 %v5047
        %v5144 = vunpack.c.l.b16 %v5048
        %v5145 = vunpack.c.l.b16 %v5049
        %v5146 = vunpack.c.l.b16 %v5050
        %v5147 = vunpack.c.l.b16 %v5051
        %v5148 = vunpack.c.l.b16 %v5052
        %v5149 = vunpack.c.l.b16 %v5053
        %v5150 = vunpack.c.l.b16 %v5054
        %v5151 = vunpack.c.l.b16 %v5055
        %v5152 = vunpack.c.l.b16 %v5056
        %v5153 = vunpack.c.l.b16 %v5057
        %v5154 = vunpack.c.l.b16 %v5058
        %v5155 = vpack.c.b16 %v5108, %v5107
        %v5156 = vpack.c.b16 %v5110, %v5109
        %v5157 = vpack.c.b16 %v5112, %v5111
        %v5158 = vpack.c.b16 %v5114, %v5113
        %v5159 = vpack.c.b16 %v5116, %v5115
        %v5160 = vpack.c.b16 %v5118, %v5117
        %v5161 = vpack.c.b16 %v5120, %v5119
        %v5162 = vpack.c.b16 %v5122, %v5121
        %v5163 = vpack.c.b16 %v5124, %v5123
        %v5164 = vpack.c.b16 %v5126, %v5125
        %v5165 = vpack.c.b16 %v5128, %v5127
        %v5166 = vpack.c.b16 %v5130, %v5129
        %v5167 = vpack.c.b16 %v5132, %v5131
        %v5168 = vpack.c.b16 %v5134, %v5133
        %v5169 = vpack.c.b16 %v5136, %v5135
        %v5170 = vpack.c.b16 %v5138, %v5137
        %v5171 = vpack.c.b16 %v5140, %v5139
        %v5172 = vpack.c.b16 %v5142, %v5141
        %v5173 = vpack.c.b16 %v5144, %v5143
        %v5174 = vpack.c.b16 %v5146, %v5145
        %v5175 = vpack.c.b16 %v5148, %v5147
        %v5176 = vpack.c.b16 %v5150, %v5149
        %v5177 = vpack.c.b16 %v5152, %v5151
        %v5178 = vpack.c.b16 %v5154, %v5153
        %5203 = vmatprep.subr.bf16.mxu0 0
        %5204 = vmatpush1.bf16.msra.mxu0 %v5155
        %5205 = vmatprep.subr.bf16.mxu0 0
        %5206 = vmatpush1.bf16.msra.mxu0 %v5156
        %5207 = vmatprep.subr.bf16.mxu0 0
        %5208 = vmatpush1.bf16.msra.mxu0 %v5157
        %5209 = vmatprep.subr.bf16.mxu0 0
        %5210 = vmatpush1.bf16.msra.mxu0 %v5158
        %5211 = vmatprep.subr.bf16.mxu0 0
        %5212 = vmatpush1.bf16.msra.mxu0 %v5159
        %5213 = vmatprep.subr.bf16.mxu0 0
        %5214 = vmatpush1.bf16.msra.mxu0 %v5160
        %5215 = vmatprep.subr.bf16.mxu0 0
        %5216 = vmatpush1.bf16.msra.mxu0 %v5161
        %5217 = vmatprep.subr.bf16.mxu0 0
        %5218 = vmatpush1.bf16.msra.mxu0 %v5162
        %5219 = vmatprep.subr.bf16.mxu0 0
        %5220 = vmatpush1.bf16.msra.mxu0 %v5163
        %5221 = vmatprep.subr.bf16.mxu0 0
        %5222 = vmatpush1.bf16.msra.mxu0 %v5164
        %5223 = vmatprep.subr.bf16.mxu0 0
        %5224 = vmatpush1.bf16.msra.mxu0 %v5165
        %5225 = vmatprep.subr.bf16.mxu0 0
        %5226 = vmatpush1.bf16.msra.mxu0 %v5166
        %5227 = vmatprep.subr.bf16.mxu0 0
        %5228 = vmatpush1.bf16.msra.mxu0 %v5167
        %5229 = vmatprep.subr.bf16.mxu0 0
        %5230 = vmatpush1.bf16.msra.mxu0 %v5168
        %5231 = vmatprep.subr.bf16.mxu0 0
        %5232 = vmatpush1.bf16.msra.mxu0 %v5169
        %5233 = vmatprep.subr.bf16.mxu0 0
        %5234 = vmatpush1.bf16.msra.mxu0 %v5170
        %5235 = vmatprep.mubr.bf16.mxu0 %v4962
        %5236 = vmatmul.mubr.bf16.gmra.mrb[0].mxu0 %v4930
        %v5237 = vpop.f32.mrb[0].mxu0
        %v5238 = vadd.f32 0.0, %v5237
        %v5239 = vpop.f32.mrb[0].mxu0
        %v5240 = vpop.f32.mrb[0].mxu0
        %v5241 = vadd.f32 0.0, %v5240
        %v5242 = vpop.f32.mrb[0].mxu0
        %5243 = vmatprep.mubr.bf16.mxu0 %v4963
        %5244 = vmatmul.mubr.bf16.gmra.mrb[0].mxu0 %v4931
        %v5245 = vpop.f32.mrb[0].mxu0
        %v5246 = vadd.f32 0.0, %v5245
        %v5247 = vpop.f32.mrb[0].mxu0
        %v5248 = vpop.f32.mrb[0].mxu0
        %v5249 = vadd.f32 0.0, %v5248
        %v5250 = vpop.f32.mrb[0].mxu0
        %5251 = vmatprep.mubr.bf16.mxu0 %v4964
        %5252 = vmatmul.mubr.bf16.gmra.mrb[0].mxu0 %v4932
        %v5253 = vpop.f32.mrb[0].mxu0
        %v5254 = vadd.f32 0.0, %v5253
        %v5255 = vpop.f32.mrb[0].mxu0
        %v5256 = vpop.f32.mrb[0].mxu0
        %v5257 = vadd.f32 0.0, %v5256
        %v5258 = vpop.f32.mrb[0].mxu0
        %5259 = vmatprep.mubr.bf16.mxu0 %v4965
        %5260 = vmatmul.mubr.bf16.gmra.mrb[0].mxu0 %v4933
        %v5261 = vpop.f32.mrb[0].mxu0
        %v5262 = vadd.f32 0.0, %v5261
        %v5263 = vpop.f32.mrb[0].mxu0
        %v5264 = vpop.f32.mrb[0].mxu0
        %v5265 = vadd.f32 0.0, %v5264
        %v5266 = vpop.f32.mrb[0].mxu0
        %5267 = vmatprep.mubr.bf16.mxu0 %v4966
        %5268 = vmatmul.mubr.bf16.gmra.mrb[0].mxu0 %v4934
        %v5269 = vpop.f32.mrb[0].mxu0
        %v5270 = vadd.f32 0.0, %v5269
        %v5271 = vpop.f32.mrb[0].mxu0
        %v5272 = vpop.f32.mrb[0].mxu0
        %v5273 = vadd.f32 0.0, %v5272
        %v5274 = vpop.f32.mrb[0].mxu0
        %5275 = vmatprep.mubr.bf16.mxu0 %v4967
        %5276 = vmatmul.mubr.bf16.gmra.mrb[0].mxu0 %v4935
        %v5277 = vpop.f32.mrb[0].mxu0
        %v5278 = vadd.f32 0.0, %v5277
        %v5279 = vpop.f32.mrb[0].mxu0
        %v5280 = vpop.f32.mrb[0].mxu0
        %v5281 = vadd.f32 0.0, %v5280
        %v5282 = vpop.f32.mrb[0].mxu0
        %5283 = vmatprep.mubr.bf16.mxu0 %v4968
        %5284 = vmatmul.mubr.bf16.gmra.mrb[0].mxu0 %v4936
        %v5285 = vpop.f32.mrb[0].mxu0
        %v5286 = vadd.f32 0.0, %v5285
        %v5287 = vpop.f32.mrb[0].mxu0
        %v5288 = vpop.f32.mrb[0].mxu0
        %v5289 = vadd.f32 0.0, %v5288
        %v5290 = vpop.f32.mrb[0].mxu0
        %5291 = vmatprep.mubr.bf16.mxu0 %v4969
        %5292 = vmatmul.mubr.bf16.gmra.mrb[0].mxu0 %v4937
        %v5293 = vpop.f32.mrb[0].mxu0
        %v5294 = vadd.f32 0.0, %v5293
        %v5295 = vpop.f32.mrb[0].mxu0
        %v5296 = vpop.f32.mrb[0].mxu0
        %v5297 = vadd.f32 0.0, %v5296
        %v5298 = vpop.f32.mrb[0].mxu0
        %5299 = vdwg.mxu0
        %5300 = vmatprep.subr.bf16.mxu0 0
        %5301 = vmatpush1.bf16.msra.mxu0 %v5171
        %5302 = vmatprep.subr.bf16.mxu0 0
        %5303 = vmatpush1.bf16.msra.mxu0 %v5172
        %5304 = vmatprep.subr.bf16.mxu0 0
        %5305 = vmatpush1.bf16.msra.mxu0 %v5173
        %5306 = vmatprep.subr.bf16.mxu0 0
        %5307 = vmatpush1.bf16.msra.mxu0 %v5174
        %5308 = vmatprep.subr.bf16.mxu0 0
        %5309 = vmatpush1.bf16.msra.mxu0 %v5175
        %5310 = vmatprep.subr.bf16.mxu0 0
        %5311 = vmatpush1.bf16.msra.mxu0 %v5176
        %5312 = vmatprep.subr.bf16.mxu0 0
        %5313 = vmatpush1.bf16.msra.mxu0 %v5177
        %5314 = vmatprep.subr.bf16.mxu0 0
        %5315 = vmatpush1.bf16.msra.mxu0 %v5178
        %5316 = vmatprep.subr.bf16.mxu0 0
        %5317 = vmatpush1.bf16.msra.mxu0 0
        %5318 = vmatprep.subr.bf16.mxu0 0
        %5319 = vmatpush1.bf16.msra.mxu0 0
        %5320 = vmatprep.subr.bf16.mxu0 0
        %5321 = vmatpush1.bf16.msra.mxu0 0
        %5322 = vmatprep.subr.bf16.mxu0 0
        %5323 = vmatpush1.bf16.msra.mxu0 0
        %5324 = vmatprep.subr.bf16.mxu0 0
        %5325 = vmatpush1.bf16.msra.mxu0 0
        %5326 = vmatprep.subr.bf16.mxu0 0
        %5327 = vmatpush1.bf16.msra.mxu0 0
        %5328 = vmatprep.subr.bf16.mxu0 0
        %5329 = vmatpush1.bf16.msra.mxu0 0
        %5330 = vmatprep.subr.bf16.mxu0 0
        %5331 = vmatpush1.bf16.msra.mxu0 0
        %5332 = vmatprep.mubr.bf16.mxu0 0
        %5333 = vmatmul.mubr.bf16.gmra.mrb[0].mxu0 %v4994
        %v5334 = vpop.f32.mrb[0].mxu0
        %v5335 = vadd.f32 %v5238, %v5334
        %v5336 = vpop.f32.mrb[0].mxu0
        %v5337 = vpop.f32.mrb[0].mxu0
        %v5338 = vadd.f32 %v5241, %v5337
        %v5339 = vpop.f32.mrb[0].mxu0
        %5340 = vmatprep.mubr.bf16.mxu0 0
        %5341 = vmatmul.mubr.bf16.gmra.mrb[0].mxu0 %v4995
        %v5342 = vpop.f32.mrb[0].mxu0
        %v5343 = vadd.f32 %v5246, %v5342
        %v5344 = vpop.f32.mrb[0].mxu0
        %v5345 = vpop.f32.mrb[0].mxu0
        %v5346 = vadd.f32 %v5249, %v5345
        %v5347 = vpop.f32.mrb[0].mxu0
        %5348 = vmatprep.mubr.bf16.mxu0 0
        %5349 = vmatmul.mubr.bf16.gmra.mrb[0].mxu0 %v4996
        %v5350 = vpop.f32.mrb[0].mxu0
        %v5351 = vadd.f32 %v5254, %v5350
        %v5352 = vpop.f32.mrb[0].mxu0
        %v5353 = vpop.f32.mrb[0].mxu0
        %v5354 = vadd.f32 %v5257, %v5353
        %v5355 = vpop.f32.mrb[0].mxu0
        %5356 = vmatprep.mubr.bf16.mxu0 0
        %5357 = vmatmul.mubr.bf16.gmra.mrb[0].mxu0 %v4997
        %v5358 = vpop.f32.mrb[0].mxu0
        %v5359 = vadd.f32 %v5262, %v5358
        %v5360 = vpop.f32.mrb[0].mxu0
        %v5361 = vpop.f32.mrb[0].mxu0
        %v5362 = vadd.f32 %v5265, %v5361
        %v5363 = vpop.f32.mrb[0].mxu0
        %5364 = vmatprep.mubr.bf16.mxu0 0
        %5365 = vmatmul.mubr.bf16.gmra.mrb[0].mxu0 %v4998
        %v5366 = vpop.f32.mrb[0].mxu0
        %v5367 = vadd.f32 %v5270, %v5366
        %v5368 = vpop.f32.mrb[0].mxu0
        %v5369 = vpop.f32.mrb[0].mxu0
        %v5370 = vadd.f32 %v5273, %v5369
        %v5371 = vpop.f32.mrb[0].mxu0
        %5372 = vmatprep.mubr.bf16.mxu0 0
        %5373 = vmatmul.mubr.bf16.gmra.mrb[0].mxu0 %v4999
        %v5374 = vpop.f32.mrb[0].mxu0
        %v5375 = vadd.f32 %v5278, %v5374
        %v5376 = vpop.f32.mrb[0].mxu0
        %v5377 = vpop.f32.mrb[0].mxu0
        %v5378 = vadd.f32 %v5281, %v5377
        %v5379 = vpop.f32.mrb[0].mxu0
        %5380 = vmatprep.mubr.bf16.mxu0 0
        %5381 = vmatmul.mubr.bf16.gmra.mrb[0].mxu0 %v5000
        %v5382 = vpop.f32.mrb[0].mxu0
        %v5383 = vadd.f32 %v5286, %v5382
        %v5384 = vpop.f32.mrb[0].mxu0
        %v5385 = vpop.f32.mrb[0].mxu0
        %v5386 = vadd.f32 %v5289, %v5385
        %v5387 = vpop.f32.mrb[0].mxu0
        %5388 = vmatprep.mubr.bf16.mxu0 0
        %5389 = vmatmul.mubr.bf16.gmra.mrb[0].mxu0 %v5001
        %v5390 = vpop.f32.mrb[0].mxu0
        %v5391 = vadd.f32 %v5294, %v5390
        %v5392 = vpop.f32.mrb[0].mxu0
        %v5393 = vpop.f32.mrb[0].mxu0
        %v5394 = vadd.f32 %v5297, %v5393
        %v5395 = vpop.f32.mrb[0].mxu0
        %5396 = vdwg.mxu0
        %v5397 = vadd.f32 %v4539, %v5335
        %v5398 = vadd.f32 %v4542, %v5338
        %v5399 = vadd.f32 %v4547, %v5343
        %v5400 = vadd.f32 %v4550, %v5346
        %v5401 = vadd.f32 %v4555, %v5351
        %v5402 = vadd.f32 %v4558, %v5354
        %v5403 = vadd.f32 %v4563, %v5359
        %v5404 = vadd.f32 %v4566, %v5362
        %v5405 = vadd.f32 %v4571, %v5367
        %v5406 = vadd.f32 %v4574, %v5370
        %v5407 = vadd.f32 %v4579, %v5375
        %v5408 = vadd.f32 %v4582, %v5378
        %v5409 = vadd.f32 %v4587, %v5383
        %v5410 = vadd.f32 %v4590, %v5386
        %v5411 = vadd.f32 %v4595, %v5391
        %v5412 = vadd.f32 %v4598, %v5394
        %v5413 = vld [vmem:[%s4] sm:$0x1]
        %v5415 = vlaneseq
        %v5416 = vshrl.u32 %v5415, 7
        %v5417 = vsub.s32 0, %v5416
        %v5418 = vrot.slane %v5413, %v5417
        %v5420 = vadd.f32 %v5397, %v5418
        %v5421 = vadd.f32 %v5398, %v5418
        %v5422 = vadd.f32 %v5399, %v5418
        %v5423 = vadd.f32 %v5400, %v5418
        %v5424 = vadd.f32 %v5401, %v5418
        %v5425 = vadd.f32 %v5402, %v5418
        %v5426 = vadd.f32 %v5403, %v5418
        %v5427 = vadd.f32 %v5404, %v5418
        %v5428 = vadd.f32 %v5405, %v5418
        %v5429 = vadd.f32 %v5406, %v5418
        %v5430 = vadd.f32 %v5407, %v5418
        %v5431 = vadd.f32 %v5408, %v5418
        %v5432 = vadd.f32 %v5409, %v5418
        %v5433 = vadd.f32 %v5410, %v5418
        %v5434 = vadd.f32 %v5411, %v5418
        %v5435 = vadd.f32 %v5412, %v5418
        %v5436 = vadd.f32 %v5420, %v2543
        %v5437 = vadd.f32 %v5421, %v2545
        %v5438 = vadd.f32 %v5422, %v2547
        %v5439 = vadd.f32 %v5423, %v2549
        %v5440 = vadd.f32 %v5424, %v2551
        %v5441 = vadd.f32 %v5425, %v2553
        %v5442 = vadd.f32 %v5426, %v2555
        %v5443 = vadd.f32 %v5427, %v2557
        %v5444 = vadd.f32 %v5428, %v2559
        %v5445 = vadd.f32 %v5429, %v2561
        %v5446 = vadd.f32 %v5430, %v2563
        %v5447 = vadd.f32 %v5431, %v2565
        %v5448 = vadd.f32 %v5432, %v2567
        %v5449 = vadd.f32 %v5433, %v2569
        %v5450 = vadd.f32 %v5434, %v2571
        %v5451 = vadd.f32 %v5435, %v2573
        %v5452 = vmax.f32 %v5436, 0.0
        %v5453 = vmax.f32 %v5437, 0.0
        %v5454 = vmax.f32 %v5438, 0.0
        %v5455 = vmax.f32 %v5439, 0.0
        %v5456 = vmax.f32 %v5440, 0.0
        %v5457 = vmax.f32 %v5441, 0.0
        %v5458 = vmax.f32 %v5442, 0.0
        %v5459 = vmax.f32 %v5443, 0.0
        %v5460 = vmax.f32 %v5444, 0.0
        %v5461 = vmax.f32 %v5445, 0.0
        %v5462 = vmax.f32 %v5446, 0.0
        %v5463 = vmax.f32 %v5447, 0.0
        %v5464 = vmax.f32 %v5448, 0.0
        %v5465 = vmax.f32 %v5449, 0.0
        %v5466 = vmax.f32 %v5450, 0.0
        %v5467 = vmax.f32 %v5451, 0.0
        %5468 = vst [vmem:[%s246] sm:$0xff] %v5452
        %5469 = vst [vmem:[%s246 + $0x8] sm:$0xff] %v5453
        %5470 = vst [vmem:[%s246 + $0x10] sm:$0xff] %v5454
        %5471 = vst [vmem:[%s246 + $0x18] sm:$0xff] %v5455
        %5472 = vst [vmem:[%s246 + $0x20] sm:$0xff] %v5456
        %5473 = vst [vmem:[%s246 + $0x28] sm:$0xff] %v5457
        %5474 = vst [vmem:[%s246 + $0x30] sm:$0xff] %v5458
        %5475 = vst [vmem:[%s246 + $0x38] sm:$0xff] %v5459
        %5476 = vst [vmem:[%s246 + $0x40] sm:$0xff] %v5460
        %5477 = vst [vmem:[%s246 + $0x48] sm:$0xff] %v5461
        %5478 = vst [vmem:[%s246 + $0x50] sm:$0xff] %v5462
        %5479 = vst [vmem:[%s246 + $0x58] sm:$0xff] %v5463
        %5480 = vst [vmem:[%s246 + $0x60] sm:$0xff] %v5464
        %5481 = vst [vmem:[%s246 + $0x68] sm:$0xff] %v5465
        %5482 = vst [vmem:[%s246 + $0x70] sm:$0xff] %v5466
        %5483 = vst [vmem:[%s246 + $0x78] sm:$0xff] %v5467
        %s5484 = sand.u32 %s152, 1
        %s5485 = scalar_lea.sflag [#allocation5], %s5484
        %s5486 = sand.u32 %s152, 1
        %s5487 = smul.addr %s5486, 128
        %s5488 = scalar_lea.vmem [#allocation6], %s5487
        // Predicated region
        $region53: #{tpu_custom_call.1} parent=39 // pred_check
          %p5489 = pneg %p162
        $region54: #{tpu_custom_call.1} parent=39 // pred_check_branch
          %5491 = sbr.rel (%p5489) target = $region56
        $region55: #{tpu_custom_call.1} parent=39 // pred_region
          %s5492 = smul.u32 8, %s25
          %s5494 = ssub.s32 2048, 2048
          %5495 = vsyncadd %s5485, %s5494
          %s5496 = smul.addr %s5492, 2
          %s5497 = smul.addr %s24, 32
          %s5498 = sadd.s32 %s5496, %s5497
          %s5499 = smul.addr %s5498, 128
          %s5500 = scalar_lea.hbm %s5, %s5499
          %s5501 = sshll.u32 %s5488, 4
          %s5502 = int_to_ptr.vmem [resolvable:$true] %s5501
          %5507 = dma.vmem_to_hbm [thread:$0]  %s5502, 2048, %s5500, %s5485, 128, 128, 8
        $region56: #{tpu_custom_call.1} parent=39 // pred_fallthru
          _
      $region40: #{tpu_custom_call.1} parent=5 // pred_fallthru
        _
      %p5508 = scmp.le.s32.totalorder 2, %s15
      // Predicated region
      $region57: #{tpu_custom_call.1} parent=5 // pred_check
        %p5509 = pneg %p5508
      $region58: #{tpu_custom_call.1} parent=5 // pred_check_branch
        %5511 = sbr.rel (%p5509) target = $region60
      $region59: #{tpu_custom_call.1} parent=5 // pred_region
        %s5512 = ssub.s32 %s15, 2
        // Predicated region
        $region61: #{tpu_custom_call.1} parent=59 // pred_check
          %p5513 = pneg %p168
        $region62: #{tpu_custom_call.1} parent=59 // pred_check_branch
          %5515 = sbr.rel (%p5513) target = $region64
        $region63: #{tpu_custom_call.1} parent=59 // pred_region
          %s5516 = sand.u32 %s153, 1
          %s5517 = scalar_lea.sflag [#allocation5], %s5516
          %s5518 = sand.u32 %s153, 1
          %s5519 = smul.addr %s5518, 128
          %s5520 = scalar_lea.vmem [#allocation6], %s5519
          %5521 = dma.done %s5517, 2048
        $region64: #{tpu_custom_call.1} parent=59 // pred_fallthru
          _
      $region60: #{tpu_custom_call.1} parent=5 // pred_fallthru
        _
    $region6: #{tpu_custom_call.1} parent=1 // loop_footer
      %s19 = sadd.s32 1, %s15
    $region7: #{tpu_custom_call.1} parent=1 // loop_footer_branch
      %14 = sbr.rel target = $region3
    $region8: #{tpu_custom_call.1} parent=1 // loop_exit
      _
    %5522 = vsyncpa [#allocation4], 1
    %s5523 = scalar_lea.sflag [#allocation4], 1
    %5524 = vsyncpa %s5523, 1
    %5525 = vsyncpa [#allocation5], 1
    %s5526 = scalar_lea.sflag [#allocation5], 1
    %5527 = vsyncpa %s5526, 1

</llo_original>
